<compile_context>
chip_gen: v5e
topology: v5e:2x2
jax: 0.10.0
libtpu: 0.0.40
codegen_flags: <defaults>
</compile_context>

<pallas_src>
import functools
import math

import jax
import jax.numpy as jnp
from jax import lax
from jax.experimental import pallas as pl
from jax.experimental.pallas import tpu as pltpu

KERNEL_SIZE = 25          # DecompositionBlock window (algebraic no-op here)
D_MODEL = 64
INPUT_DIM = 1
N_HEADS = 4
NUM_LAYERS = 2
DIM_FF = 128              # TransformerEncoderLayer(dim_feedforward=128)
HEAD_DIM = D_MODEL // N_HEADS
LN_EPS = 1e-5             # PyTorch LayerNorm default eps
MAX_BATCH_TILE = 8        # max batch elements folded into one grid step
TARGET_TBL = 128          # keep tb*L around one MXU/vreg-friendly tile height


def _layernorm(x, gamma, beta):
    mean = jnp.mean(x, axis=-1, keepdims=True)
    var = jnp.mean((x - mean) ** 2, axis=-1, keepdims=True)
    inv = lax.rsqrt(var + LN_EPS)
    return (x - mean) * inv * gamma + beta


def autoformer_kernel(*refs, tb, seq_len, use_mask):
    if use_mask:
        x_ref, mask_ref = refs[0], refs[1]
        rest = refs[2:]
    else:
        x_ref = refs[0]
        mask_ref = None
        rest = refs[1:]
    (enc_w_ref, enc_b_ref, wqkv_ref, bqkv_ref, wo_ref, bo_ref,
     ln1_g_ref, ln1_b_ref, ln2_g_ref, ln2_b_ref,
     w1_ref, b1_ref, w2_ref, b2_ref, dec_w_ref, dec_b_ref,
     o_ref, s_scr) = rest

    tbl = tb * seq_len

    # DecompositionBlock omitted: seasonal + trend == x feeds the encoder.
    x = x_ref[0]                                              # (TBL, 1) f32

    # encoder Linear(1 -> D) as a VPU broadcast (no K=1 MXU pass).
    h = x * enc_w_ref[...] + enc_b_ref[...]                   # (TBL, D)

    # Precomputed batch-separation mask (rows share a batch element iff equal
    # mod tb).  Only present when a tile holds >1 batch element.
    neg_mask = mask_ref[...] if use_mask else None

    for l in range(NUM_LAYERS):
        # fused QKV projection: one lane-dense (TBL,64)x(64,192) matmul.
        # 1/sqrt(head_dim) is already folded into the Q columns & bias.
        qkv = jnp.dot(h, wqkv_ref[l],
                      preferred_element_type=jnp.float32) + bqkv_ref[l]
        q = qkv[:, 0:D_MODEL]
        k = qkv[:, D_MODEL:2 * D_MODEL]
        v = qkv[:, 2 * D_MODEL:3 * D_MODEL]

        wo_l = wo_ref[l]                                      # (D, D) once/layer
        attn = jnp.zeros((tbl, D_MODEL), jnp.float32)
        for hd in range(N_HEADS):
            sl = slice(hd * HEAD_DIM, (hd + 1) * HEAD_DIM)
            qh, kh, vh = q[:, sl], k[:, sl], v[:, sl]         # (TBL, dh)
            s = lax.dot_general(qh, kh, (((1,), (1,)), ((), ())),
                                preferred_element_type=jnp.float32)
            if use_mask:
                s = s + neg_mask                              # (TBL, TBL)
            # Single reused score/prob buffer: the store->load fence keeps
            # only one head's (TBL,TBL) temporaries live at a time.
            s_scr[...] = s
            s = s_scr[...]
            m = jnp.max(s, axis=-1, keepdims=True)
            p = jnp.exp(s - m)
            s_scr[...] = p * pl.reciprocal(
                jnp.sum(p, axis=-1, keepdims=True), approx=True)
            ctx = jnp.dot(s_scr[...], vh,
                          preferred_element_type=jnp.float32)
            # fold the per-head output projection in; no concat needed.
            attn = attn + jnp.dot(ctx, wo_l[sl, :],
                                  preferred_element_type=jnp.float32)
        attn = attn + bo_ref[l]
        h = _layernorm(h + attn, ln1_g_ref[l], ln1_b_ref[l])

        # feed forward: Linear(64->128) -> ReLU -> Linear(128->64)
        ff = jnp.dot(h, w1_ref[l], preferred_element_type=jnp.float32) + b1_ref[l]
        ff = jnp.maximum(ff, 0.0)
        ff = jnp.dot(ff, w2_ref[l], preferred_element_type=jnp.float32) + b2_ref[l]
        h = _layernorm(h + ff, ln2_g_ref[l], ln2_b_ref[l])

    # decoder on transformer_out[-1]: with reverse-time-major rows the last
    # time step of every batch element is the first `tb` rows.  Linear(D,1)
    # as VPU multiply + lane reduction.
    h_last = h[0:tb, :]                                       # (TB, D)
    out = jnp.sum(h_last * dec_w_ref[...], axis=-1,
                  keepdims=True) + dec_b_ref[...]             # (TB, 1)
    o_ref[0] = out


def _replicated_spec(shape):
    n = len(shape)
    return pl.BlockSpec(shape, lambda i, _n=n: (0,) * _n)


def autoformer_forward(x, params):
    (enc_w, enc_b, wq, wk, wv, wo, bq, bk, bv, bo,
     ln1_g, ln1_b, ln2_g, ln2_b, w1, b1, w2, b2, dec_w, dec_b) = params
    B, L, _ = x.shape

    # Fuse q/k/v weights -> one (D, 3D) weight / (1, 3D) bias per layer and
    # fold the attention scale into the Q columns (deletes the per-head
    # (tbl,tbl) score scaling inside the kernel).
    scale = 1.0 / math.sqrt(HEAD_DIM)
    wqkv = jnp.concatenate([wq * scale, wk, wv], axis=-1)     # (Ly, D, 3D)
    bqkv = jnp.concatenate([bq * scale, bk, bv], axis=-1)     # (Ly, 1, 3D)

    # Tile selection: keep tbl = tb*L near TARGET_TBL; if that leaves a single
    # grid step and B >= 2, split into two steps (v7x dual-TC parallelism +
    # less quadratic masked-attention waste).
    tb = max(1, min(MAX_BATCH_TILE, TARGET_TBL // L, B))
    num_tiles = -(-B // tb)
    if num_tiles == 1 and B >= 2:
        tb = -(-B // 2)
        num_tiles = -(-B // tb)
    b_pad = num_tiles * tb
    tbl = tb * L
    use_mask = tb > 1

    # Reverse-time, time-major, batch-tiled layout: inside tile i, row
    # t * tb + b holds time step (L-1-t) of batch element (i*tb + b).
    xt = jnp.flip(x, axis=1).transpose(1, 0, 2)               # (L, B, 1)
    if b_pad > B:
        xt = jnp.pad(xt, ((0, 0), (0, b_pad - B), (0, 0)))
    xt = (xt.reshape(L, num_tiles, tb, 1)
            .transpose(1, 0, 2, 3)
            .reshape(num_tiles, tbl, 1))

    weights = (enc_w, enc_b, wqkv, bqkv, wo, bo,
               ln1_g, ln1_b, ln2_g, ln2_b, w1, b1, w2, b2, dec_w, dec_b)

    inputs = [xt]
    in_specs = [pl.BlockSpec((1, tbl, 1), lambda i: (i, 0, 0))]
    if use_mask:
        # Host-precomputed additive mask: 0 where rows share a batch element
        # (row % tb equal), -1e30 otherwise.  One small DMA, no per-step mods.
        bid = jnp.arange(tbl, dtype=jnp.int32) % tb
        neg_mask = jnp.where(bid[:, None] == bid[None, :],
                             0.0, -1e30).astype(jnp.float32)
        inputs.append(neg_mask)
        in_specs.append(_replicated_spec(neg_mask.shape))
    inputs.extend(weights)
    in_specs.extend(_replicated_spec(w.shape) for w in weights)

    kernel = functools.partial(autoformer_kernel,
                               tb=tb, seq_len=L, use_mask=use_mask)

    out = pl.pallas_call(
        kernel,
        out_shape=jax.ShapeDtypeStruct((num_tiles, tb, 1), jnp.float32),
        grid_spec=pltpu.PrefetchScalarGridSpec(
            num_scalar_prefetch=0,
            grid=(num_tiles,),
            in_specs=in_specs,
            out_specs=pl.BlockSpec((1, tb, 1), lambda i: (i, 0, 0)),
            scratch_shapes=[pltpu.VMEM((tbl, tbl), jnp.float32)],
        ),
        compiler_params=pltpu.CompilerParams(
            dimension_semantics=("parallel",)),
    )(*inputs)
    return out.reshape(b_pad, 1)[:B]


def autoformer_reference(x, params):
    """Pure-JAX eval-mode reference (matches the PyTorch module semantics)."""
    (enc_w, enc_b, wq, wk, wv, wo, bq, bk, bv, bo,
     ln1_g, ln1_b, ln2_g, ln2_b, w1, b1, w2, b2, dec_w, dec_b) = params
    B, L, _ = x.shape
    scale = 1.0 / math.sqrt(HEAD_DIM)
    h = x @ enc_w + enc_b                                     # (B, L, D)
    for l in range(NUM_LAYERS):
        q = h @ wq[l] + bq[l]
        k = h @ wk[l] + bk[l]
        v = h @ wv[l] + bv[l]

        def split(t):
            return t.reshape(B, L, N_HEADS, HEAD_DIM).transpose(0, 2, 1, 3)

        qh, kh, vh = split(q), split(k), split(v)
        s = jnp.einsum('bhqd,bhkd->bhqk', qh, kh) * scale
        p = jax.nn.softmax(s, axis=-1)
        ctx = jnp.einsum('bhqk,bhkd->bhqd', p, vh)
        ctx = ctx.transpose(0, 2, 1, 3).reshape(B, L, D_MODEL)
        attn = ctx @ wo[l] + bo[l]
        h = _layernorm(h + attn, ln1_g[l], ln1_b[l])
        ff = jnp.maximum(h @ w1[l] + b1[l], 0.0)
        ff = ff @ w2[l] + b2[l]
        h = _layernorm(h + ff, ln2_g[l], ln2_b[l])
    last = h[:, -1, :]                                        # (B, D)
    return last @ dec_w.T + dec_b.reshape(1, 1)               # (B, 1)


def init_params(key):
    s = 0.05
    ks = jax.random.split(key, 16)
    f32 = jnp.float32
    enc_w = jax.random.normal(ks[0], (INPUT_DIM, D_MODEL), f32) * s
    enc_b = jax.random.normal(ks[1], (1, D_MODEL), f32) * s
    wq = jax.random.normal(ks[2], (NUM_LAYERS, D_MODEL, D_MODEL), f32) * s
    wk = jax.random.normal(ks[3], (NUM_LAYERS, D_MODEL, D_MODEL), f32) * s
    wv = jax.random.normal(ks[4], (NUM_LAYERS, D_MODEL, D_MODEL), f32) * s
    wo = jax.random.normal(ks[5], (NUM_LAYERS, D_MODEL, D_MODEL), f32) * s
    bq = jax.random.normal(ks[6], (NUM_LAYERS, 1, D_MODEL), f32) * s
    bk = jax.random.normal(ks[7], (NUM_LAYERS, 1, D_MODEL), f32) * s
    bv = jax.random.normal(ks[8], (NUM_LAYERS, 1, D_MODEL), f32) * s
    bo = jax.random.normal(ks[9], (NUM_LAYERS, 1, D_MODEL), f32) * s
    ln1_g = jnp.ones((NUM_LAYERS, 1, D_MODEL), f32)
    ln1_b = jnp.zeros((NUM_LAYERS, 1, D_MODEL), f32)
    ln2_g = jnp.ones((NUM_LAYERS, 1, D_MODEL), f32)
    ln2_b = jnp.zeros((NUM_LAYERS, 1, D_MODEL), f32)
    w1 = jax.random.normal(ks[10], (NUM_LAYERS, D_MODEL, DIM_FF), f32) * s
    b1 = jax.random.normal(ks[11], (NUM_LAYERS, 1, DIM_FF), f32) * s
    w2 = jax.random.normal(ks[12], (NUM_LAYERS, DIM_FF, D_MODEL), f32) * s
    b2 = jax.random.normal(ks[13], (NUM_LAYERS, 1, D_MODEL), f32) * s
    dec_w = jax.random.normal(ks[14], (D_MODEL, 1), f32).T * s   # stored (1, D)
    dec_b = jax.random.normal(ks[15], (1, 1), f32) * s
    return (enc_w, enc_b, wq, wk, wv, wo, bq, bk, bv, bo,
            ln1_g, ln1_b, ln2_g, ln2_b, w1, b1, w2, b2, dec_w, dec_b)


if __name__ == "__main__":
    key = jax.random.PRNGKey(0)
    k_x1, k_x2, k_p = jax.random.split(key, 3)
    params = init_params(k_p)
    L = 16

    # Case 1: B=2 -> tb=1 (mask-free path, 2 parallel grid steps).
    x1 = jax.random.normal(k_x1, (2, L, INPUT_DIM), jnp.float32)
    out1 = jax.block_until_ready(autoformer_forward(x1, params))
    ref1 = autoformer_reference(x1, params)
    assert out1.shape == (2, 1), out1.shape
    assert bool(jnp.all(jnp.isfinite(out1)))
    assert bool(jnp.allclose(out1, ref1, rtol=5e-2, atol=1e-2)), (out1, ref1)

    # Case 2: B=5 -> tb=3 with batch padding (masked multi-batch tile path).
    x2 = jax.random.normal(k_x2, (5, L, INPUT_DIM), jnp.float32)
    out2 = jax.block_until_ready(autoformer_forward(x2, params))
    ref2 = autoformer_reference(x2, params)
    assert out2.shape == (5, 1), out2.shape
    assert bool(jnp.all(jnp.isfinite(out2)))
    assert bool(jnp.allclose(out2, ref2, rtol=5e-2, atol=1e-2)), (out2, ref2)

    print("KERNEL_OK")
</pallas_src>

<mosaic_0001>
module attributes {stable_mosaic.version = 11 : i64} {
  func.func @autoformer_kernel(%arg0: i32, %arg1: memref<1x16x1xf32, #tpu.memory_space<vmem>>, %arg2: memref<1x64xf32, #tpu.memory_space<vmem>>, %arg3: memref<1x64xf32, #tpu.memory_space<vmem>>, %arg4: memref<2x64x192xf32, #tpu.memory_space<vmem>>, %arg5: memref<2x1x192xf32, #tpu.memory_space<vmem>>, %arg6: memref<2x64x64xf32, #tpu.memory_space<vmem>>, %arg7: memref<2x1x64xf32, #tpu.memory_space<vmem>>, %arg8: memref<2x1x64xf32, #tpu.memory_space<vmem>>, %arg9: memref<2x1x64xf32, #tpu.memory_space<vmem>>, %arg10: memref<2x1x64xf32, #tpu.memory_space<vmem>>, %arg11: memref<2x1x64xf32, #tpu.memory_space<vmem>>, %arg12: memref<2x64x128xf32, #tpu.memory_space<vmem>>, %arg13: memref<2x1x128xf32, #tpu.memory_space<vmem>>, %arg14: memref<2x128x64xf32, #tpu.memory_space<vmem>>, %arg15: memref<2x1x64xf32, #tpu.memory_space<vmem>>, %arg16: memref<1x64xf32, #tpu.memory_space<vmem>>, %arg17: memref<1x1xf32, #tpu.memory_space<vmem>>, %arg18: memref<1x1x1xf32, #tpu.memory_space<vmem>>, %arg19: memref<16x16xf32, #tpu.memory_space<vmem>>) attributes {dimension_semantics = [#tpu.dimension_semantics<parallel>], iteration_bounds = array<i64: 2>, scalar_prefetch = 0 : i64, scratch_operands = 1 : i64, tpu.core_type = #tpu.core_type<tc>, window_params = [{transform_indices = @transform_0, window_bounds = array<i64: 1, 16, 1>}, {pipeline_mode = #tpu.pipeline_mode<synchronous>, transform_indices = @transform_1, window_bounds = array<i64: 1, 64>}, {pipeline_mode = #tpu.pipeline_mode<synchronous>, transform_indices = @transform_2, window_bounds = array<i64: 1, 64>}, {pipeline_mode = #tpu.pipeline_mode<synchronous>, transform_indices = @transform_3, window_bounds = array<i64: 2, 64, 192>}, {pipeline_mode = #tpu.pipeline_mode<synchronous>, transform_indices = @transform_4, window_bounds = array<i64: 2, 1, 192>}, {pipeline_mode = #tpu.pipeline_mode<synchronous>, transform_indices = @transform_5, window_bounds = array<i64: 2, 64, 64>}, {pipeline_mode = #tpu.pipeline_mode<synchronous>, transform_indices = @transform_6, window_bounds = array<i64: 2, 1, 64>}, {pipeline_mode = #tpu.pipeline_mode<synchronous>, transform_indices = @transform_7, window_bounds = array<i64: 2, 1, 64>}, {pipeline_mode = #tpu.pipeline_mode<synchronous>, transform_indices = @transform_8, window_bounds = array<i64: 2, 1, 64>}, {pipeline_mode = #tpu.pipeline_mode<synchronous>, transform_indices = @transform_9, window_bounds = array<i64: 2, 1, 64>}, {pipeline_mode = #tpu.pipeline_mode<synchronous>, transform_indices = @transform_10, window_bounds = array<i64: 2, 1, 64>}, {pipeline_mode = #tpu.pipeline_mode<synchronous>, transform_indices = @transform_11, window_bounds = array<i64: 2, 64, 128>}, {pipeline_mode = #tpu.pipeline_mode<synchronous>, transform_indices = @transform_12, window_bounds = array<i64: 2, 1, 128>}, {pipeline_mode = #tpu.pipeline_mode<synchronous>, transform_indices = @transform_13, window_bounds = array<i64: 2, 128, 64>}, {pipeline_mode = #tpu.pipeline_mode<synchronous>, transform_indices = @transform_14, window_bounds = array<i64: 2, 1, 64>}, {pipeline_mode = #tpu.pipeline_mode<synchronous>, transform_indices = @transform_15, window_bounds = array<i64: 1, 64>}, {pipeline_mode = #tpu.pipeline_mode<synchronous>, transform_indices = @transform_16, window_bounds = array<i64: 1, 1>}, {transform_indices = @transform_17, window_bounds = array<i64: 1, 1, 1>}]} {
    %c0 = arith.constant 0 : index
    %c0_0 = arith.constant 0 : index
    %c0_1 = arith.constant 0 : index
    %0 = vector.load %arg1[%c0, %c0_0, %c0_1] : memref<1x16x1xf32, #tpu.memory_space<vmem>>, vector<1x16x1xf32>
    %1 = vector.shape_cast %0 : vector<1x16x1xf32> to vector<16x1xf32>
    %c0_2 = arith.constant 0 : index
    %c0_3 = arith.constant 0 : index
    %2 = vector.load %arg2[%c0_2, %c0_3] : memref<1x64xf32, #tpu.memory_space<vmem>>, vector<1x64xf32>
    %3 = vector.broadcast %1 : vector<16x1xf32> to vector<16x64xf32>
    %4 = vector.broadcast %2 : vector<1x64xf32> to vector<16x64xf32>
    %5 = arith.mulf %3, %4 : vector<16x64xf32>
    %c0_4 = arith.constant 0 : index
    %c0_5 = arith.constant 0 : index
    %6 = vector.load %arg3[%c0_4, %c0_5] : memref<1x64xf32, #tpu.memory_space<vmem>>, vector<1x64xf32>
    %7 = vector.broadcast %6 : vector<1x64xf32> to vector<16x64xf32>
    %8 = arith.addf %5, %7 : vector<16x64xf32>
    %c0_6 = arith.constant 0 : index
    %c0_7 = arith.constant 0 : index
    %c0_8 = arith.constant 0 : index
    %9 = vector.load %arg4[%c0_6, %c0_7, %c0_8] : memref<2x64x192xf32, #tpu.memory_space<vmem>>, vector<1x64x192xf32>
    %10 = vector.shape_cast %9 : vector<1x64x192xf32> to vector<64x192xf32>
    %cst = arith.constant dense<0.000000e+00> : vector<16x192xf32>
    %11 = tpu.matmul %8, %10, %cst {dimension_numbers = #tpu.dot_dimension_numbers<[1], [0], [0], [1], [0, 0, 1, 1], [], []>} : vector<16x64xf32>, vector<64x192xf32>, vector<16x192xf32> -> vector<16x192xf32>
    %c0_9 = arith.constant 0 : index
    %c0_10 = arith.constant 0 : index
    %c0_11 = arith.constant 0 : index
    %12 = vector.load %arg5[%c0_9, %c0_10, %c0_11] : memref<2x1x192xf32, #tpu.memory_space<vmem>>, vector<1x1x192xf32>
    %13 = vector.shape_cast %12 : vector<1x1x192xf32> to vector<1x192xf32>
    %14 = vector.broadcast %13 : vector<1x192xf32> to vector<16x192xf32>
    %15 = arith.addf %11, %14 : vector<16x192xf32>
    %16 = vector.extract_strided_slice %15 {offsets = [0, 0], sizes = [16, 64], strides = [1, 1]} : vector<16x192xf32> to vector<16x64xf32>
    %17 = vector.extract_strided_slice %15 {offsets = [0, 64], sizes = [16, 64], strides = [1, 1]} : vector<16x192xf32> to vector<16x64xf32>
    %18 = vector.extract_strided_slice %15 {offsets = [0, 128], sizes = [16, 64], strides = [1, 1]} : vector<16x192xf32> to vector<16x64xf32>
    %c0_12 = arith.constant 0 : index
    %c0_13 = arith.constant 0 : index
    %c0_14 = arith.constant 0 : index
    %19 = vector.load %arg6[%c0_12, %c0_13, %c0_14] : memref<2x64x64xf32, #tpu.memory_space<vmem>>, vector<1x64x64xf32>
    %20 = vector.shape_cast %19 : vector<1x64x64xf32> to vector<64x64xf32>
    %cst_15 = arith.constant 0.000000e+00 : f32
    %21 = vector.broadcast %cst_15 : f32 to vector<16x64xf32>
    %22 = vector.extract_strided_slice %16 {offsets = [0, 0], sizes = [16, 16], strides = [1, 1]} : vector<16x64xf32> to vector<16x16xf32>
    %23 = vector.extract_strided_slice %17 {offsets = [0, 0], sizes = [16, 16], strides = [1, 1]} : vector<16x64xf32> to vector<16x16xf32>
    %24 = vector.extract_strided_slice %18 {offsets = [0, 0], sizes = [16, 16], strides = [1, 1]} : vector<16x64xf32> to vector<16x16xf32>
    %cst_16 = arith.constant dense<0.000000e+00> : vector<16x16xf32>
    %25 = tpu.matmul %22, %23, %cst_16 {dimension_numbers = #tpu.dot_dimension_numbers<[1], [1], [0], [0], [0, 0, 1, 0], [], []>} : vector<16x16xf32>, vector<16x16xf32>, vector<16x16xf32> -> vector<16x16xf32>
    %c0_17 = arith.constant 0 : index
    %c0_18 = arith.constant 0 : index
    %26 = vector.load %arg19[%c0_17, %c0_18] : memref<16x16xf32, #tpu.memory_space<vmem>>, vector<16x16xf32>
    tpu.vector_store %arg19[%c0_17, %c0_18], %25 {strides = array<i32>} : memref<16x16xf32, #tpu.memory_space<vmem>>, vector<16x16xf32>,
    %c0_19 = arith.constant 0 : index
    %c0_20 = arith.constant 0 : index
    %27 = vector.load %arg19[%c0_19, %c0_20] : memref<16x16xf32, #tpu.memory_space<vmem>>, vector<16x16xf32>
    %cst_21 = arith.constant dense<0xFF800000> : vector<16xf32>
    %28 = vector.multi_reduction <maximumf>, %27, %cst_21 [1] : vector<16x16xf32> to vector<16xf32>
    %29 = vector.shape_cast %28 : vector<16xf32> to vector<16x1xf32>
    %30 = vector.broadcast %29 : vector<16x1xf32> to vector<16x16xf32>
    %31 = arith.subf %27, %30 : vector<16x16xf32>
    %32 = math.exp %31 : vector<16x16xf32>
    %cst_22 = arith.constant dense<0.000000e+00> : vector<16xf32>
    %33 = vector.multi_reduction <add>, %32, %cst_22 [1] : vector<16x16xf32> to vector<16xf32>
    %34 = vector.shape_cast %33 : vector<16xf32> to vector<16x1xf32>
    %35 = tpu.reciprocal %34 {approx = true} : vector<16x1xf32> -> vector<16x1xf32>
    %36 = vector.broadcast %35 : vector<16x1xf32> to vector<16x16xf32>
    %37 = arith.mulf %32, %36 : vector<16x16xf32>
    %c0_23 = arith.constant 0 : index
    %c0_24 = arith.constant 0 : index
    %38 = vector.load %arg19[%c0_23, %c0_24] : memref<16x16xf32, #tpu.memory_space<vmem>>, vector<16x16xf32>
    tpu.vector_store %arg19[%c0_23, %c0_24], %37 {strides = array<i32>} : memref<16x16xf32, #tpu.memory_space<vmem>>, vector<16x16xf32>,
    %c0_25 = arith.constant 0 : index
    %c0_26 = arith.constant 0 : index
    %39 = vector.load %arg19[%c0_25, %c0_26] : memref<16x16xf32, #tpu.memory_space<vmem>>, vector<16x16xf32>
    %cst_27 = arith.constant dense<0.000000e+00> : vector<16x16xf32>
    %40 = tpu.matmul %39, %24, %cst_27 {dimension_numbers = #tpu.dot_dimension_numbers<[1], [0], [0], [1], [0, 0, 1, 1], [], []>} : vector<16x16xf32>, vector<16x16xf32>, vector<16x16xf32> -> vector<16x16xf32>
    %41 = vector.extract_strided_slice %20 {offsets = [0, 0], sizes = [16, 64], strides = [1, 1]} : vector<64x64xf32> to vector<16x64xf32>
    %cst_28 = arith.constant dense<0.000000e+00> : vector<16x64xf32>
    %42 = tpu.matmul %40, %41, %cst_28 {dimension_numbers = #tpu.dot_dimension_numbers<[1], [0], [0], [1], [0, 0, 1, 1], [], []>} : vector<16x16xf32>, vector<16x64xf32>, vector<16x64xf32> -> vector<16x64xf32>
    %43 = arith.addf %21, %42 : vector<16x64xf32>
    %44 = vector.extract_strided_slice %16 {offsets = [0, 16], sizes = [16, 16], strides = [1, 1]} : vector<16x64xf32> to vector<16x16xf32>
    %45 = vector.extract_strided_slice %17 {offsets = [0, 16], sizes = [16, 16], strides = [1, 1]} : vector<16x64xf32> to vector<16x16xf32>
    %46 = vector.extract_strided_slice %18 {offsets = [0, 16], sizes = [16, 16], strides = [1, 1]} : vector<16x64xf32> to vector<16x16xf32>
    %cst_29 = arith.constant dense<0.000000e+00> : vector<16x16xf32>
    %47 = tpu.matmul %44, %45, %cst_29 {dimension_numbers = #tpu.dot_dimension_numbers<[1], [1], [0], [0], [0, 0, 1, 0], [], []>} : vector<16x16xf32>, vector<16x16xf32>, vector<16x16xf32> -> vector<16x16xf32>
    %c0_30 = arith.constant 0 : index
    %c0_31 = arith.constant 0 : index
    %48 = vector.load %arg19[%c0_30, %c0_31] : memref<16x16xf32, #tpu.memory_space<vmem>>, vector<16x16xf32>
    tpu.vector_store %arg19[%c0_30, %c0_31], %47 {strides = array<i32>} : memref<16x16xf32, #tpu.memory_space<vmem>>, vector<16x16xf32>,
    %c0_32 = arith.constant 0 : index
    %c0_33 = arith.constant 0 : index
    %49 = vector.load %arg19[%c0_32, %c0_33] : memref<16x16xf32, #tpu.memory_space<vmem>>, vector<16x16xf32>
    %cst_34 = arith.constant dense<0xFF800000> : vector<16xf32>
    %50 = vector.multi_reduction <maximumf>, %49, %cst_34 [1] : vector<16x16xf32> to vector<16xf32>
    %51 = vector.shape_cast %50 : vector<16xf32> to vector<16x1xf32>
    %52 = vector.broadcast %51 : vector<16x1xf32> to vector<16x16xf32>
    %53 = arith.subf %49, %52 : vector<16x16xf32>
    %54 = math.exp %53 : vector<16x16xf32>
    %cst_35 = arith.constant dense<0.000000e+00> : vector<16xf32>
    %55 = vector.multi_reduction <add>, %54, %cst_35 [1] : vector<16x16xf32> to vector<16xf32>
    %56 = vector.shape_cast %55 : vector<16xf32> to vector<16x1xf32>
    %57 = tpu.reciprocal %56 {approx = true} : vector<16x1xf32> -> vector<16x1xf32>
    %58 = vector.broadcast %57 : vector<16x1xf32> to vector<16x16xf32>
    %59 = arith.mulf %54, %58 : vector<16x16xf32>
    %c0_36 = arith.constant 0 : index
    %c0_37 = arith.constant 0 : index
    %60 = vector.load %arg19[%c0_36, %c0_37] : memref<16x16xf32, #tpu.memory_space<vmem>>, vector<16x16xf32>
    tpu.vector_store %arg19[%c0_36, %c0_37], %59 {strides = array<i32>} : memref<16x16xf32, #tpu.memory_space<vmem>>, vector<16x16xf32>,
    %c0_38 = arith.constant 0 : index
    %c0_39 = arith.constant 0 : index
    %61 = vector.load %arg19[%c0_38, %c0_39] : memref<16x16xf32, #tpu.memory_space<vmem>>, vector<16x16xf32>
    %cst_40 = arith.constant dense<0.000000e+00> : vector<16x16xf32>
    %62 = tpu.matmul %61, %46, %cst_40 {dimension_numbers = #tpu.dot_dimension_numbers<[1], [0], [0], [1], [0, 0, 1, 1], [], []>} : vector<16x16xf32>, vector<16x16xf32>, vector<16x16xf32> -> vector<16x16xf32>
    %63 = vector.extract_strided_slice %20 {offsets = [16, 0], sizes = [16, 64], strides = [1, 1]} : vector<64x64xf32> to vector<16x64xf32>
    %cst_41 = arith.constant dense<0.000000e+00> : vector<16x64xf32>
    %64 = tpu.matmul %62, %63, %cst_41 {dimension_numbers = #tpu.dot_dimension_numbers<[1], [0], [0], [1], [0, 0, 1, 1], [], []>} : vector<16x16xf32>, vector<16x64xf32>, vector<16x64xf32> -> vector<16x64xf32>
    %65 = arith.addf %43, %64 : vector<16x64xf32>
    %66 = vector.extract_strided_slice %16 {offsets = [0, 32], sizes = [16, 16], strides = [1, 1]} : vector<16x64xf32> to vector<16x16xf32>
    %67 = vector.extract_strided_slice %17 {offsets = [0, 32], sizes = [16, 16], strides = [1, 1]} : vector<16x64xf32> to vector<16x16xf32>
    %68 = vector.extract_strided_slice %18 {offsets = [0, 32], sizes = [16, 16], strides = [1, 1]} : vector<16x64xf32> to vector<16x16xf32>
    %cst_42 = arith.constant dense<0.000000e+00> : vector<16x16xf32>
    %69 = tpu.matmul %66, %67, %cst_42 {dimension_numbers = #tpu.dot_dimension_numbers<[1], [1], [0], [0], [0, 0, 1, 0], [], []>} : vector<16x16xf32>, vector<16x16xf32>, vector<16x16xf32> -> vector<16x16xf32>
    %c0_43 = arith.constant 0 : index
    %c0_44 = arith.constant 0 : index
    %70 = vector.load %arg19[%c0_43, %c0_44] : memref<16x16xf32, #tpu.memory_space<vmem>>, vector<16x16xf32>
    tpu.vector_store %arg19[%c0_43, %c0_44], %69 {strides = array<i32>} : memref<16x16xf32, #tpu.memory_space<vmem>>, vector<16x16xf32>,
    %c0_45 = arith.constant 0 : index
    %c0_46 = arith.constant 0 : index
    %71 = vector.load %arg19[%c0_45, %c0_46] : memref<16x16xf32, #tpu.memory_space<vmem>>, vector<16x16xf32>
    %cst_47 = arith.constant dense<0xFF800000> : vector<16xf32>
    %72 = vector.multi_reduction <maximumf>, %71, %cst_47 [1] : vector<16x16xf32> to vector<16xf32>
    %73 = vector.shape_cast %72 : vector<16xf32> to vector<16x1xf32>
    %74 = vector.broadcast %73 : vector<16x1xf32> to vector<16x16xf32>
    %75 = arith.subf %71, %74 : vector<16x16xf32>
    %76 = math.exp %75 : vector<16x16xf32>
    %cst_48 = arith.constant dense<0.000000e+00> : vector<16xf32>
    %77 = vector.multi_reduction <add>, %76, %cst_48 [1] : vector<16x16xf32> to vector<16xf32>
    %78 = vector.shape_cast %77 : vector<16xf32> to vector<16x1xf32>
    %79 = tpu.reciprocal %78 {approx = true} : vector<16x1xf32> -> vector<16x1xf32>
    %80 = vector.broadcast %79 : vector<16x1xf32> to vector<16x16xf32>
    %81 = arith.mulf %76, %80 : vector<16x16xf32>
    %c0_49 = arith.constant 0 : index
    %c0_50 = arith.constant 0 : index
    %82 = vector.load %arg19[%c0_49, %c0_50] : memref<16x16xf32, #tpu.memory_space<vmem>>, vector<16x16xf32>
    tpu.vector_store %arg19[%c0_49, %c0_50], %81 {strides = array<i32>} : memref<16x16xf32, #tpu.memory_space<vmem>>, vector<16x16xf32>,
    %c0_51 = arith.constant 0 : index
    %c0_52 = arith.constant 0 : index
    %83 = vector.load %arg19[%c0_51, %c0_52] : memref<16x16xf32, #tpu.memory_space<vmem>>, vector<16x16xf32>
    %cst_53 = arith.constant dense<0.000000e+00> : vector<16x16xf32>
    %84 = tpu.matmul %83, %68, %cst_53 {dimension_numbers = #tpu.dot_dimension_numbers<[1], [0], [0], [1], [0, 0, 1, 1], [], []>} : vector<16x16xf32>, vector<16x16xf32>, vector<16x16xf32> -> vector<16x16xf32>
    %85 = vector.extract_strided_slice %20 {offsets = [32, 0], sizes = [16, 64], strides = [1, 1]} : vector<64x64xf32> to vector<16x64xf32>
    %cst_54 = arith.constant dense<0.000000e+00> : vector<16x64xf32>
    %86 = tpu.matmul %84, %85, %cst_54 {dimension_numbers = #tpu.dot_dimension_numbers<[1], [0], [0], [1], [0, 0, 1, 1], [], []>} : vector<16x16xf32>, vector<16x64xf32>, vector<16x64xf32> -> vector<16x64xf32>
    %87 = arith.addf %65, %86 : vector<16x64xf32>
    %88 = vector.extract_strided_slice %16 {offsets = [0, 48], sizes = [16, 16], strides = [1, 1]} : vector<16x64xf32> to vector<16x16xf32>
    %89 = vector.extract_strided_slice %17 {offsets = [0, 48], sizes = [16, 16], strides = [1, 1]} : vector<16x64xf32> to vector<16x16xf32>
    %90 = vector.extract_strided_slice %18 {offsets = [0, 48], sizes = [16, 16], strides = [1, 1]} : vector<16x64xf32> to vector<16x16xf32>
    %cst_55 = arith.constant dense<0.000000e+00> : vector<16x16xf32>
    %91 = tpu.matmul %88, %89, %cst_55 {dimension_numbers = #tpu.dot_dimension_numbers<[1], [1], [0], [0], [0, 0, 1, 0], [], []>} : vector<16x16xf32>, vector<16x16xf32>, vector<16x16xf32> -> vector<16x16xf32>
    %c0_56 = arith.constant 0 : index
    %c0_57 = arith.constant 0 : index
    %92 = vector.load %arg19[%c0_56, %c0_57] : memref<16x16xf32, #tpu.memory_space<vmem>>, vector<16x16xf32>
    tpu.vector_store %arg19[%c0_56, %c0_57], %91 {strides = array<i32>} : memref<16x16xf32, #tpu.memory_space<vmem>>, vector<16x16xf32>,
    %c0_58 = arith.constant 0 : index
    %c0_59 = arith.constant 0 : index
    %93 = vector.load %arg19[%c0_58, %c0_59] : memref<16x16xf32, #tpu.memory_space<vmem>>, vector<16x16xf32>
    %cst_60 = arith.constant dense<0xFF800000> : vector<16xf32>
    %94 = vector.multi_reduction <maximumf>, %93, %cst_60 [1] : vector<16x16xf32> to vector<16xf32>
    %95 = vector.shape_cast %94 : vector<16xf32> to vector<16x1xf32>
    %96 = vector.broadcast %95 : vector<16x1xf32> to vector<16x16xf32>
    %97 = arith.subf %93, %96 : vector<16x16xf32>
    %98 = math.exp %97 : vector<16x16xf32>
    %cst_61 = arith.constant dense<0.000000e+00> : vector<16xf32>
    %99 = vector.multi_reduction <add>, %98, %cst_61 [1] : vector<16x16xf32> to vector<16xf32>
    %100 = vector.shape_cast %99 : vector<16xf32> to vector<16x1xf32>
    %101 = tpu.reciprocal %100 {approx = true} : vector<16x1xf32> -> vector<16x1xf32>
    %102 = vector.broadcast %101 : vector<16x1xf32> to vector<16x16xf32>
    %103 = arith.mulf %98, %102 : vector<16x16xf32>
    %c0_62 = arith.constant 0 : index
    %c0_63 = arith.constant 0 : index
    %104 = vector.load %arg19[%c0_62, %c0_63] : memref<16x16xf32, #tpu.memory_space<vmem>>, vector<16x16xf32>
    tpu.vector_store %arg19[%c0_62, %c0_63], %103 {strides = array<i32>} : memref<16x16xf32, #tpu.memory_space<vmem>>, vector<16x16xf32>,
    %c0_64 = arith.constant 0 : index
    %c0_65 = arith.constant 0 : index
    %105 = vector.load %arg19[%c0_64, %c0_65] : memref<16x16xf32, #tpu.memory_space<vmem>>, vector<16x16xf32>
    %cst_66 = arith.constant dense<0.000000e+00> : vector<16x16xf32>
    %106 = tpu.matmul %105, %90, %cst_66 {dimension_numbers = #tpu.dot_dimension_numbers<[1], [0], [0], [1], [0, 0, 1, 1], [], []>} : vector<16x16xf32>, vector<16x16xf32>, vector<16x16xf32> -> vector<16x16xf32>
    %107 = vector.extract_strided_slice %20 {offsets = [48, 0], sizes = [16, 64], strides = [1, 1]} : vector<64x64xf32> to vector<16x64xf32>
    %cst_67 = arith.constant dense<0.000000e+00> : vector<16x64xf32>
    %108 = tpu.matmul %106, %107, %cst_67 {dimension_numbers = #tpu.dot_dimension_numbers<[1], [0], [0], [1], [0, 0, 1, 1], [], []>} : vector<16x16xf32>, vector<16x64xf32>, vector<16x64xf32> -> vector<16x64xf32>
    %109 = arith.addf %87, %108 : vector<16x64xf32>
    %c0_68 = arith.constant 0 : index
    %c0_69 = arith.constant 0 : index
    %c0_70 = arith.constant 0 : index
    %110 = vector.load %arg7[%c0_68, %c0_69, %c0_70] : memref<2x1x64xf32, #tpu.memory_space<vmem>>, vector<1x1x64xf32>
    %111 = vector.shape_cast %110 : vector<1x1x64xf32> to vector<1x64xf32>
    %112 = vector.broadcast %111 : vector<1x64xf32> to vector<16x64xf32>
    %113 = arith.addf %109, %112 : vector<16x64xf32>
    %114 = arith.addf %8, %113 : vector<16x64xf32>
    %c0_71 = arith.constant 0 : index
    %c0_72 = arith.constant 0 : index
    %c0_73 = arith.constant 0 : index
    %115 = vector.load %arg8[%c0_71, %c0_72, %c0_73] : memref<2x1x64xf32, #tpu.memory_space<vmem>>, vector<1x1x64xf32>
    %116 = vector.shape_cast %115 : vector<1x1x64xf32> to vector<1x64xf32>
    %c0_74 = arith.constant 0 : index
    %c0_75 = arith.constant 0 : index
    %c0_76 = arith.constant 0 : index
    %117 = vector.load %arg9[%c0_74, %c0_75, %c0_76] : memref<2x1x64xf32, #tpu.memory_space<vmem>>, vector<1x1x64xf32>
    %118 = vector.shape_cast %117 : vector<1x1x64xf32> to vector<1x64xf32>
    %cst_77 = arith.constant dense<0.000000e+00> : vector<16xf32>
    %119 = vector.multi_reduction <add>, %114, %cst_77 [1] : vector<16x64xf32> to vector<16xf32>
    %120 = vector.shape_cast %119 : vector<16xf32> to vector<16x1xf32>
    %cst_78 = arith.constant 6.400000e+01 : f32
    %121 = vector.broadcast %cst_78 : f32 to vector<16x1xf32>
    %122 = arith.divf %120, %121 : vector<16x1xf32>
    %123 = vector.broadcast %122 : vector<16x1xf32> to vector<16x64xf32>
    %124 = arith.subf %114, %123 : vector<16x64xf32>
    %125 = arith.mulf %124, %124 : vector<16x64xf32>
    %cst_79 = arith.constant dense<0.000000e+00> : vector<16xf32>
    %126 = vector.multi_reduction <add>, %125, %cst_79 [1] : vector<16x64xf32> to vector<16xf32>
    %127 = vector.shape_cast %126 : vector<16xf32> to vector<16x1xf32>
    %cst_80 = arith.constant 6.400000e+01 : f32
    %128 = vector.broadcast %cst_80 : f32 to vector<16x1xf32>
    %129 = arith.divf %127, %128 : vector<16x1xf32>
    %cst_81 = arith.constant 9.99999974E-6 : f32
    %130 = vector.broadcast %cst_81 : f32 to vector<16x1xf32>
    %131 = arith.addf %129, %130 : vector<16x1xf32>
    %132 = math.rsqrt %131 : vector<16x1xf32>
    %133 = vector.broadcast %122 : vector<16x1xf32> to vector<16x64xf32>
    %134 = arith.subf %114, %133 : vector<16x64xf32>
    %135 = vector.broadcast %132 : vector<16x1xf32> to vector<16x64xf32>
    %136 = arith.mulf %134, %135 : vector<16x64xf32>
    %137 = vector.broadcast %116 : vector<1x64xf32> to vector<16x64xf32>
    %138 = arith.mulf %136, %137 : vector<16x64xf32>
    %139 = vector.broadcast %118 : vector<1x64xf32> to vector<16x64xf32>
    %140 = arith.addf %138, %139 : vector<16x64xf32>
    %c0_82 = arith.constant 0 : index
    %c0_83 = arith.constant 0 : index
    %c0_84 = arith.constant 0 : index
    %141 = vector.load %arg12[%c0_82, %c0_83, %c0_84] : memref<2x64x128xf32, #tpu.memory_space<vmem>>, vector<1x64x128xf32>
    %142 = vector.shape_cast %141 : vector<1x64x128xf32> to vector<64x128xf32>
    %cst_85 = arith.constant dense<0.000000e+00> : vector<16x128xf32>
    %143 = tpu.matmul %140, %142, %cst_85 {dimension_numbers = #tpu.dot_dimension_numbers<[1], [0], [0], [1], [0, 0, 1, 1], [], []>} : vector<16x64xf32>, vector<64x128xf32>, vector<16x128xf32> -> vector<16x128xf32>
    %c0_86 = arith.constant 0 : index
    %c0_87 = arith.constant 0 : index
    %c0_88 = arith.constant 0 : index
    %144 = vector.load %arg13[%c0_86, %c0_87, %c0_88] : memref<2x1x128xf32, #tpu.memory_space<vmem>>, vector<1x1x128xf32>
    %145 = vector.shape_cast %144 : vector<1x1x128xf32> to vector<1x128xf32>
    %146 = vector.broadcast %145 : vector<1x128xf32> to vector<16x128xf32>
    %147 = arith.addf %143, %146 : vector<16x128xf32>
    %cst_89 = arith.constant 0.000000e+00 : f32
    %148 = vector.broadcast %cst_89 : f32 to vector<16x128xf32>
    %149 = arith.maximumf %147, %148 : vector<16x128xf32>
    %c0_90 = arith.constant 0 : index
    %c0_91 = arith.constant 0 : index
    %c0_92 = arith.constant 0 : index
    %150 = vector.load %arg14[%c0_90, %c0_91, %c0_92] : memref<2x128x64xf32, #tpu.memory_space<vmem>>, vector<1x128x64xf32>
    %151 = vector.shape_cast %150 : vector<1x128x64xf32> to vector<128x64xf32>
    %cst_93 = arith.constant dense<0.000000e+00> : vector<16x64xf32>
    %152 = tpu.matmul %149, %151, %cst_93 {dimension_numbers = #tpu.dot_dimension_numbers<[1], [0], [0], [1], [0, 0, 1, 1], [], []>} : vector<16x128xf32>, vector<128x64xf32>, vector<16x64xf32> -> vector<16x64xf32>
    %c0_94 = arith.constant 0 : index
    %c0_95 = arith.constant 0 : index
    %c0_96 = arith.constant 0 : index
    %153 = vector.load %arg15[%c0_94, %c0_95, %c0_96] : memref<2x1x64xf32, #tpu.memory_space<vmem>>, vector<1x1x64xf32>
    %154 = vector.shape_cast %153 : vector<1x1x64xf32> to vector<1x64xf32>
    %155 = vector.broadcast %154 : vector<1x64xf32> to vector<16x64xf32>
    %156 = arith.addf %152, %155 : vector<16x64xf32>
    %157 = arith.addf %140, %156 : vector<16x64xf32>
    %c0_97 = arith.constant 0 : index
    %c0_98 = arith.constant 0 : index
    %c0_99 = arith.constant 0 : index
    %158 = vector.load %arg10[%c0_97, %c0_98, %c0_99] : memref<2x1x64xf32, #tpu.memory_space<vmem>>, vector<1x1x64xf32>
    %159 = vector.shape_cast %158 : vector<1x1x64xf32> to vector<1x64xf32>
    %c0_100 = arith.constant 0 : index
    %c0_101 = arith.constant 0 : index
    %c0_102 = arith.constant 0 : index
    %160 = vector.load %arg11[%c0_100, %c0_101, %c0_102] : memref<2x1x64xf32, #tpu.memory_space<vmem>>, vector<1x1x64xf32>
    %161 = vector.shape_cast %160 : vector<1x1x64xf32> to vector<1x64xf32>
    %cst_103 = arith.constant dense<0.000000e+00> : vector<16xf32>
    %162 = vector.multi_reduction <add>, %157, %cst_103 [1] : vector<16x64xf32> to vector<16xf32>
    %163 = vector.shape_cast %162 : vector<16xf32> to vector<16x1xf32>
    %cst_104 = arith.constant 6.400000e+01 : f32
    %164 = vector.broadcast %cst_104 : f32 to vector<16x1xf32>
    %165 = arith.divf %163, %164 : vector<16x1xf32>
    %166 = vector.broadcast %165 : vector<16x1xf32> to vector<16x64xf32>
    %167 = arith.subf %157, %166 : vector<16x64xf32>
    %168 = arith.mulf %167, %167 : vector<16x64xf32>
    %cst_105 = arith.constant dense<0.000000e+00> : vector<16xf32>
    %169 = vector.multi_reduction <add>, %168, %cst_105 [1] : vector<16x64xf32> to vector<16xf32>
    %170 = vector.shape_cast %169 : vector<16xf32> to vector<16x1xf32>
    %cst_106 = arith.constant 6.400000e+01 : f32
    %171 = vector.broadcast %cst_106 : f32 to vector<16x1xf32>
    %172 = arith.divf %170, %171 : vector<16x1xf32>
    %cst_107 = arith.constant 9.99999974E-6 : f32
    %173 = vector.broadcast %cst_107 : f32 to vector<16x1xf32>
    %174 = arith.addf %172, %173 : vector<16x1xf32>
    %175 = math.rsqrt %174 : vector<16x1xf32>
    %176 = vector.broadcast %165 : vector<16x1xf32> to vector<16x64xf32>
    %177 = arith.subf %157, %176 : vector<16x64xf32>
    %178 = vector.broadcast %175 : vector<16x1xf32> to vector<16x64xf32>
    %179 = arith.mulf %177, %178 : vector<16x64xf32>
    %180 = vector.broadcast %159 : vector<1x64xf32> to vector<16x64xf32>
    %181 = arith.mulf %179, %180 : vector<16x64xf32>
    %182 = vector.broadcast %161 : vector<1x64xf32> to vector<16x64xf32>
    %183 = arith.addf %181, %182 : vector<16x64xf32>
    %c1 = arith.constant 1 : index
    %c0_108 = arith.constant 0 : index
    %c0_109 = arith.constant 0 : index
    %184 = vector.load %arg4[%c1, %c0_108, %c0_109] : memref<2x64x192xf32, #tpu.memory_space<vmem>>, vector<1x64x192xf32>
    %185 = vector.shape_cast %184 : vector<1x64x192xf32> to vector<64x192xf32>
    %cst_110 = arith.constant dense<0.000000e+00> : vector<16x192xf32>
    %186 = tpu.matmul %183, %185, %cst_110 {dimension_numbers = #tpu.dot_dimension_numbers<[1], [0], [0], [1], [0, 0, 1, 1], [], []>} : vector<16x64xf32>, vector<64x192xf32>, vector<16x192xf32> -> vector<16x192xf32>
    %c1_111 = arith.constant 1 : index
    %c0_112 = arith.constant 0 : index
    %c0_113 = arith.constant 0 : index
    %187 = vector.load %arg5[%c1_111, %c0_112, %c0_113] : memref<2x1x192xf32, #tpu.memory_space<vmem>>, vector<1x1x192xf32>
    %188 = vector.shape_cast %187 : vector<1x1x192xf32> to vector<1x192xf32>
    %189 = vector.broadcast %188 : vector<1x192xf32> to vector<16x192xf32>
    %190 = arith.addf %186, %189 : vector<16x192xf32>
    %191 = vector.extract_strided_slice %190 {offsets = [0, 0], sizes = [16, 64], strides = [1, 1]} : vector<16x192xf32> to vector<16x64xf32>
    %192 = vector.extract_strided_slice %190 {offsets = [0, 64], sizes = [16, 64], strides = [1, 1]} : vector<16x192xf32> to vector<16x64xf32>
    %193 = vector.extract_strided_slice %190 {offsets = [0, 128], sizes = [16, 64], strides = [1, 1]} : vector<16x192xf32> to vector<16x64xf32>
    %c1_114 = arith.constant 1 : index
    %c0_115 = arith.constant 0 : index
    %c0_116 = arith.constant 0 : index
    %194 = vector.load %arg6[%c1_114, %c0_115, %c0_116] : memref<2x64x64xf32, #tpu.memory_space<vmem>>, vector<1x64x64xf32>
    %195 = vector.shape_cast %194 : vector<1x64x64xf32> to vector<64x64xf32>
    %cst_117 = arith.constant 0.000000e+00 : f32
    %196 = vector.broadcast %cst_117 : f32 to vector<16x64xf32>
    %197 = vector.extract_strided_slice %191 {offsets = [0, 0], sizes = [16, 16], strides = [1, 1]} : vector<16x64xf32> to vector<16x16xf32>
    %198 = vector.extract_strided_slice %192 {offsets = [0, 0], sizes = [16, 16], strides = [1, 1]} : vector<16x64xf32> to vector<16x16xf32>
    %199 = vector.extract_strided_slice %193 {offsets = [0, 0], sizes = [16, 16], strides = [1, 1]} : vector<16x64xf32> to vector<16x16xf32>
    %cst_118 = arith.constant dense<0.000000e+00> : vector<16x16xf32>
    %200 = tpu.matmul %197, %198, %cst_118 {dimension_numbers = #tpu.dot_dimension_numbers<[1], [1], [0], [0], [0, 0, 1, 0], [], []>} : vector<16x16xf32>, vector<16x16xf32>, vector<16x16xf32> -> vector<16x16xf32>
    %c0_119 = arith.constant 0 : index
    %c0_120 = arith.constant 0 : index
    %201 = vector.load %arg19[%c0_119, %c0_120] : memref<16x16xf32, #tpu.memory_space<vmem>>, vector<16x16xf32>
    tpu.vector_store %arg19[%c0_119, %c0_120], %200 {strides = array<i32>} : memref<16x16xf32, #tpu.memory_space<vmem>>, vector<16x16xf32>,
    %c0_121 = arith.constant 0 : index
    %c0_122 = arith.constant 0 : index
    %202 = vector.load %arg19[%c0_121, %c0_122] : memref<16x16xf32, #tpu.memory_space<vmem>>, vector<16x16xf32>
    %cst_123 = arith.constant dense<0xFF800000> : vector<16xf32>
    %203 = vector.multi_reduction <maximumf>, %202, %cst_123 [1] : vector<16x16xf32> to vector<16xf32>
    %204 = vector.shape_cast %203 : vector<16xf32> to vector<16x1xf32>
    %205 = vector.broadcast %204 : vector<16x1xf32> to vector<16x16xf32>
    %206 = arith.subf %202, %205 : vector<16x16xf32>
    %207 = math.exp %206 : vector<16x16xf32>
    %cst_124 = arith.constant dense<0.000000e+00> : vector<16xf32>
    %208 = vector.multi_reduction <add>, %207, %cst_124 [1] : vector<16x16xf32> to vector<16xf32>
    %209 = vector.shape_cast %208 : vector<16xf32> to vector<16x1xf32>
    %210 = tpu.reciprocal %209 {approx = true} : vector<16x1xf32> -> vector<16x1xf32>
    %211 = vector.broadcast %210 : vector<16x1xf32> to vector<16x16xf32>
    %212 = arith.mulf %207, %211 : vector<16x16xf32>
    %c0_125 = arith.constant 0 : index
    %c0_126 = arith.constant 0 : index
    %213 = vector.load %arg19[%c0_125, %c0_126] : memref<16x16xf32, #tpu.memory_space<vmem>>, vector<16x16xf32>
    tpu.vector_store %arg19[%c0_125, %c0_126], %212 {strides = array<i32>} : memref<16x16xf32, #tpu.memory_space<vmem>>, vector<16x16xf32>,
    %c0_127 = arith.constant 0 : index
    %c0_128 = arith.constant 0 : index
    %214 = vector.load %arg19[%c0_127, %c0_128] : memref<16x16xf32, #tpu.memory_space<vmem>>, vector<16x16xf32>
    %cst_129 = arith.constant dense<0.000000e+00> : vector<16x16xf32>
    %215 = tpu.matmul %214, %199, %cst_129 {dimension_numbers = #tpu.dot_dimension_numbers<[1], [0], [0], [1], [0, 0, 1, 1], [], []>} : vector<16x16xf32>, vector<16x16xf32>, vector<16x16xf32> -> vector<16x16xf32>
    %216 = vector.extract_strided_slice %195 {offsets = [0, 0], sizes = [16, 64], strides = [1, 1]} : vector<64x64xf32> to vector<16x64xf32>
    %cst_130 = arith.constant dense<0.000000e+00> : vector<16x64xf32>
    %217 = tpu.matmul %215, %216, %cst_130 {dimension_numbers = #tpu.dot_dimension_numbers<[1], [0], [0], [1], [0, 0, 1, 1], [], []>} : vector<16x16xf32>, vector<16x64xf32>, vector<16x64xf32> -> vector<16x64xf32>
    %218 = arith.addf %196, %217 : vector<16x64xf32>
    %219 = vector.extract_strided_slice %191 {offsets = [0, 16], sizes = [16, 16], strides = [1, 1]} : vector<16x64xf32> to vector<16x16xf32>
    %220 = vector.extract_strided_slice %192 {offsets = [0, 16], sizes = [16, 16], strides = [1, 1]} : vector<16x64xf32> to vector<16x16xf32>
    %221 = vector.extract_strided_slice %193 {offsets = [0, 16], sizes = [16, 16], strides = [1, 1]} : vector<16x64xf32> to vector<16x16xf32>
    %cst_131 = arith.constant dense<0.000000e+00> : vector<16x16xf32>
    %222 = tpu.matmul %219, %220, %cst_131 {dimension_numbers = #tpu.dot_dimension_numbers<[1], [1], [0], [0], [0, 0, 1, 0], [], []>} : vector<16x16xf32>, vector<16x16xf32>, vector<16x16xf32> -> vector<16x16xf32>
    %c0_132 = arith.constant 0 : index
    %c0_133 = arith.constant 0 : index
    %223 = vector.load %arg19[%c0_132, %c0_133] : memref<16x16xf32, #tpu.memory_space<vmem>>, vector<16x16xf32>
    tpu.vector_store %arg19[%c0_132, %c0_133], %222 {strides = array<i32>} : memref<16x16xf32, #tpu.memory_space<vmem>>, vector<16x16xf32>,
    %c0_134 = arith.constant 0 : index
    %c0_135 = arith.constant 0 : index
    %224 = vector.load %arg19[%c0_134, %c0_135] : memref<16x16xf32, #tpu.memory_space<vmem>>, vector<16x16xf32>
    %cst_136 = arith.constant dense<0xFF800000> : vector<16xf32>
    %225 = vector.multi_reduction <maximumf>, %224, %cst_136 [1] : vector<16x16xf32> to vector<16xf32>
    %226 = vector.shape_cast %225 : vector<16xf32> to vector<16x1xf32>
    %227 = vector.broadcast %226 : vector<16x1xf32> to vector<16x16xf32>
    %228 = arith.subf %224, %227 : vector<16x16xf32>
    %229 = math.exp %228 : vector<16x16xf32>
    %cst_137 = arith.constant dense<0.000000e+00> : vector<16xf32>
    %230 = vector.multi_reduction <add>, %229, %cst_137 [1] : vector<16x16xf32> to vector<16xf32>
    %231 = vector.shape_cast %230 : vector<16xf32> to vector<16x1xf32>
    %232 = tpu.reciprocal %231 {approx = true} : vector<16x1xf32> -> vector<16x1xf32>
    %233 = vector.broadcast %232 : vector<16x1xf32> to vector<16x16xf32>
    %234 = arith.mulf %229, %233 : vector<16x16xf32>
    %c0_138 = arith.constant 0 : index
    %c0_139 = arith.constant 0 : index
    %235 = vector.load %arg19[%c0_138, %c0_139] : memref<16x16xf32, #tpu.memory_space<vmem>>, vector<16x16xf32>
    tpu.vector_store %arg19[%c0_138, %c0_139], %234 {strides = array<i32>} : memref<16x16xf32, #tpu.memory_space<vmem>>, vector<16x16xf32>,
    %c0_140 = arith.constant 0 : index
    %c0_141 = arith.constant 0 : index
    %236 = vector.load %arg19[%c0_140, %c0_141] : memref<16x16xf32, #tpu.memory_space<vmem>>, vector<16x16xf32>
    %cst_142 = arith.constant dense<0.000000e+00> : vector<16x16xf32>
    %237 = tpu.matmul %236, %221, %cst_142 {dimension_numbers = #tpu.dot_dimension_numbers<[1], [0], [0], [1], [0, 0, 1, 1], [], []>} : vector<16x16xf32>, vector<16x16xf32>, vector<16x16xf32> -> vector<16x16xf32>
    %238 = vector.extract_strided_slice %195 {offsets = [16, 0], sizes = [16, 64], strides = [1, 1]} : vector<64x64xf32> to vector<16x64xf32>
    %cst_143 = arith.constant dense<0.000000e+00> : vector<16x64xf32>
    %239 = tpu.matmul %237, %238, %cst_143 {dimension_numbers = #tpu.dot_dimension_numbers<[1], [0], [0], [1], [0, 0, 1, 1], [], []>} : vector<16x16xf32>, vector<16x64xf32>, vector<16x64xf32> -> vector<16x64xf32>
    %240 = arith.addf %218, %239 : vector<16x64xf32>
    %241 = vector.extract_strided_slice %191 {offsets = [0, 32], sizes = [16, 16], strides = [1, 1]} : vector<16x64xf32> to vector<16x16xf32>
    %242 = vector.extract_strided_slice %192 {offsets = [0, 32], sizes = [16, 16], strides = [1, 1]} : vector<16x64xf32> to vector<16x16xf32>
    %243 = vector.extract_strided_slice %193 {offsets = [0, 32], sizes = [16, 16], strides = [1, 1]} : vector<16x64xf32> to vector<16x16xf32>
    %cst_144 = arith.constant dense<0.000000e+00> : vector<16x16xf32>
    %244 = tpu.matmul %241, %242, %cst_144 {dimension_numbers = #tpu.dot_dimension_numbers<[1], [1], [0], [0], [0, 0, 1, 0], [], []>} : vector<16x16xf32>, vector<16x16xf32>, vector<16x16xf32> -> vector<16x16xf32>
    %c0_145 = arith.constant 0 : index
    %c0_146 = arith.constant 0 : index
    %245 = vector.load %arg19[%c0_145, %c0_146] : memref<16x16xf32, #tpu.memory_space<vmem>>, vector<16x16xf32>
    tpu.vector_store %arg19[%c0_145, %c0_146], %244 {strides = array<i32>} : memref<16x16xf32, #tpu.memory_space<vmem>>, vector<16x16xf32>,
    %c0_147 = arith.constant 0 : index
    %c0_148 = arith.constant 0 : index
    %246 = vector.load %arg19[%c0_147, %c0_148] : memref<16x16xf32, #tpu.memory_space<vmem>>, vector<16x16xf32>
    %cst_149 = arith.constant dense<0xFF800000> : vector<16xf32>
    %247 = vector.multi_reduction <maximumf>, %246, %cst_149 [1] : vector<16x16xf32> to vector<16xf32>
    %248 = vector.shape_cast %247 : vector<16xf32> to vector<16x1xf32>
    %249 = vector.broadcast %248 : vector<16x1xf32> to vector<16x16xf32>
    %250 = arith.subf %246, %249 : vector<16x16xf32>
    %251 = math.exp %250 : vector<16x16xf32>
    %cst_150 = arith.constant dense<0.000000e+00> : vector<16xf32>
    %252 = vector.multi_reduction <add>, %251, %cst_150 [1] : vector<16x16xf32> to vector<16xf32>
    %253 = vector.shape_cast %252 : vector<16xf32> to vector<16x1xf32>
    %254 = tpu.reciprocal %253 {approx = true} : vector<16x1xf32> -> vector<16x1xf32>
    %255 = vector.broadcast %254 : vector<16x1xf32> to vector<16x16xf32>
    %256 = arith.mulf %251, %255 : vector<16x16xf32>
    %c0_151 = arith.constant 0 : index
    %c0_152 = arith.constant 0 : index
    %257 = vector.load %arg19[%c0_151, %c0_152] : memref<16x16xf32, #tpu.memory_space<vmem>>, vector<16x16xf32>
    tpu.vector_store %arg19[%c0_151, %c0_152], %256 {strides = array<i32>} : memref<16x16xf32, #tpu.memory_space<vmem>>, vector<16x16xf32>,
    %c0_153 = arith.constant 0 : index
    %c0_154 = arith.constant 0 : index
    %258 = vector.load %arg19[%c0_153, %c0_154] : memref<16x16xf32, #tpu.memory_space<vmem>>, vector<16x16xf32>
    %cst_155 = arith.constant dense<0.000000e+00> : vector<16x16xf32>
    %259 = tpu.matmul %258, %243, %cst_155 {dimension_numbers = #tpu.dot_dimension_numbers<[1], [0], [0], [1], [0, 0, 1, 1], [], []>} : vector<16x16xf32>, vector<16x16xf32>, vector<16x16xf32> -> vector<16x16xf32>
    %260 = vector.extract_strided_slice %195 {offsets = [32, 0], sizes = [16, 64], strides = [1, 1]} : vector<64x64xf32> to vector<16x64xf32>
    %cst_156 = arith.constant dense<0.000000e+00> : vector<16x64xf32>
    %261 = tpu.matmul %259, %260, %cst_156 {dimension_numbers = #tpu.dot_dimension_numbers<[1], [0], [0], [1], [0, 0, 1, 1], [], []>} : vector<16x16xf32>, vector<16x64xf32>, vector<16x64xf32> -> vector<16x64xf32>
    %262 = arith.addf %240, %261 : vector<16x64xf32>
    %263 = vector.extract_strided_slice %191 {offsets = [0, 48], sizes = [16, 16], strides = [1, 1]} : vector<16x64xf32> to vector<16x16xf32>
    %264 = vector.extract_strided_slice %192 {offsets = [0, 48], sizes = [16, 16], strides = [1, 1]} : vector<16x64xf32> to vector<16x16xf32>
    %265 = vector.extract_strided_slice %193 {offsets = [0, 48], sizes = [16, 16], strides = [1, 1]} : vector<16x64xf32> to vector<16x16xf32>
    %cst_157 = arith.constant dense<0.000000e+00> : vector<16x16xf32>
    %266 = tpu.matmul %263, %264, %cst_157 {dimension_numbers = #tpu.dot_dimension_numbers<[1], [1], [0], [0], [0, 0, 1, 0], [], []>} : vector<16x16xf32>, vector<16x16xf32>, vector<16x16xf32> -> vector<16x16xf32>
    %c0_158 = arith.constant 0 : index
    %c0_159 = arith.constant 0 : index
    %267 = vector.load %arg19[%c0_158, %c0_159] : memref<16x16xf32, #tpu.memory_space<vmem>>, vector<16x16xf32>
    tpu.vector_store %arg19[%c0_158, %c0_159], %266 {strides = array<i32>} : memref<16x16xf32, #tpu.memory_space<vmem>>, vector<16x16xf32>,
    %c0_160 = arith.constant 0 : index
    %c0_161 = arith.constant 0 : index
    %268 = vector.load %arg19[%c0_160, %c0_161] : memref<16x16xf32, #tpu.memory_space<vmem>>, vector<16x16xf32>
    %cst_162 = arith.constant dense<0xFF800000> : vector<16xf32>
    %269 = vector.multi_reduction <maximumf>, %268, %cst_162 [1] : vector<16x16xf32> to vector<16xf32>
    %270 = vector.shape_cast %269 : vector<16xf32> to vector<16x1xf32>
    %271 = vector.broadcast %270 : vector<16x1xf32> to vector<16x16xf32>
    %272 = arith.subf %268, %271 : vector<16x16xf32>
    %273 = math.exp %272 : vector<16x16xf32>
    %cst_163 = arith.constant dense<0.000000e+00> : vector<16xf32>
    %274 = vector.multi_reduction <add>, %273, %cst_163 [1] : vector<16x16xf32> to vector<16xf32>
    %275 = vector.shape_cast %274 : vector<16xf32> to vector<16x1xf32>
    %276 = tpu.reciprocal %275 {approx = true} : vector<16x1xf32> -> vector<16x1xf32>
    %277 = vector.broadcast %276 : vector<16x1xf32> to vector<16x16xf32>
    %278 = arith.mulf %273, %277 : vector<16x16xf32>
    %c0_164 = arith.constant 0 : index
    %c0_165 = arith.constant 0 : index
    %279 = vector.load %arg19[%c0_164, %c0_165] : memref<16x16xf32, #tpu.memory_space<vmem>>, vector<16x16xf32>
    tpu.vector_store %arg19[%c0_164, %c0_165], %278 {strides = array<i32>} : memref<16x16xf32, #tpu.memory_space<vmem>>, vector<16x16xf32>,
    %c0_166 = arith.constant 0 : index
    %c0_167 = arith.constant 0 : index
    %280 = vector.load %arg19[%c0_166, %c0_167] : memref<16x16xf32, #tpu.memory_space<vmem>>, vector<16x16xf32>
    %cst_168 = arith.constant dense<0.000000e+00> : vector<16x16xf32>
    %281 = tpu.matmul %280, %265, %cst_168 {dimension_numbers = #tpu.dot_dimension_numbers<[1], [0], [0], [1], [0, 0, 1, 1], [], []>} : vector<16x16xf32>, vector<16x16xf32>, vector<16x16xf32> -> vector<16x16xf32>
    %282 = vector.extract_strided_slice %195 {offsets = [48, 0], sizes = [16, 64], strides = [1, 1]} : vector<64x64xf32> to vector<16x64xf32>
    %cst_169 = arith.constant dense<0.000000e+00> : vector<16x64xf32>
    %283 = tpu.matmul %281, %282, %cst_169 {dimension_numbers = #tpu.dot_dimension_numbers<[1], [0], [0], [1], [0, 0, 1, 1], [], []>} : vector<16x16xf32>, vector<16x64xf32>, vector<16x64xf32> -> vector<16x64xf32>
    %284 = arith.addf %262, %283 : vector<16x64xf32>
    %c1_170 = arith.constant 1 : index
    %c0_171 = arith.constant 0 : index
    %c0_172 = arith.constant 0 : index
    %285 = vector.load %arg7[%c1_170, %c0_171, %c0_172] : memref<2x1x64xf32, #tpu.memory_space<vmem>>, vector<1x1x64xf32>
    %286 = vector.shape_cast %285 : vector<1x1x64xf32> to vector<1x64xf32>
    %287 = vector.broadcast %286 : vector<1x64xf32> to vector<16x64xf32>
    %288 = arith.addf %284, %287 : vector<16x64xf32>
    %289 = arith.addf %183, %288 : vector<16x64xf32>
    %c1_173 = arith.constant 1 : index
    %c0_174 = arith.constant 0 : index
    %c0_175 = arith.constant 0 : index
    %290 = vector.load %arg8[%c1_173, %c0_174, %c0_175] : memref<2x1x64xf32, #tpu.memory_space<vmem>>, vector<1x1x64xf32>
    %291 = vector.shape_cast %290 : vector<1x1x64xf32> to vector<1x64xf32>
    %c1_176 = arith.constant 1 : index
    %c0_177 = arith.constant 0 : index
    %c0_178 = arith.constant 0 : index
    %292 = vector.load %arg9[%c1_176, %c0_177, %c0_178] : memref<2x1x64xf32, #tpu.memory_space<vmem>>, vector<1x1x64xf32>
    %293 = vector.shape_cast %292 : vector<1x1x64xf32> to vector<1x64xf32>
    %cst_179 = arith.constant dense<0.000000e+00> : vector<16xf32>
    %294 = vector.multi_reduction <add>, %289, %cst_179 [1] : vector<16x64xf32> to vector<16xf32>
    %295 = vector.shape_cast %294 : vector<16xf32> to vector<16x1xf32>
    %cst_180 = arith.constant 6.400000e+01 : f32
    %296 = vector.broadcast %cst_180 : f32 to vector<16x1xf32>
    %297 = arith.divf %295, %296 : vector<16x1xf32>
    %298 = vector.broadcast %297 : vector<16x1xf32> to vector<16x64xf32>
    %299 = arith.subf %289, %298 : vector<16x64xf32>
    %300 = arith.mulf %299, %299 : vector<16x64xf32>
    %cst_181 = arith.constant dense<0.000000e+00> : vector<16xf32>
    %301 = vector.multi_reduction <add>, %300, %cst_181 [1] : vector<16x64xf32> to vector<16xf32>
    %302 = vector.shape_cast %301 : vector<16xf32> to vector<16x1xf32>
    %cst_182 = arith.constant 6.400000e+01 : f32
    %303 = vector.broadcast %cst_182 : f32 to vector<16x1xf32>
    %304 = arith.divf %302, %303 : vector<16x1xf32>
    %cst_183 = arith.constant 9.99999974E-6 : f32
    %305 = vector.broadcast %cst_183 : f32 to vector<16x1xf32>
    %306 = arith.addf %304, %305 : vector<16x1xf32>
    %307 = math.rsqrt %306 : vector<16x1xf32>
    %308 = vector.broadcast %297 : vector<16x1xf32> to vector<16x64xf32>
    %309 = arith.subf %289, %308 : vector<16x64xf32>
    %310 = vector.broadcast %307 : vector<16x1xf32> to vector<16x64xf32>
    %311 = arith.mulf %309, %310 : vector<16x64xf32>
    %312 = vector.broadcast %291 : vector<1x64xf32> to vector<16x64xf32>
    %313 = arith.mulf %311, %312 : vector<16x64xf32>
    %314 = vector.broadcast %293 : vector<1x64xf32> to vector<16x64xf32>
    %315 = arith.addf %313, %314 : vector<16x64xf32>
    %c1_184 = arith.constant 1 : index
    %c0_185 = arith.constant 0 : index
    %c0_186 = arith.constant 0 : index
    %316 = vector.load %arg12[%c1_184, %c0_185, %c0_186] : memref<2x64x128xf32, #tpu.memory_space<vmem>>, vector<1x64x128xf32>
    %317 = vector.shape_cast %316 : vector<1x64x128xf32> to vector<64x128xf32>
    %cst_187 = arith.constant dense<0.000000e+00> : vector<16x128xf32>
    %318 = tpu.matmul %315, %317, %cst_187 {dimension_numbers = #tpu.dot_dimension_numbers<[1], [0], [0], [1], [0, 0, 1, 1], [], []>} : vector<16x64xf32>, vector<64x128xf32>, vector<16x128xf32> -> vector<16x128xf32>
    %c1_188 = arith.constant 1 : index
    %c0_189 = arith.constant 0 : index
    %c0_190 = arith.constant 0 : index
    %319 = vector.load %arg13[%c1_188, %c0_189, %c0_190] : memref<2x1x128xf32, #tpu.memory_space<vmem>>, vector<1x1x128xf32>
    %320 = vector.shape_cast %319 : vector<1x1x128xf32> to vector<1x128xf32>
    %321 = vector.broadcast %320 : vector<1x128xf32> to vector<16x128xf32>
    %322 = arith.addf %318, %321 : vector<16x128xf32>
    %cst_191 = arith.constant 0.000000e+00 : f32
    %323 = vector.broadcast %cst_191 : f32 to vector<16x128xf32>
    %324 = arith.maximumf %322, %323 : vector<16x128xf32>
    %c1_192 = arith.constant 1 : index
    %c0_193 = arith.constant 0 : index
    %c0_194 = arith.constant 0 : index
    %325 = vector.load %arg14[%c1_192, %c0_193, %c0_194] : memref<2x128x64xf32, #tpu.memory_space<vmem>>, vector<1x128x64xf32>
    %326 = vector.shape_cast %325 : vector<1x128x64xf32> to vector<128x64xf32>
    %cst_195 = arith.constant dense<0.000000e+00> : vector<16x64xf32>
    %327 = tpu.matmul %324, %326, %cst_195 {dimension_numbers = #tpu.dot_dimension_numbers<[1], [0], [0], [1], [0, 0, 1, 1], [], []>} : vector<16x128xf32>, vector<128x64xf32>, vector<16x64xf32> -> vector<16x64xf32>
    %c1_196 = arith.constant 1 : index
    %c0_197 = arith.constant 0 : index
    %c0_198 = arith.constant 0 : index
    %328 = vector.load %arg15[%c1_196, %c0_197, %c0_198] : memref<2x1x64xf32, #tpu.memory_space<vmem>>, vector<1x1x64xf32>
    %329 = vector.shape_cast %328 : vector<1x1x64xf32> to vector<1x64xf32>
    %330 = vector.broadcast %329 : vector<1x64xf32> to vector<16x64xf32>
    %331 = arith.addf %327, %330 : vector<16x64xf32>
    %332 = arith.addf %315, %331 : vector<16x64xf32>
    %c1_199 = arith.constant 1 : index
    %c0_200 = arith.constant 0 : index
    %c0_201 = arith.constant 0 : index
    %333 = vector.load %arg10[%c1_199, %c0_200, %c0_201] : memref<2x1x64xf32, #tpu.memory_space<vmem>>, vector<1x1x64xf32>
    %334 = vector.shape_cast %333 : vector<1x1x64xf32> to vector<1x64xf32>
    %c1_202 = arith.constant 1 : index
    %c0_203 = arith.constant 0 : index
    %c0_204 = arith.constant 0 : index
    %335 = vector.load %arg11[%c1_202, %c0_203, %c0_204] : memref<2x1x64xf32, #tpu.memory_space<vmem>>, vector<1x1x64xf32>
    %336 = vector.shape_cast %335 : vector<1x1x64xf32> to vector<1x64xf32>
    %cst_205 = arith.constant dense<0.000000e+00> : vector<16xf32>
    %337 = vector.multi_reduction <add>, %332, %cst_205 [1] : vector<16x64xf32> to vector<16xf32>
    %338 = vector.shape_cast %337 : vector<16xf32> to vector<16x1xf32>
    %cst_206 = arith.constant 6.400000e+01 : f32
    %339 = vector.broadcast %cst_206 : f32 to vector<16x1xf32>
    %340 = arith.divf %338, %339 : vector<16x1xf32>
    %341 = vector.broadcast %340 : vector<16x1xf32> to vector<16x64xf32>
    %342 = arith.subf %332, %341 : vector<16x64xf32>
    %343 = arith.mulf %342, %342 : vector<16x64xf32>
    %cst_207 = arith.constant dense<0.000000e+00> : vector<16xf32>
    %344 = vector.multi_reduction <add>, %343, %cst_207 [1] : vector<16x64xf32> to vector<16xf32>
    %345 = vector.shape_cast %344 : vector<16xf32> to vector<16x1xf32>
    %cst_208 = arith.constant 6.400000e+01 : f32
    %346 = vector.broadcast %cst_208 : f32 to vector<16x1xf32>
    %347 = arith.divf %345, %346 : vector<16x1xf32>
    %cst_209 = arith.constant 9.99999974E-6 : f32
    %348 = vector.broadcast %cst_209 : f32 to vector<16x1xf32>
    %349 = arith.addf %347, %348 : vector<16x1xf32>
    %350 = math.rsqrt %349 : vector<16x1xf32>
    %351 = vector.broadcast %340 : vector<16x1xf32> to vector<16x64xf32>
    %352 = arith.subf %332, %351 : vector<16x64xf32>
    %353 = vector.broadcast %350 : vector<16x1xf32> to vector<16x64xf32>
    %354 = arith.mulf %352, %353 : vector<16x64xf32>
    %355 = vector.broadcast %334 : vector<1x64xf32> to vector<16x64xf32>
    %356 = arith.mulf %354, %355 : vector<16x64xf32>
    %357 = vector.broadcast %336 : vector<1x64xf32> to vector<16x64xf32>
    %358 = arith.addf %356, %357 : vector<16x64xf32>
    %359 = vector.extract_strided_slice %358 {offsets = [0, 0], sizes = [1, 64], strides = [1, 1]} : vector<16x64xf32> to vector<1x64xf32>
    %c0_210 = arith.constant 0 : index
    %c0_211 = arith.constant 0 : index
    %360 = vector.load %arg16[%c0_210, %c0_211] : memref<1x64xf32, #tpu.memory_space<vmem>>, vector<1x64xf32>
    %361 = arith.mulf %359, %360 : vector<1x64xf32>
    %cst_212 = arith.constant dense<0.000000e+00> : vector<1xf32>
    %362 = vector.multi_reduction <add>, %361, %cst_212 [1] : vector<1x64xf32> to vector<1xf32>
    %363 = vector.shape_cast %362 : vector<1xf32> to vector<1x1xf32>
    %c0_213 = arith.constant 0 : index
    %c0_214 = arith.constant 0 : index
    %364 = vector.load %arg17[%c0_213, %c0_214] : memref<1x1xf32, #tpu.memory_space<vmem>>, vector<1x1xf32>
    %365 = arith.addf %363, %364 : vector<1x1xf32>
    %c0_215 = arith.constant 0 : index
    %c0_216 = arith.constant 0 : index
    %c0_217 = arith.constant 0 : index
    %366 = vector.load %arg18[%c0_215, %c0_216, %c0_217] : memref<1x1x1xf32, #tpu.memory_space<vmem>>, vector<1x1x1xf32>
    %367 = vector.shape_cast %366 : vector<1x1x1xf32> to vector<1x1xf32>
    %368 = vector.shape_cast %365 : vector<1x1xf32> to vector<1x1x1xf32>
    tpu.vector_store %arg18[%c0_215, %c0_216, %c0_217], %368 {strides = array<i32>} : memref<1x1x1xf32, #tpu.memory_space<vmem>>, vector<1x1x1xf32>,
    return
  }
  func.func @transform_0(%arg0: i32) -> (i32, i32, i32) {
    %c0_i32 = arith.constant 0 : i32
    %c0_i32_0 = arith.constant 0 : i32
    %c0_i32_1 = arith.constant 0 : i32
    return %arg0, %c0_i32, %c0_i32_0 : i32, i32, i32
  }
  func.func @transform_1(%arg0: i32) -> (i32, i32) {
    %c0_i32 = arith.constant 0 : i32
    %c0_i32_0 = arith.constant 0 : i32
    %c0_i32_1 = arith.constant 0 : i32
    return %c0_i32, %c0_i32_0 : i32, i32
  }
  func.func @transform_2(%arg0: i32) -> (i32, i32) {
    %c0_i32 = arith.constant 0 : i32
    %c0_i32_0 = arith.constant 0 : i32
    %c0_i32_1 = arith.constant 0 : i32
    return %c0_i32, %c0_i32_0 : i32, i32
  }
  func.func @transform_3(%arg0: i32) -> (i32, i32, i32) {
    %c0_i32 = arith.constant 0 : i32
    %c0_i32_0 = arith.constant 0 : i32
    %c0_i32_1 = arith.constant 0 : i32
    %c0_i32_2 = arith.constant 0 : i32
    return %c0_i32, %c0_i32_0, %c0_i32_1 : i32, i32, i32
  }
  func.func @transform_4(%arg0: i32) -> (i32, i32, i32) {
    %c0_i32 = arith.constant 0 : i32
    %c0_i32_0 = arith.constant 0 : i32
    %c0_i32_1 = arith.constant 0 : i32
    %c0_i32_2 = arith.constant 0 : i32
    return %c0_i32, %c0_i32_0, %c0_i32_1 : i32, i32, i32
  }
  func.func @transform_5(%arg0: i32) -> (i32, i32, i32) {
    %c0_i32 = arith.constant 0 : i32
    %c0_i32_0 = arith.constant 0 : i32
    %c0_i32_1 = arith.constant 0 : i32
    %c0_i32_2 = arith.constant 0 : i32
    return %c0_i32, %c0_i32_0, %c0_i32_1 : i32, i32, i32
  }
  func.func @transform_6(%arg0: i32) -> (i32, i32, i32) {
    %c0_i32 = arith.constant 0 : i32
    %c0_i32_0 = arith.constant 0 : i32
    %c0_i32_1 = arith.constant 0 : i32
    %c0_i32_2 = arith.constant 0 : i32
    return %c0_i32, %c0_i32_0, %c0_i32_1 : i32, i32, i32
  }
  func.func @transform_7(%arg0: i32) -> (i32, i32, i32) {
    %c0_i32 = arith.constant 0 : i32
    %c0_i32_0 = arith.constant 0 : i32
    %c0_i32_1 = arith.constant 0 : i32
    %c0_i32_2 = arith.constant 0 : i32
    return %c0_i32, %c0_i32_0, %c0_i32_1 : i32, i32, i32
  }
  func.func @transform_8(%arg0: i32) -> (i32, i32, i32) {
    %c0_i32 = arith.constant 0 : i32
    %c0_i32_0 = arith.constant 0 : i32
    %c0_i32_1 = arith.constant 0 : i32
    %c0_i32_2 = arith.constant 0 : i32
    return %c0_i32, %c0_i32_0, %c0_i32_1 : i32, i32, i32
  }
  func.func @transform_9(%arg0: i32) -> (i32, i32, i32) {
    %c0_i32 = arith.constant 0 : i32
    %c0_i32_0 = arith.constant 0 : i32
    %c0_i32_1 = arith.constant 0 : i32
    %c0_i32_2 = arith.constant 0 : i32
    return %c0_i32, %c0_i32_0, %c0_i32_1 : i32, i32, i32
  }
  func.func @transform_10(%arg0: i32) -> (i32, i32, i32) {
    %c0_i32 = arith.constant 0 : i32
    %c0_i32_0 = arith.constant 0 : i32
    %c0_i32_1 = arith.constant 0 : i32
    %c0_i32_2 = arith.constant 0 : i32
    return %c0_i32, %c0_i32_0, %c0_i32_1 : i32, i32, i32
  }
  func.func @transform_11(%arg0: i32) -> (i32, i32, i32) {
    %c0_i32 = arith.constant 0 : i32
    %c0_i32_0 = arith.constant 0 : i32
    %c0_i32_1 = arith.constant 0 : i32
    %c0_i32_2 = arith.constant 0 : i32
    return %c0_i32, %c0_i32_0, %c0_i32_1 : i32, i32, i32
  }
  func.func @transform_12(%arg0: i32) -> (i32, i32, i32) {
    %c0_i32 = arith.constant 0 : i32
    %c0_i32_0 = arith.constant 0 : i32
    %c0_i32_1 = arith.constant 0 : i32
    %c0_i32_2 = arith.constant 0 : i32
    return %c0_i32, %c0_i32_0, %c0_i32_1 : i32, i32, i32
  }
  func.func @transform_13(%arg0: i32) -> (i32, i32, i32) {
    %c0_i32 = arith.constant 0 : i32
    %c0_i32_0 = arith.constant 0 : i32
    %c0_i32_1 = arith.constant 0 : i32
    %c0_i32_2 = arith.constant 0 : i32
    return %c0_i32, %c0_i32_0, %c0_i32_1 : i32, i32, i32
  }
  func.func @transform_14(%arg0: i32) -> (i32, i32, i32) {
    %c0_i32 = arith.constant 0 : i32
    %c0_i32_0 = arith.constant 0 : i32
    %c0_i32_1 = arith.constant 0 : i32
    %c0_i32_2 = arith.constant 0 : i32
    return %c0_i32, %c0_i32_0, %c0_i32_1 : i32, i32, i32
  }
  func.func @transform_15(%arg0: i32) -> (i32, i32) {
    %c0_i32 = arith.constant 0 : i32
    %c0_i32_0 = arith.constant 0 : i32
    %c0_i32_1 = arith.constant 0 : i32
    return %c0_i32, %c0_i32_0 : i32, i32
  }
  func.func @transform_16(%arg0: i32) -> (i32, i32) {
    %c0_i32 = arith.constant 0 : i32
    %c0_i32_0 = arith.constant 0 : i32
    %c0_i32_1 = arith.constant 0 : i32
    return %c0_i32, %c0_i32_0 : i32, i32
  }
  func.func @transform_17(%arg0: i32) -> (i32, i32, i32) {
    %c0_i32 = arith.constant 0 : i32
    %c0_i32_0 = arith.constant 0 : i32
    %c0_i32_1 = arith.constant 0 : i32
    return %arg0, %c0_i32, %c0_i32_0 : i32, i32, i32
  }
}

</mosaic_0001>

<llo_original>
// kernel: tpu_custom_call.1
$region0: #{tpu_custom_call.1}
  #allocation0 [shape = 'u32[]', space=smem, size = 0x4, offset = 0x4, fixed_abs, tag = 'smem constant byte address 0x4 - core index']
  #allocation1 [shape = 'u32[72,128]{1,0:T(1,128)}', space=vmem, size = 0x9000, scoped, tag = 'internal scratch']
  #allocation2 [shape = 'f32[16,16]{1,0:T(8,128)}', space=vmem, size = 0x2000, scoped, tag = 'scratch operand']
  #allocation3 [shape = 'f32[1,1]{1,0:T(1,128)S(1)}', space=vmem, size = 0x200, scoped, tag = 'scoped memory for tpu_custom_call.1']
  %s0 = inlined_call_operand.vmem [shape: f32[2,16,1], index: 0, kind: input, shape index: {}]
  %s1 = inlined_call_operand.vmem [shape: f32[1,64], index: 1, kind: input, shape index: {}]
  %s2 = inlined_call_operand.vmem [shape: f32[1,64], index: 2, kind: input, shape index: {}]
  %s3 = inlined_call_operand.vmem [shape: f32[2,64,192], index: 3, kind: input, shape index: {}]
  %s4 = inlined_call_operand.vmem [shape: f32[2,1,192], index: 4, kind: input, shape index: {}]
  %s5 = inlined_call_operand.vmem [shape: f32[2,64,64], index: 5, kind: input, shape index: {}]
  %s6 = inlined_call_operand.vmem [shape: f32[2,1,64], index: 6, kind: input, shape index: {}]
  %s7 = inlined_call_operand.vmem [shape: f32[2,1,64], index: 7, kind: input, shape index: {}]
  %s8 = inlined_call_operand.vmem [shape: f32[2,1,64], index: 8, kind: input, shape index: {}]
  %s9 = inlined_call_operand.vmem [shape: f32[2,1,64], index: 9, kind: input, shape index: {}]
  %s10 = inlined_call_operand.vmem [shape: f32[2,1,64], index: 10, kind: input, shape index: {}]
  %s11 = inlined_call_operand.hbm [shape: f32[2,64,128], index: 11, kind: input, shape index: {}]
  %s12 = inlined_call_operand.vmem [shape: f32[2,1,128], index: 12, kind: input, shape index: {}]
  %s13 = inlined_call_operand.vmem [shape: f32[2,128,64], index: 13, kind: input, shape index: {}]
  %s14 = inlined_call_operand.vmem [shape: f32[2,1,64], index: 14, kind: input, shape index: {}]
  %s15 = inlined_call_operand.vmem [shape: f32[1,64], index: 15, kind: input, shape index: {}]
  %s16 = inlined_call_operand.<no memory space> [shape: f32[1,1], index: 16, kind: input, shape index: {}]
  %s17 = inlined_call_operand.vmem [shape: f32[2,1,1], index: 17, kind: output, shape index: {}]
  %s18 = sld [smem:[#allocation0]]
  $region105: #{tpu_custom_call.1} parent=0
    _
  %s20 = ssub.s32 1, %s18
  %s21 = scalar_select 0, %s20, %s18
  %v22 = vstv %s16
  %23 = vst [vmem:[#allocation3] sm:$0x1] %v22
  $region1: #{tpu_custom_call.1} parent=0
    #allocation4 [shape = 'u8[65536]{0}', space=vmem, size = 0x10000, scoped, tag = 'input window, operand 11, single buffered']
    #allocation5 [shape = 's32[2]{0}', space=sflag, size = 0x8, scoped, tag = 'scoped memory for tpu_custom_call.1']
    %24 = vsyncpa [#allocation5], 0
    loop: start=0, step=1, limit=4
    $region2: #{tpu_custom_call.1} parent=1 // loop_pre_header
      _
    $region3: #{tpu_custom_call.1} parent=1 // loop_header
      %s26 = sphi 0, %s30
      %p27 = scmp.ge.s32.totalorder %s26, 4
      %s36 = sphi 0, %s38
      %s39 = sphi 0, %s36
      %s40 = sphi 0, %s39
      %s56 = sphi 0, %s40
      %s60 = sphi 0, %s60
      %s62 = sphi 0, %s60
      %s63 = sphi 0, %s62
      %s77 = sphi 0, %s63
      %s81 = sphi 0, %s81
      %s83 = sphi 0, %s81
      %s84 = sphi 0, %s83
      %s98 = sphi 0, %s84
      %s102 = sphi 0, %s102
      %s104 = sphi 0, %s102
      %s105 = sphi 0, %s104
      %s119 = sphi 0, %s105
      %s123 = sphi 0, %s123
      %s125 = sphi 0, %s123
      %s126 = sphi 0, %s125
      %s140 = sphi 0, %s126
      %s144 = sphi 0, %s144
      %s146 = sphi 0, %s144
      %s147 = sphi 0, %s146
      %s161 = sphi 0, %s147
      %s165 = sphi 0, %s165
      %s167 = sphi 0, %s165
      %s168 = sphi 0, %s167
      %s182 = sphi 0, %s168
      %s186 = sphi 0, %s186
      %s188 = sphi 0, %s186
      %s189 = sphi 0, %s188
      %s203 = sphi 0, %s189
      %s207 = sphi 0, %s207
      %s209 = sphi 0, %s207
      %s210 = sphi 0, %s209
      %s224 = sphi 0, %s210
      %s228 = sphi 0, %s228
      %s230 = sphi 0, %s228
      %s231 = sphi 0, %s230
      %s245 = sphi 0, %s231
      %s249 = sphi 0, %s249
      %s251 = sphi 0, %s249
      %s252 = sphi 0, %s251
      %s266 = sphi 0, %s252
      %s270 = sphi 0, %s270
      %s272 = sphi 0, %s270
      %s273 = sphi 0, %s272
      %s287 = sphi 0, %s273
      %s291 = sphi 0, %s291
      %s293 = sphi 0, %s291
      %s294 = sphi 0, %s293
      %s308 = sphi 0, %s294
      %s312 = sphi 0, %s312
      %s314 = sphi 0, %s312
      %s315 = sphi 0, %s314
      %s329 = sphi 0, %s315
      %s333 = sphi 0, %s333
      %s335 = sphi 0, %s333
      %s336 = sphi 0, %s335
      %s350 = sphi 0, %s336
      %s354 = sphi 0, %s354
      %s356 = sphi 0, %s354
      %s357 = sphi 0, %s356
      %s371 = sphi 0, %s357
      %s375 = sphi 0, %s375
      %s377 = sphi 0, %s375
      %s378 = sphi 0, %s377
      %s392 = sphi 0, %s378
      %s398 = sphi 0, %s400
      %s401 = sphi 0, %s398
      %s402 = sphi 0, %s401
      %s418 = sphi 0, %s402
    $region4: #{tpu_custom_call.1} parent=1 // loop_header_branch
      %29 = sbr.rel (%p27) target = $region8
    $region5: #{tpu_custom_call.1} parent=1 // loop_body
      %s31 = ssub.s32 %s26, 1
      %s32 = ssub.s32 %s26, 2
      %s33 = sadd.s32 %s26, 1
      %s34 = ssub.s32 %s26, %s33
      %p35 = scmp.eq.s32.totalorder %s34, 0
      %s37 = sadd.s32 %s36, 1
      %s38 = scalar_select %p35, %s36, %s37
      %p41 = pneg %p35
      %p42 = scmp.eq.s32.totalorder %s26, 1
      %p43 = por %p41, %p42
      %p44 = scmp.ne.s32.totalorder %s36, %s39
      %p45 = scmp.eq.s32.totalorder %s26, 0
      %p46 = por %p44, %p45
      %p47 = scmp.ne.s32.totalorder %s36, %s39
      %p48 = scmp.eq.s32.totalorder %s31, 1
      %p49 = por %p47, %p48
      %p50 = scmp.ne.s32.totalorder %s39, %s40
      %p51 = scmp.eq.s32.totalorder %s31, 0
      %p52 = por %p50, %p51
      %p53 = scmp.ne.s32.totalorder %s39, %s40
      %p54 = scmp.eq.s32.totalorder %s32, 1
      %p55 = por %p53, %p54
      %p57 = scmp.ne.s32.totalorder %s40, %s56
      %p58 = scmp.eq.s32.totalorder %s32, 0
      %p59 = por %p57, %p58
      %s61 = sadd.s32 %s60, 1
      %p64 = scmp.eq.s32.totalorder %s26, 1
      %p65 = scmp.ne.s32.totalorder %s60, %s62
      %p66 = scmp.eq.s32.totalorder %s26, 0
      %p67 = por %p65, %p66
      %p68 = scmp.ne.s32.totalorder %s60, %s62
      %p69 = scmp.eq.s32.totalorder %s31, 1
      %p70 = por %p68, %p69
      %p71 = scmp.ne.s32.totalorder %s62, %s63
      %p72 = scmp.eq.s32.totalorder %s31, 0
      %p73 = por %p71, %p72
      %p74 = scmp.ne.s32.totalorder %s62, %s63
      %p75 = scmp.eq.s32.totalorder %s32, 1
      %p76 = por %p74, %p75
      %p78 = scmp.ne.s32.totalorder %s63, %s77
      %p79 = scmp.eq.s32.totalorder %s32, 0
      %p80 = por %p78, %p79
      %s82 = sadd.s32 %s81, 1
      %p85 = scmp.eq.s32.totalorder %s26, 1
      %p86 = scmp.ne.s32.totalorder %s81, %s83
      %p87 = scmp.eq.s32.totalorder %s26, 0
      %p88 = por %p86, %p87
      %p89 = scmp.ne.s32.totalorder %s81, %s83
      %p90 = scmp.eq.s32.totalorder %s31, 1
      %p91 = por %p89, %p90
      %p92 = scmp.ne.s32.totalorder %s83, %s84
      %p93 = scmp.eq.s32.totalorder %s31, 0
      %p94 = por %p92, %p93
      %p95 = scmp.ne.s32.totalorder %s83, %s84
      %p96 = scmp.eq.s32.totalorder %s32, 1
      %p97 = por %p95, %p96
      %p99 = scmp.ne.s32.totalorder %s84, %s98
      %p100 = scmp.eq.s32.totalorder %s32, 0
      %p101 = por %p99, %p100
      %s103 = sadd.s32 %s102, 1
      %p106 = scmp.eq.s32.totalorder %s26, 1
      %p107 = scmp.ne.s32.totalorder %s102, %s104
      %p108 = scmp.eq.s32.totalorder %s26, 0
      %p109 = por %p107, %p108
      %p110 = scmp.ne.s32.totalorder %s102, %s104
      %p111 = scmp.eq.s32.totalorder %s31, 1
      %p112 = por %p110, %p111
      %p113 = scmp.ne.s32.totalorder %s104, %s105
      %p114 = scmp.eq.s32.totalorder %s31, 0
      %p115 = por %p113, %p114
      %p116 = scmp.ne.s32.totalorder %s104, %s105
      %p117 = scmp.eq.s32.totalorder %s32, 1
      %p118 = por %p116, %p117
      %p120 = scmp.ne.s32.totalorder %s105, %s119
      %p121 = scmp.eq.s32.totalorder %s32, 0
      %p122 = por %p120, %p121
      %s124 = sadd.s32 %s123, 1
      %p127 = scmp.eq.s32.totalorder %s26, 1
      %p128 = scmp.ne.s32.totalorder %s123, %s125
      %p129 = scmp.eq.s32.totalorder %s26, 0
      %p130 = por %p128, %p129
      %p131 = scmp.ne.s32.totalorder %s123, %s125
      %p132 = scmp.eq.s32.totalorder %s31, 1
      %p133 = por %p131, %p132
      %p134 = scmp.ne.s32.totalorder %s125, %s126
      %p135 = scmp.eq.s32.totalorder %s31, 0
      %p136 = por %p134, %p135
      %p137 = scmp.ne.s32.totalorder %s125, %s126
      %p138 = scmp.eq.s32.totalorder %s32, 1
      %p139 = por %p137, %p138
      %p141 = scmp.ne.s32.totalorder %s126, %s140
      %p142 = scmp.eq.s32.totalorder %s32, 0
      %p143 = por %p141, %p142
      %s145 = sadd.s32 %s144, 1
      %p148 = scmp.eq.s32.totalorder %s26, 1
      %p149 = scmp.ne.s32.totalorder %s144, %s146
      %p150 = scmp.eq.s32.totalorder %s26, 0
      %p151 = por %p149, %p150
      %p152 = scmp.ne.s32.totalorder %s144, %s146
      %p153 = scmp.eq.s32.totalorder %s31, 1
      %p154 = por %p152, %p153
      %p155 = scmp.ne.s32.totalorder %s146, %s147
      %p156 = scmp.eq.s32.totalorder %s31, 0
      %p157 = por %p155, %p156
      %p158 = scmp.ne.s32.totalorder %s146, %s147
      %p159 = scmp.eq.s32.totalorder %s32, 1
      %p160 = por %p158, %p159
      %p162 = scmp.ne.s32.totalorder %s147, %s161
      %p163 = scmp.eq.s32.totalorder %s32, 0
      %p164 = por %p162, %p163
      %s166 = sadd.s32 %s165, 1
      %p169 = scmp.eq.s32.totalorder %s26, 1
      %p170 = scmp.ne.s32.totalorder %s165, %s167
      %p171 = scmp.eq.s32.totalorder %s26, 0
      %p172 = por %p170, %p171
      %p173 = scmp.ne.s32.totalorder %s165, %s167
      %p174 = scmp.eq.s32.totalorder %s31, 1
      %p175 = por %p173, %p174
      %p176 = scmp.ne.s32.totalorder %s167, %s168
      %p177 = scmp.eq.s32.totalorder %s31, 0
      %p178 = por %p176, %p177
      %p179 = scmp.ne.s32.totalorder %s167, %s168
      %p180 = scmp.eq.s32.totalorder %s32, 1
      %p181 = por %p179, %p180
      %p183 = scmp.ne.s32.totalorder %s168, %s182
      %p184 = scmp.eq.s32.totalorder %s32, 0
      %p185 = por %p183, %p184
      %s187 = sadd.s32 %s186, 1
      %p190 = scmp.eq.s32.totalorder %s26, 1
      %p191 = scmp.ne.s32.totalorder %s186, %s188
      %p192 = scmp.eq.s32.totalorder %s26, 0
      %p193 = por %p191, %p192
      %p194 = scmp.ne.s32.totalorder %s186, %s188
      %p195 = scmp.eq.s32.totalorder %s31, 1
      %p196 = por %p194, %p195
      %p197 = scmp.ne.s32.totalorder %s188, %s189
      %p198 = scmp.eq.s32.totalorder %s31, 0
      %p199 = por %p197, %p198
      %p200 = scmp.ne.s32.totalorder %s188, %s189
      %p201 = scmp.eq.s32.totalorder %s32, 1
      %p202 = por %p200, %p201
      %p204 = scmp.ne.s32.totalorder %s189, %s203
      %p205 = scmp.eq.s32.totalorder %s32, 0
      %p206 = por %p204, %p205
      %s208 = sadd.s32 %s207, 1
      %p211 = scmp.eq.s32.totalorder %s26, 1
      %p212 = scmp.ne.s32.totalorder %s207, %s209
      %p213 = scmp.eq.s32.totalorder %s26, 0
      %p214 = por %p212, %p213
      %p215 = scmp.ne.s32.totalorder %s207, %s209
      %p216 = scmp.eq.s32.totalorder %s31, 1
      %p217 = por %p215, %p216
      %p218 = scmp.ne.s32.totalorder %s209, %s210
      %p219 = scmp.eq.s32.totalorder %s31, 0
      %p220 = por %p218, %p219
      %p221 = scmp.ne.s32.totalorder %s209, %s210
      %p222 = scmp.eq.s32.totalorder %s32, 1
      %p223 = por %p221, %p222
      %p225 = scmp.ne.s32.totalorder %s210, %s224
      %p226 = scmp.eq.s32.totalorder %s32, 0
      %p227 = por %p225, %p226
      %s229 = sadd.s32 %s228, 1
      %p232 = scmp.eq.s32.totalorder %s26, 1
      %p233 = scmp.ne.s32.totalorder %s228, %s230
      %p234 = scmp.eq.s32.totalorder %s26, 0
      %p235 = por %p233, %p234
      %p236 = scmp.ne.s32.totalorder %s228, %s230
      %p237 = scmp.eq.s32.totalorder %s31, 1
      %p238 = por %p236, %p237
      %p239 = scmp.ne.s32.totalorder %s230, %s231
      %p240 = scmp.eq.s32.totalorder %s31, 0
      %p241 = por %p239, %p240
      %p242 = scmp.ne.s32.totalorder %s230, %s231
      %p243 = scmp.eq.s32.totalorder %s32, 1
      %p244 = por %p242, %p243
      %p246 = scmp.ne.s32.totalorder %s231, %s245
      %p247 = scmp.eq.s32.totalorder %s32, 0
      %p248 = por %p246, %p247
      %s250 = sadd.s32 %s249, 1
      %p253 = scmp.eq.s32.totalorder %s26, 1
      %p254 = scmp.ne.s32.totalorder %s249, %s251
      %p255 = scmp.eq.s32.totalorder %s26, 0
      %p256 = por %p254, %p255
      %p257 = scmp.ne.s32.totalorder %s249, %s251
      %p258 = scmp.eq.s32.totalorder %s31, 1
      %p259 = por %p257, %p258
      %p260 = scmp.ne.s32.totalorder %s251, %s252
      %p261 = scmp.eq.s32.totalorder %s31, 0
      %p262 = por %p260, %p261
      %p263 = scmp.ne.s32.totalorder %s251, %s252
      %p264 = scmp.eq.s32.totalorder %s32, 1
      %p265 = por %p263, %p264
      %p267 = scmp.ne.s32.totalorder %s252, %s266
      %p268 = scmp.eq.s32.totalorder %s32, 0
      %p269 = por %p267, %p268
      %s271 = sadd.s32 %s270, 1
      %p274 = scmp.eq.s32.totalorder %s26, 1
      %p275 = scmp.ne.s32.totalorder %s270, %s272
      %p276 = scmp.eq.s32.totalorder %s26, 0
      %p277 = por %p275, %p276
      %p278 = scmp.ne.s32.totalorder %s270, %s272
      %p279 = scmp.eq.s32.totalorder %s31, 1
      %p280 = por %p278, %p279
      %p281 = scmp.ne.s32.totalorder %s272, %s273
      %p282 = scmp.eq.s32.totalorder %s31, 0
      %p283 = por %p281, %p282
      %p284 = scmp.ne.s32.totalorder %s272, %s273
      %p285 = scmp.eq.s32.totalorder %s32, 1
      %p286 = por %p284, %p285
      %p288 = scmp.ne.s32.totalorder %s273, %s287
      %p289 = scmp.eq.s32.totalorder %s32, 0
      %p290 = por %p288, %p289
      %s292 = sadd.s32 %s291, 1
      %p295 = scmp.eq.s32.totalorder %s26, 1
      %p296 = scmp.ne.s32.totalorder %s291, %s293
      %p297 = scmp.eq.s32.totalorder %s26, 0
      %p298 = por %p296, %p297
      %p299 = scmp.ne.s32.totalorder %s291, %s293
      %p300 = scmp.eq.s32.totalorder %s31, 1
      %p301 = por %p299, %p300
      %p302 = scmp.ne.s32.totalorder %s293, %s294
      %p303 = scmp.eq.s32.totalorder %s31, 0
      %p304 = por %p302, %p303
      %p305 = scmp.ne.s32.totalorder %s293, %s294
      %p306 = scmp.eq.s32.totalorder %s32, 1
      %p307 = por %p305, %p306
      %p309 = scmp.ne.s32.totalorder %s294, %s308
      %p310 = scmp.eq.s32.totalorder %s32, 0
      %p311 = por %p309, %p310
      %s313 = sadd.s32 %s312, 1
      %p316 = scmp.eq.s32.totalorder %s26, 1
      %p317 = scmp.ne.s32.totalorder %s312, %s314
      %p318 = scmp.eq.s32.totalorder %s26, 0
      %p319 = por %p317, %p318
      %p320 = scmp.ne.s32.totalorder %s312, %s314
      %p321 = scmp.eq.s32.totalorder %s31, 1
      %p322 = por %p320, %p321
      %p323 = scmp.ne.s32.totalorder %s314, %s315
      %p324 = scmp.eq.s32.totalorder %s31, 0
      %p325 = por %p323, %p324
      %p326 = scmp.ne.s32.totalorder %s314, %s315
      %p327 = scmp.eq.s32.totalorder %s32, 1
      %p328 = por %p326, %p327
      %p330 = scmp.ne.s32.totalorder %s315, %s329
      %p331 = scmp.eq.s32.totalorder %s32, 0
      %p332 = por %p330, %p331
      %s334 = sadd.s32 %s333, 1
      %p337 = scmp.eq.s32.totalorder %s26, 1
      %p338 = scmp.ne.s32.totalorder %s333, %s335
      %p339 = scmp.eq.s32.totalorder %s26, 0
      %p340 = por %p338, %p339
      %p341 = scmp.ne.s32.totalorder %s333, %s335
      %p342 = scmp.eq.s32.totalorder %s31, 1
      %p343 = por %p341, %p342
      %p344 = scmp.ne.s32.totalorder %s335, %s336
      %p345 = scmp.eq.s32.totalorder %s31, 0
      %p346 = por %p344, %p345
      %p347 = scmp.ne.s32.totalorder %s335, %s336
      %p348 = scmp.eq.s32.totalorder %s32, 1
      %p349 = por %p347, %p348
      %p351 = scmp.ne.s32.totalorder %s336, %s350
      %p352 = scmp.eq.s32.totalorder %s32, 0
      %p353 = por %p351, %p352
      %s355 = sadd.s32 %s354, 1
      %p358 = scmp.eq.s32.totalorder %s26, 1
      %p359 = scmp.ne.s32.totalorder %s354, %s356
      %p360 = scmp.eq.s32.totalorder %s26, 0
      %p361 = por %p359, %p360
      %p362 = scmp.ne.s32.totalorder %s354, %s356
      %p363 = scmp.eq.s32.totalorder %s31, 1
      %p364 = por %p362, %p363
      %p365 = scmp.ne.s32.totalorder %s356, %s357
      %p366 = scmp.eq.s32.totalorder %s31, 0
      %p367 = por %p365, %p366
      %p368 = scmp.ne.s32.totalorder %s356, %s357
      %p369 = scmp.eq.s32.totalorder %s32, 1
      %p370 = por %p368, %p369
      %p372 = scmp.ne.s32.totalorder %s357, %s371
      %p373 = scmp.eq.s32.totalorder %s32, 0
      %p374 = por %p372, %p373
      %s376 = sadd.s32 %s375, 1
      %p379 = scmp.eq.s32.totalorder %s26, 1
      %p380 = scmp.ne.s32.totalorder %s375, %s377
      %p381 = scmp.eq.s32.totalorder %s26, 0
      %p382 = por %p380, %p381
      %p383 = scmp.ne.s32.totalorder %s375, %s377
      %p384 = scmp.eq.s32.totalorder %s31, 1
      %p385 = por %p383, %p384
      %p386 = scmp.ne.s32.totalorder %s377, %s378
      %p387 = scmp.eq.s32.totalorder %s31, 0
      %p388 = por %p386, %p387
      %p389 = scmp.ne.s32.totalorder %s377, %s378
      %p390 = scmp.eq.s32.totalorder %s32, 1
      %p391 = por %p389, %p390
      %p393 = scmp.ne.s32.totalorder %s378, %s392
      %p394 = scmp.eq.s32.totalorder %s32, 0
      %p395 = por %p393, %p394
      %s396 = ssub.s32 %s26, %s33
      %p397 = scmp.eq.s32.totalorder %s396, 0
      %s399 = sadd.s32 %s398, 1
      %s400 = scalar_select %p397, %s398, %s399
      %p403 = pneg %p397
      %p404 = scmp.eq.s32.totalorder %s26, 1
      %p405 = por %p403, %p404
      %p406 = scmp.ne.s32.totalorder %s398, %s401
      %p407 = scmp.eq.s32.totalorder %s26, 0
      %p408 = por %p406, %p407
      %p409 = scmp.ne.s32.totalorder %s398, %s401
      %p410 = scmp.eq.s32.totalorder %s31, 1
      %p411 = por %p409, %p410
      %p412 = scmp.ne.s32.totalorder %s401, %s402
      %p413 = scmp.eq.s32.totalorder %s31, 0
      %p414 = por %p412, %p413
      %p415 = scmp.ne.s32.totalorder %s401, %s402
      %p416 = scmp.eq.s32.totalorder %s32, 1
      %p417 = por %p415, %p416
      %p419 = scmp.ne.s32.totalorder %s402, %s418
      %p420 = scmp.eq.s32.totalorder %s32, 0
      %p421 = por %p419, %p420
      %p422 = scmp.le.s32.totalorder 1, %s26
      %p423 = scmp.lt.s32.totalorder %s26, 3
      %p424 = pnand %p422, %p423
      %p425 = pneg %p424
      // Predicated region
      $region9: #{tpu_custom_call.1} parent=5 // pred_check
        _
      $region10: #{tpu_custom_call.1} parent=5 // pred_check_branch
        %427 = sbr.rel (%p424) target = $region12
      $region11: #{tpu_custom_call.1} parent=5 // pred_region
        %s428 = ssub.s32 %s26, 1
        // Predicated region
        $region13: #{tpu_custom_call.1} parent=11 // pred_check
          %p429 = pneg %p73
        $region14: #{tpu_custom_call.1} parent=11 // pred_check_branch
          %431 = sbr.rel (%p429) target = $region16
        $region15: #{tpu_custom_call.1} parent=11 // pred_region
          _
        $region16: #{tpu_custom_call.1} parent=11 // pred_fallthru
          _
        // Predicated region
        $region17: #{tpu_custom_call.1} parent=11 // pred_check
          %p432 = pneg %p94
        $region18: #{tpu_custom_call.1} parent=11 // pred_check_branch
          %434 = sbr.rel (%p432) target = $region20
        $region19: #{tpu_custom_call.1} parent=11 // pred_region
          _
        $region20: #{tpu_custom_call.1} parent=11 // pred_fallthru
          _
        // Predicated region
        $region21: #{tpu_custom_call.1} parent=11 // pred_check
          %p435 = pneg %p115
        $region22: #{tpu_custom_call.1} parent=11 // pred_check_branch
          %437 = sbr.rel (%p435) target = $region24
        $region23: #{tpu_custom_call.1} parent=11 // pred_region
          _
        $region24: #{tpu_custom_call.1} parent=11 // pred_fallthru
          _
        // Predicated region
        $region25: #{tpu_custom_call.1} parent=11 // pred_check
          %p438 = pneg %p136
        $region26: #{tpu_custom_call.1} parent=11 // pred_check_branch
          %440 = sbr.rel (%p438) target = $region28
        $region27: #{tpu_custom_call.1} parent=11 // pred_region
          _
        $region28: #{tpu_custom_call.1} parent=11 // pred_fallthru
          _
        // Predicated region
        $region29: #{tpu_custom_call.1} parent=11 // pred_check
          %p441 = pneg %p157
        $region30: #{tpu_custom_call.1} parent=11 // pred_check_branch
          %443 = sbr.rel (%p441) target = $region32
        $region31: #{tpu_custom_call.1} parent=11 // pred_region
          _
        $region32: #{tpu_custom_call.1} parent=11 // pred_fallthru
          _
        // Predicated region
        $region33: #{tpu_custom_call.1} parent=11 // pred_check
          %p444 = pneg %p178
        $region34: #{tpu_custom_call.1} parent=11 // pred_check_branch
          %446 = sbr.rel (%p444) target = $region36
        $region35: #{tpu_custom_call.1} parent=11 // pred_region
          _
        $region36: #{tpu_custom_call.1} parent=11 // pred_fallthru
          _
        // Predicated region
        $region37: #{tpu_custom_call.1} parent=11 // pred_check
          %p447 = pneg %p199
        $region38: #{tpu_custom_call.1} parent=11 // pred_check_branch
          %449 = sbr.rel (%p447) target = $region40
        $region39: #{tpu_custom_call.1} parent=11 // pred_region
          _
        $region40: #{tpu_custom_call.1} parent=11 // pred_fallthru
          _
        // Predicated region
        $region41: #{tpu_custom_call.1} parent=11 // pred_check
          %p450 = pneg %p220
        $region42: #{tpu_custom_call.1} parent=11 // pred_check_branch
          %452 = sbr.rel (%p450) target = $region44
        $region43: #{tpu_custom_call.1} parent=11 // pred_region
          _
        $region44: #{tpu_custom_call.1} parent=11 // pred_fallthru
          _
        // Predicated region
        $region45: #{tpu_custom_call.1} parent=11 // pred_check
          %p453 = pneg %p241
        $region46: #{tpu_custom_call.1} parent=11 // pred_check_branch
          %455 = sbr.rel (%p453) target = $region48
        $region47: #{tpu_custom_call.1} parent=11 // pred_region
          _
        $region48: #{tpu_custom_call.1} parent=11 // pred_fallthru
          _
        // Predicated region
        $region49: #{tpu_custom_call.1} parent=11 // pred_check
          %p456 = pneg %p262
        $region50: #{tpu_custom_call.1} parent=11 // pred_check_branch
          %458 = sbr.rel (%p456) target = $region52
        $region51: #{tpu_custom_call.1} parent=11 // pred_region
          _
        $region52: #{tpu_custom_call.1} parent=11 // pred_fallthru
          _
        // Predicated region
        $region53: #{tpu_custom_call.1} parent=11 // pred_check
          %p459 = pneg %p283
        $region54: #{tpu_custom_call.1} parent=11 // pred_check_branch
          %461 = sbr.rel (%p459) target = $region56
        $region55: #{tpu_custom_call.1} parent=11 // pred_region
          %463 = vsyncadd [#allocation5], 0
          %s464 = sshll.u32 %s11, 4
          %s465 = int_to_ptr.hbm [resolvable:$true] %s464
          %s466 = sshll.u32 [#allocation4], 4
          %s467 = int_to_ptr.vmem [resolvable:$true] %s466
          %472 = dma.hbm_to_vmem [thread:$0]  %s465, 2048, %s467, [#allocation5], 128, 128, 8
        $region56: #{tpu_custom_call.1} parent=11 // pred_fallthru
          _
        // Predicated region
        $region57: #{tpu_custom_call.1} parent=11 // pred_check
          %p473 = pneg %p304
        $region58: #{tpu_custom_call.1} parent=11 // pred_check_branch
          %475 = sbr.rel (%p473) target = $region60
        $region59: #{tpu_custom_call.1} parent=11 // pred_region
          _
        $region60: #{tpu_custom_call.1} parent=11 // pred_fallthru
          _
        // Predicated region
        $region61: #{tpu_custom_call.1} parent=11 // pred_check
          %p476 = pneg %p325
        $region62: #{tpu_custom_call.1} parent=11 // pred_check_branch
          %478 = sbr.rel (%p476) target = $region64
        $region63: #{tpu_custom_call.1} parent=11 // pred_region
          _
        $region64: #{tpu_custom_call.1} parent=11 // pred_fallthru
          _
        // Predicated region
        $region65: #{tpu_custom_call.1} parent=11 // pred_check
          %p479 = pneg %p346
        $region66: #{tpu_custom_call.1} parent=11 // pred_check_branch
          %481 = sbr.rel (%p479) target = $region68
        $region67: #{tpu_custom_call.1} parent=11 // pred_region
          _
        $region68: #{tpu_custom_call.1} parent=11 // pred_fallthru
          _
        // Predicated region
        $region69: #{tpu_custom_call.1} parent=11 // pred_check
          %p482 = pneg %p367
        $region70: #{tpu_custom_call.1} parent=11 // pred_check_branch
          %484 = sbr.rel (%p482) target = $region72
        $region71: #{tpu_custom_call.1} parent=11 // pred_region
          _
        $region72: #{tpu_custom_call.1} parent=11 // pred_fallthru
          _
        // Predicated region
        $region73: #{tpu_custom_call.1} parent=11 // pred_check
          %p485 = pneg %p388
        $region74: #{tpu_custom_call.1} parent=11 // pred_check_branch
          %487 = sbr.rel (%p485) target = $region76
        $region75: #{tpu_custom_call.1} parent=11 // pred_region
          _
        $region76: #{tpu_custom_call.1} parent=11 // pred_fallthru
          _
      $region12: #{tpu_custom_call.1} parent=5 // pred_fallthru
        _
      %p488 = scmp.lt.s32.totalorder %s26, 2
      // Predicated region
      $region77: #{tpu_custom_call.1} parent=5 // pred_check
        %p489 = pneg %p488
      $region78: #{tpu_custom_call.1} parent=5 // pred_check_branch
        %491 = sbr.rel (%p489) target = $region80
      $region79: #{tpu_custom_call.1} parent=5 // pred_region
        // Predicated region
        $region81: #{tpu_custom_call.1} parent=79 // pred_check
          %p492 = pneg %p46
        $region82: #{tpu_custom_call.1} parent=79 // pred_check_branch
          %494 = sbr.rel (%p492) target = $region84
        $region83: #{tpu_custom_call.1} parent=79 // pred_region
          %p495 = scmp.lt.s32.totalorder %s26, 1
          %s496 = scalar_select %p495, %s26, 1
          %s497 = smul.addr %s496, 2
          %s498 = smul.addr %s497, 8
          %s499 = scalar_lea.vmem %s0, %s498
        $region84: #{tpu_custom_call.1} parent=79 // pred_fallthru
          _
      $region80: #{tpu_custom_call.1} parent=5 // pred_fallthru
        _
      %p500 = scmp.le.s32.totalorder 1, %s26
      %p501 = scmp.lt.s32.totalorder %s26, 3
      %p502 = pnand %p500, %p501
      %p503 = pneg %p502
      // Predicated region
      $region85: #{tpu_custom_call.1} parent=5 // pred_check
        _
      $region86: #{tpu_custom_call.1} parent=5 // pred_check_branch
        %505 = sbr.rel (%p502) target = $region88
      $region87: #{tpu_custom_call.1} parent=5 // pred_region
        %s506 = ssub.s32 %s26, 1
        // Predicated region
        $region89: #{tpu_custom_call.1} parent=87 // pred_check
          %p507 = pneg %p283
        $region90: #{tpu_custom_call.1} parent=87 // pred_check_branch
          %509 = sbr.rel (%p507) target = $region92
        $region91: #{tpu_custom_call.1} parent=87 // pred_region
          %511 = dma.done [#allocation5], 2048
        $region92: #{tpu_custom_call.1} parent=87 // pred_fallthru
          _
        %p512 = scmp.lt.s32.totalorder %s31, 1
        %s513 = scalar_select %p512, %s31, 1
        %s514 = smul.addr %s513, 2
        %s515 = smul.addr %s514, 8
        %s516 = scalar_lea.vmem %s0, %s515
        %p517 = pneg %p52
        %p518 = pneg %p49
        %p519 = pneg %p73
        %p520 = pneg %p70
        %p521 = pneg %p94
        %p522 = pneg %p91
        %p523 = pneg %p115
        %p524 = pneg %p112
        %p525 = pneg %p136
        %p526 = pneg %p133
        %p527 = pneg %p157
        %p528 = pneg %p154
        %p529 = pneg %p178
        %p530 = pneg %p175
        %p531 = pneg %p199
        %p532 = pneg %p196
        %p533 = pneg %p220
        %p534 = pneg %p217
        %p535 = pneg %p241
        %p536 = pneg %p238
        %p537 = pneg %p262
        %p538 = pneg %p259
        %p539 = pneg %p283
        %p540 = pneg %p280
        %p541 = pneg %p304
        %p542 = pneg %p301
        %p543 = pneg %p325
        %p544 = pneg %p322
        %p545 = pneg %p346
        %p546 = pneg %p343
        %p547 = pneg %p367
        %p548 = pneg %p364
        %p549 = pneg %p388
        %p550 = pneg %p385
        %p551 = pneg %p414
        %p552 = pneg %p411
        %p553 = scmp.lt.s32.totalorder %s31, 1
        %s554 = scalar_select %p553, %s31, 1
        %s555 = scalar_lea.vmem %s17, %s554
        %p556 = scmp.lt.s32.totalorder %s31, 1
        %s557 = scalar_select %p556, %s31, 1
        %s558 = smul.addr %s557, 2
        %s559 = smul.addr %s558, 8
        %s560 = scalar_lea.vmem %s0, %s559
        %p561 = scmp.lt.s32.totalorder %s31, 1
        %s562 = scalar_select %p561, %s31, 1
        %s563 = scalar_lea.vmem %s17, %s562
        %v564 = vld [vmem:[%s560] sm:$0xff]
        %v565 = vld [vmem:[%s560 + $0x8] sm:$0xff]
        %v566 = vld [vmem:[%s1] sm:$0x1]
        %568 = vset.pattern.permute.xlu0 0
        %569 = vperm.xlu0 %568, %v564
        %v570 = vpop.permute.xlu0 %569
        %573 = vset.pattern.permute.xlu0 0
        %574 = vperm.xlu0 %573, %v565
        %v575 = vpop.permute.xlu0 %574
        %v578 = vperm.slane %v566, 0
        %v580 = vmul.f32 %v570, %v578
        %v581 = vmul.f32 %v575, %v578
        %v582 = vld [vmem:[%s2] sm:$0x1]
        %v584 = vperm.slane %v582, 0
        %v586 = vadd.f32 %v580, %v584
        %v587 = vadd.f32 %v581, %v584
        %v588 = vld [vmem:[%s3] sm:$0xff]
        %v589 = vld [vmem:[%s3 + $0x8] sm:$0xff]
        %v590 = vld [vmem:[%s3 + $0x10] sm:$0xff]
        %v591 = vld [vmem:[%s3 + $0x18] sm:$0xff]
        %v592 = vld [vmem:[%s3 + $0x20] sm:$0xff]
        %v593 = vld [vmem:[%s3 + $0x28] sm:$0xff]
        %v594 = vld [vmem:[%s3 + $0x30] sm:$0xff]
        %v595 = vld [vmem:[%s3 + $0x38] sm:$0xff]
        %v596 = vld [vmem:[%s3 + $0x40] sm:$0xff]
        %v597 = vld [vmem:[%s3 + $0x48] sm:$0xff]
        %v598 = vld [vmem:[%s3 + $0x50] sm:$0xff]
        %v599 = vld [vmem:[%s3 + $0x58] sm:$0xff]
        %v600 = vld [vmem:[%s3 + $0x60] sm:$0xff]
        %v601 = vld [vmem:[%s3 + $0x68] sm:$0xff]
        %v602 = vld [vmem:[%s3 + $0x70] sm:$0xff]
        %v603 = vld [vmem:[%s3 + $0x78] sm:$0xff]
        %v604 = vld [vmem:[%s4] sm:$0x3]
        %v606 = vperm.slane %v604, 0
        %v607 = vperm.slane %v604, 1
        %vm610 = vcmask 523264
        %v612 = vsel %vm610, %v586, 0
        %v615 = vsel %vm610, %v587, 0
        %617 = vmatpush.msra.mxu0 0.0
        %618 = vmatpush.msra.mxu0 0.0
        %619 = vmatpush.msra.mxu0 0.0
        %620 = vmatpush.msra.mxu0 0.0
        %621 = vmatpush.msra.mxu0 0.0
        %622 = vmatpush.msra.mxu0 0.0
        %623 = vmatpush.msra.mxu0 0.0
        %624 = vmatpush.msra.mxu0 0.0
        %625 = vmatpush.msra.mxu0 %v602
        %626 = vmatpush.msra.mxu0 %v600
        %627 = vmatpush.msra.mxu0 %v598
        %628 = vmatpush.msra.mxu0 %v596
        %629 = vmatpush.msra.mxu0 %v594
        %630 = vmatpush.msra.mxu0 %v592
        %631 = vmatpush.msra.mxu0 %v590
        %632 = vmatpush.msra.mxu0 %v588
        %633 = vmatmul.f32.gmra.mxu0 %v612
        %v634 = vpop.f32.mrf.mxu0
        %v635 = vadd.f32 %v606, %v634
        %636 = vmatmul.f32.gmra.mxu0 %v615
        %v637 = vpop.f32.mrf.mxu0
        %v638 = vadd.f32 %v606, %v637
        %639 = vdwg.mxu0
        %640 = vmatpush.msra.mxu0 0.0
        %641 = vmatpush.msra.mxu0 0.0
        %642 = vmatpush.msra.mxu0 0.0
        %643 = vmatpush.msra.mxu0 0.0
        %644 = vmatpush.msra.mxu0 0.0
        %645 = vmatpush.msra.mxu0 0.0
        %646 = vmatpush.msra.mxu0 0.0
        %647 = vmatpush.msra.mxu0 0.0
        %648 = vmatpush.msra.mxu0 %v603
        %649 = vmatpush.msra.mxu0 %v601
        %650 = vmatpush.msra.mxu0 %v599
        %651 = vmatpush.msra.mxu0 %v597
        %652 = vmatpush.msra.mxu0 %v595
        %653 = vmatpush.msra.mxu0 %v593
        %654 = vmatpush.msra.mxu0 %v591
        %655 = vmatpush.msra.mxu0 %v589
        %656 = vmatmul.f32.gmra.mxu0 %v612
        %v657 = vpop.f32.mrf.mxu0
        %v658 = vadd.f32 %v607, %v657
        %659 = vmatmul.f32.gmra.mxu0 %v615
        %v660 = vpop.f32.mrf.mxu0
        %v661 = vadd.f32 %v607, %v660
        %662 = vdwg.mxu0
        %v663 = vld [vmem:[%s5] sm:$0xff]
        %v664 = vld [vmem:[%s5 + $0x8] sm:$0xff]
        %v665 = vld [vmem:[%s5 + $0x10] sm:$0xff]
        %v666 = vld [vmem:[%s5 + $0x18] sm:$0xff]
        %v667 = vld [vmem:[%s5 + $0x20] sm:$0xff]
        %v668 = vld [vmem:[%s5 + $0x28] sm:$0xff]
        %v669 = vld [vmem:[%s5 + $0x30] sm:$0xff]
        %v670 = vld [vmem:[%s5 + $0x38] sm:$0xff]
        %673 = vrot.lane.b32.xlu0 %v635, 64
        %v674 = vpop.permute.xlu0 %673
        %675 = vrot.lane.b32.xlu0 %v638, 64
        %v676 = vpop.permute.xlu0 %675
        %vm677 = vcmask 130048
        %v678 = vsel %vm677, %v635, 0
        %v680 = vsel %vm677, %v638, 0
        %v682 = vsel %vm677, %v674, 0
        %v684 = vsel %vm677, %v676, 0
        %686 = vmatpush.xpose.msra.mxu0 0.0
        %687 = vmatpush.xpose.msra.mxu0 0.0
        %688 = vmatpush.xpose.msra.mxu0 0.0
        %689 = vmatpush.xpose.msra.mxu0 0.0
        %690 = vmatpush.xpose.msra.mxu0 0.0
        %691 = vmatpush.xpose.msra.mxu0 0.0
        %692 = vmatpush.xpose.msra.mxu0 0.0
        %693 = vmatpush.xpose.msra.mxu0 0.0
        %694 = vmatpush.xpose.msra.mxu0 0.0
        %695 = vmatpush.xpose.msra.mxu0 0.0
        %696 = vmatpush.xpose.msra.mxu0 0.0
        %697 = vmatpush.xpose.msra.mxu0 0.0
        %698 = vmatpush.xpose.msra.mxu0 0.0
        %699 = vmatpush.xpose.msra.mxu0 0.0
        %700 = vmatpush.xpose.msra.mxu0 %v684
        %701 = vmatpush.xpose.msra.mxu0 %v682
        %702 = vmatmul.f32.gmra.mxu0 %v678
        %v703 = vpop.f32.mrf.mxu0
        %v704 = vadd.f32 0.0, %v703
        %705 = vmatmul.f32.gmra.mxu0 %v680
        %v706 = vpop.f32.mrf.mxu0
        %v707 = vadd.f32 0.0, %v706
        %708 = vdwg.mxu0
        %709 = vst.msk [vmem:[#allocation2] sm:$0xff] %vm677, %v704
        %710 = vst.msk [vmem:[#allocation2 + $0x8] sm:$0xff] %vm677, %v707
        %v711 = vld [vmem:[#allocation2] sm:$0xff]
        %v712 = vld [vmem:[#allocation2 + $0x8] sm:$0xff]
        %v713 = vsel %vm677, %v711, -inf
        %714 = vmax.xlane.f32.xlu0 %v713
        %v715 = vpop.xlane.xlu0 %714
        %v716 = vsel %vm677, %v712, -inf
        %717 = vmax.xlane.f32.xlu0 %v716
        %v718 = vpop.xlane.xlu0 %717
        %v719 = vsub.f32 %v711, %v715
        %v720 = vsub.f32 %v712, %v718
        %v721 = vmul.f32 %v719, 1.442695
        %v722 = vpow.pop %v721
        %v723 = vmul.f32 %v720, 1.442695
        %v724 = vpow.pop %v723
        %v725 = vsel %vm677, %v722, 0.0
        %726 = vadd.xlane.f32.xlu0 %v725
        %v727 = vpop.xlane.xlu0 %726
        %v728 = vsel %vm677, %v724, 0.0
        %729 = vadd.xlane.f32.xlu0 %v728
        %v730 = vpop.xlane.xlu0 %729
        %v731 = vrcp.pop %v727
        %v732 = vrcp.pop %v730
        %v733 = vmul.f32 %v722, %v731
        %v734 = vmul.f32 %v724, %v732
        %735 = vst.msk [vmem:[#allocation2] sm:$0xff] %vm677, %v733
        %736 = vst.msk [vmem:[#allocation2 + $0x8] sm:$0xff] %vm677, %v734
        %v737 = vld [vmem:[#allocation2] sm:$0xff]
        %v738 = vld [vmem:[#allocation2 + $0x8] sm:$0xff]
        %v740 = vsel %vm677, %v737, 0
        %v743 = vsel %vm677, %v738, 0
        %745 = vmatpush.msra.mxu0 0.0
        %746 = vmatpush.msra.mxu0 0.0
        %747 = vmatpush.msra.mxu0 0.0
        %748 = vmatpush.msra.mxu0 0.0
        %749 = vmatpush.msra.mxu0 0.0
        %750 = vmatpush.msra.mxu0 0.0
        %751 = vmatpush.msra.mxu0 0.0
        %752 = vmatpush.msra.mxu0 0.0
        %753 = vmatpush.msra.mxu0 0.0
        %754 = vmatpush.msra.mxu0 0.0
        %755 = vmatpush.msra.mxu0 0.0
        %756 = vmatpush.msra.mxu0 0.0
        %757 = vmatpush.msra.mxu0 0.0
        %758 = vmatpush.msra.mxu0 0.0
        %759 = vmatpush.msra.mxu0 %v661
        %760 = vmatpush.msra.mxu0 %v658
        %761 = vmatmul.f32.gmra.mxu0 %v740
        %v762 = vpop.f32.mrf.mxu0
        %v763 = vadd.f32 0.0, %v762
        %764 = vmatmul.f32.gmra.mxu0 %v743
        %v765 = vpop.f32.mrf.mxu0
        %v766 = vadd.f32 0.0, %v765
        %767 = vdwg.mxu0
        %768 = vrot.lane.b32.xlu0 %v635, 112
        %v769 = vpop.permute.xlu0 %768
        %770 = vrot.lane.b32.xlu0 %v638, 112
        %v771 = vpop.permute.xlu0 %770
        %772 = vrot.lane.b32.xlu0 %v635, 48
        %v773 = vpop.permute.xlu0 %772
        %774 = vrot.lane.b32.xlu0 %v638, 48
        %v775 = vpop.permute.xlu0 %774
        %v776 = vsel %vm677, %v769, 0
        %v778 = vsel %vm677, %v771, 0
        %v780 = vsel %vm677, %v773, 0
        %v782 = vsel %vm677, %v775, 0
        %784 = vmatpush.xpose.msra.mxu0 0.0
        %785 = vmatpush.xpose.msra.mxu0 0.0
        %786 = vmatpush.xpose.msra.mxu0 0.0
        %787 = vmatpush.xpose.msra.mxu0 0.0
        %788 = vmatpush.xpose.msra.mxu0 0.0
        %789 = vmatpush.xpose.msra.mxu0 0.0
        %790 = vmatpush.xpose.msra.mxu0 0.0
        %791 = vmatpush.xpose.msra.mxu0 0.0
        %792 = vmatpush.xpose.msra.mxu0 0.0
        %793 = vmatpush.xpose.msra.mxu0 0.0
        %794 = vmatpush.xpose.msra.mxu0 0.0
        %795 = vmatpush.xpose.msra.mxu0 0.0
        %796 = vmatpush.xpose.msra.mxu0 0.0
        %797 = vmatpush.xpose.msra.mxu0 0.0
        %798 = vmatpush.xpose.msra.mxu0 %v782
        %799 = vmatpush.xpose.msra.mxu0 %v780
        %800 = vmatmul.f32.gmra.mxu0 %v776
        %v801 = vpop.f32.mrf.mxu0
        %v802 = vadd.f32 0.0, %v801
        %803 = vmatmul.f32.gmra.mxu0 %v778
        %v804 = vpop.f32.mrf.mxu0
        %v805 = vadd.f32 0.0, %v804
        %806 = vdwg.mxu0
        %807 = vst.msk [vmem:[#allocation2] sm:$0xff] %vm677, %v802
        %808 = vst.msk [vmem:[#allocation2 + $0x8] sm:$0xff] %vm677, %v805
        %v809 = vld [vmem:[#allocation2] sm:$0xff]
        %v810 = vld [vmem:[#allocation2 + $0x8] sm:$0xff]
        %v811 = vsel %vm677, %v809, -inf
        %812 = vmax.xlane.f32.xlu0 %v811
        %v813 = vpop.xlane.xlu0 %812
        %v814 = vsel %vm677, %v810, -inf
        %815 = vmax.xlane.f32.xlu0 %v814
        %v816 = vpop.xlane.xlu0 %815
        %v817 = vsub.f32 %v809, %v813
        %v818 = vsub.f32 %v810, %v816
        %v819 = vmul.f32 %v817, 1.442695
        %v820 = vpow.pop %v819
        %v821 = vmul.f32 %v818, 1.442695
        %v822 = vpow.pop %v821
        %v823 = vsel %vm677, %v820, 0.0
        %824 = vadd.xlane.f32.xlu0 %v823
        %v825 = vpop.xlane.xlu0 %824
        %v826 = vsel %vm677, %v822, 0.0
        %827 = vadd.xlane.f32.xlu0 %v826
        %v828 = vpop.xlane.xlu0 %827
        %v829 = vrcp.pop %v825
        %v830 = vrcp.pop %v828
        %v831 = vmul.f32 %v820, %v829
        %v832 = vmul.f32 %v822, %v830
        %833 = vst.msk [vmem:[#allocation2] sm:$0xff] %vm677, %v831
        %834 = vst.msk [vmem:[#allocation2 + $0x8] sm:$0xff] %vm677, %v832
        %v835 = vld [vmem:[#allocation2] sm:$0xff]
        %v836 = vld [vmem:[#allocation2 + $0x8] sm:$0xff]
        %839 = vrot.lane.b32.xlu0 %v658, 112
        %v840 = vpop.permute.xlu0 %839
        %841 = vrot.lane.b32.xlu0 %v661, 112
        %v842 = vpop.permute.xlu0 %841
        %v846 = vsel %vm677, %v835, 0
        %v849 = vsel %vm677, %v836, 0
        %851 = vmatpush.msra.mxu0 0.0
        %852 = vmatpush.msra.mxu0 0.0
        %853 = vmatpush.msra.mxu0 0.0
        %854 = vmatpush.msra.mxu0 0.0
        %855 = vmatpush.msra.mxu0 0.0
        %856 = vmatpush.msra.mxu0 0.0
        %857 = vmatpush.msra.mxu0 0.0
        %858 = vmatpush.msra.mxu0 0.0
        %859 = vmatpush.msra.mxu0 0.0
        %860 = vmatpush.msra.mxu0 0.0
        %861 = vmatpush.msra.mxu0 0.0
        %862 = vmatpush.msra.mxu0 0.0
        %863 = vmatpush.msra.mxu0 0.0
        %864 = vmatpush.msra.mxu0 0.0
        %865 = vmatpush.msra.mxu0 %v842
        %866 = vmatpush.msra.mxu0 %v840
        %867 = vmatmul.f32.gmra.mxu0 %v846
        %v868 = vpop.f32.mrf.mxu0
        %v869 = vadd.f32 0.0, %v868
        %870 = vmatmul.f32.gmra.mxu0 %v849
        %v871 = vpop.f32.mrf.mxu0
        %v872 = vadd.f32 0.0, %v871
        %873 = vdwg.mxu0
        %v875 = vsel %vm677, %v869, 0
        %v878 = vsel %vm677, %v872, 0
        %880 = vmatpush.msra.mxu0 0.0
        %881 = vmatpush.msra.mxu0 0.0
        %882 = vmatpush.msra.mxu0 0.0
        %883 = vmatpush.msra.mxu0 0.0
        %884 = vmatpush.msra.mxu0 0.0
        %885 = vmatpush.msra.mxu0 0.0
        %886 = vmatpush.msra.mxu0 0.0
        %887 = vmatpush.msra.mxu0 0.0
        %888 = vmatpush.msra.mxu0 0.0
        %889 = vmatpush.msra.mxu0 0.0
        %890 = vmatpush.msra.mxu0 0.0
        %891 = vmatpush.msra.mxu0 0.0
        %892 = vmatpush.msra.mxu0 0.0
        %893 = vmatpush.msra.mxu0 0.0
        %894 = vmatpush.msra.mxu0 %v666
        %895 = vmatpush.msra.mxu0 %v665
        %896 = vmatmul.f32.gmra.mxu0 %v875
        %v897 = vpop.f32.mrf.mxu0
        %v898 = vadd.f32 0.0, %v897
        %899 = vmatmul.f32.gmra.mxu0 %v878
        %v900 = vpop.f32.mrf.mxu0
        %v901 = vadd.f32 0.0, %v900
        %902 = vdwg.mxu0
        %v904 = vsel %vm677, %v763, 0
        %v907 = vsel %vm677, %v766, 0
        %909 = vmatpush.msra.mxu0 0.0
        %910 = vmatpush.msra.mxu0 0.0
        %911 = vmatpush.msra.mxu0 0.0
        %912 = vmatpush.msra.mxu0 0.0
        %913 = vmatpush.msra.mxu0 0.0
        %914 = vmatpush.msra.mxu0 0.0
        %915 = vmatpush.msra.mxu0 0.0
        %916 = vmatpush.msra.mxu0 0.0
        %917 = vmatpush.msra.mxu0 0.0
        %918 = vmatpush.msra.mxu0 0.0
        %919 = vmatpush.msra.mxu0 0.0
        %920 = vmatpush.msra.mxu0 0.0
        %921 = vmatpush.msra.mxu0 0.0
        %922 = vmatpush.msra.mxu0 0.0
        %923 = vmatpush.msra.mxu0 %v664
        %924 = vmatpush.msra.mxu0 %v663
        %925 = vmatmul.f32.gmra.mxu0 %v904
        %v926 = vpop.f32.mrf.mxu0
        %v927 = vadd.f32 %v898, %v926
        %928 = vmatmul.f32.gmra.mxu0 %v907
        %v929 = vpop.f32.mrf.mxu0
        %v930 = vadd.f32 %v901, %v929
        %931 = vdwg.mxu0
        %932 = vrot.lane.b32.xlu0 %v635, 96
        %v933 = vpop.permute.xlu0 %932
        %934 = vrot.lane.b32.xlu0 %v638, 96
        %v935 = vpop.permute.xlu0 %934
        %936 = vrot.lane.b32.xlu0 %v635, 32
        %v937 = vpop.permute.xlu0 %936
        %938 = vrot.lane.b32.xlu0 %v638, 32
        %v939 = vpop.permute.xlu0 %938
        %v940 = vsel %vm677, %v933, 0
        %v942 = vsel %vm677, %v935, 0
        %v944 = vsel %vm677, %v937, 0
        %v946 = vsel %vm677, %v939, 0
        %948 = vmatpush.xpose.msra.mxu0 0.0
        %949 = vmatpush.xpose.msra.mxu0 0.0
        %950 = vmatpush.xpose.msra.mxu0 0.0
        %951 = vmatpush.xpose.msra.mxu0 0.0
        %952 = vmatpush.xpose.msra.mxu0 0.0
        %953 = vmatpush.xpose.msra.mxu0 0.0
        %954 = vmatpush.xpose.msra.mxu0 0.0
        %955 = vmatpush.xpose.msra.mxu0 0.0
        %956 = vmatpush.xpose.msra.mxu0 0.0
        %957 = vmatpush.xpose.msra.mxu0 0.0
        %958 = vmatpush.xpose.msra.mxu0 0.0
        %959 = vmatpush.xpose.msra.mxu0 0.0
        %960 = vmatpush.xpose.msra.mxu0 0.0
        %961 = vmatpush.xpose.msra.mxu0 0.0
        %962 = vmatpush.xpose.msra.mxu0 %v946
        %963 = vmatpush.xpose.msra.mxu0 %v944
        %964 = vmatmul.f32.gmra.mxu0 %v940
        %v965 = vpop.f32.mrf.mxu0
        %v966 = vadd.f32 0.0, %v965
        %967 = vmatmul.f32.gmra.mxu0 %v942
        %v968 = vpop.f32.mrf.mxu0
        %v969 = vadd.f32 0.0, %v968
        %970 = vdwg.mxu0
        %971 = vst.msk [vmem:[#allocation2] sm:$0xff] %vm677, %v966
        %972 = vst.msk [vmem:[#allocation2 + $0x8] sm:$0xff] %vm677, %v969
        %v973 = vld [vmem:[#allocation2] sm:$0xff]
        %v974 = vld [vmem:[#allocation2 + $0x8] sm:$0xff]
        %v975 = vsel %vm677, %v973, -inf
        %976 = vmax.xlane.f32.xlu0 %v975
        %v977 = vpop.xlane.xlu0 %976
        %v978 = vsel %vm677, %v974, -inf
        %979 = vmax.xlane.f32.xlu0 %v978
        %v980 = vpop.xlane.xlu0 %979
        %v981 = vsub.f32 %v973, %v977
        %v982 = vsub.f32 %v974, %v980
        %v983 = vmul.f32 %v981, 1.442695
        %v984 = vpow.pop %v983
        %v985 = vmul.f32 %v982, 1.442695
        %v986 = vpow.pop %v985
        %v987 = vsel %vm677, %v984, 0.0
        %988 = vadd.xlane.f32.xlu0 %v987
        %v989 = vpop.xlane.xlu0 %988
        %v990 = vsel %vm677, %v986, 0.0
        %991 = vadd.xlane.f32.xlu0 %v990
        %v992 = vpop.xlane.xlu0 %991
        %v993 = vrcp.pop %v989
        %v994 = vrcp.pop %v992
        %v995 = vmul.f32 %v984, %v993
        %v996 = vmul.f32 %v986, %v994
        %997 = vst.msk [vmem:[#allocation2] sm:$0xff] %vm677, %v995
        %998 = vst.msk [vmem:[#allocation2 + $0x8] sm:$0xff] %vm677, %v996
        %v999 = vld [vmem:[#allocation2] sm:$0xff]
        %v1000 = vld [vmem:[#allocation2 + $0x8] sm:$0xff]
        %1001 = vrot.lane.b32.xlu0 %v658, 96
        %v1002 = vpop.permute.xlu0 %1001
        %1003 = vrot.lane.b32.xlu0 %v661, 96
        %v1004 = vpop.permute.xlu0 %1003
        %v1008 = vsel %vm677, %v999, 0
        %v1011 = vsel %vm677, %v1000, 0
        %1013 = vmatpush.msra.mxu0 0.0
        %1014 = vmatpush.msra.mxu0 0.0
        %1015 = vmatpush.msra.mxu0 0.0
        %1016 = vmatpush.msra.mxu0 0.0
        %1017 = vmatpush.msra.mxu0 0.0
        %1018 = vmatpush.msra.mxu0 0.0
        %1019 = vmatpush.msra.mxu0 0.0
        %1020 = vmatpush.msra.mxu0 0.0
        %1021 = vmatpush.msra.mxu0 0.0
        %1022 = vmatpush.msra.mxu0 0.0
        %1023 = vmatpush.msra.mxu0 0.0
        %1024 = vmatpush.msra.mxu0 0.0
        %1025 = vmatpush.msra.mxu0 0.0
        %1026 = vmatpush.msra.mxu0 0.0
        %1027 = vmatpush.msra.mxu0 %v1004
        %1028 = vmatpush.msra.mxu0 %v1002
        %1029 = vmatmul.f32.gmra.mxu0 %v1008
        %v1030 = vpop.f32.mrf.mxu0
        %v1031 = vadd.f32 0.0, %v1030
        %1032 = vmatmul.f32.gmra.mxu0 %v1011
        %v1033 = vpop.f32.mrf.mxu0
        %v1034 = vadd.f32 0.0, %v1033
        %1035 = vdwg.mxu0
        %v1037 = vsel %vm677, %v1031, 0
        %v1040 = vsel %vm677, %v1034, 0
        %1042 = vmatpush.msra.mxu0 0.0
        %1043 = vmatpush.msra.mxu0 0.0
        %1044 = vmatpush.msra.mxu0 0.0
        %1045 = vmatpush.msra.mxu0 0.0
        %1046 = vmatpush.msra.mxu0 0.0
        %1047 = vmatpush.msra.mxu0 0.0
        %1048 = vmatpush.msra.mxu0 0.0
        %1049 = vmatpush.msra.mxu0 0.0
        %1050 = vmatpush.msra.mxu0 0.0
        %1051 = vmatpush.msra.mxu0 0.0
        %1052 = vmatpush.msra.mxu0 0.0
        %1053 = vmatpush.msra.mxu0 0.0
        %1054 = vmatpush.msra.mxu0 0.0
        %1055 = vmatpush.msra.mxu0 0.0
        %1056 = vmatpush.msra.mxu0 %v668
        %1057 = vmatpush.msra.mxu0 %v667
        %1058 = vmatmul.f32.gmra.mxu0 %v1037
        %v1059 = vpop.f32.mrf.mxu0
        %v1060 = vadd.f32 0.0, %v1059
        %1061 = vmatmul.f32.gmra.mxu0 %v1040
        %v1062 = vpop.f32.mrf.mxu0
        %v1063 = vadd.f32 0.0, %v1062
        %1064 = vdwg.mxu0
        %v1065 = vadd.f32 %v927, %v1060
        %v1066 = vadd.f32 %v930, %v1063
        %1067 = vrot.lane.b32.xlu0 %v635, 80
        %v1068 = vpop.permute.xlu0 %1067
        %1069 = vrot.lane.b32.xlu0 %v638, 80
        %v1070 = vpop.permute.xlu0 %1069
        %1071 = vrot.lane.b32.xlu0 %v635, 16
        %v1072 = vpop.permute.xlu0 %1071
        %1073 = vrot.lane.b32.xlu0 %v638, 16
        %v1074 = vpop.permute.xlu0 %1073
        %v1075 = vsel %vm677, %v1068, 0
        %v1077 = vsel %vm677, %v1070, 0
        %v1079 = vsel %vm677, %v1072, 0
        %v1081 = vsel %vm677, %v1074, 0
        %1083 = vmatpush.xpose.msra.mxu0 0.0
        %1084 = vmatpush.xpose.msra.mxu0 0.0
        %1085 = vmatpush.xpose.msra.mxu0 0.0
        %1086 = vmatpush.xpose.msra.mxu0 0.0
        %1087 = vmatpush.xpose.msra.mxu0 0.0
        %1088 = vmatpush.xpose.msra.mxu0 0.0
        %1089 = vmatpush.xpose.msra.mxu0 0.0
        %1090 = vmatpush.xpose.msra.mxu0 0.0
        %1091 = vmatpush.xpose.msra.mxu0 0.0
        %1092 = vmatpush.xpose.msra.mxu0 0.0
        %1093 = vmatpush.xpose.msra.mxu0 0.0
        %1094 = vmatpush.xpose.msra.mxu0 0.0
        %1095 = vmatpush.xpose.msra.mxu0 0.0
        %1096 = vmatpush.xpose.msra.mxu0 0.0
        %1097 = vmatpush.xpose.msra.mxu0 %v1081
        %1098 = vmatpush.xpose.msra.mxu0 %v1079
        %1099 = vmatmul.f32.gmra.mxu0 %v1075
        %v1100 = vpop.f32.mrf.mxu0
        %v1101 = vadd.f32 0.0, %v1100
        %1102 = vmatmul.f32.gmra.mxu0 %v1077
        %v1103 = vpop.f32.mrf.mxu0
        %v1104 = vadd.f32 0.0, %v1103
        %1105 = vdwg.mxu0
        %1106 = vst.msk [vmem:[#allocation2] sm:$0xff] %vm677, %v1101
        %1107 = vst.msk [vmem:[#allocation2 + $0x8] sm:$0xff] %vm677, %v1104
        %v1108 = vld [vmem:[#allocation2] sm:$0xff]
        %v1109 = vld [vmem:[#allocation2 + $0x8] sm:$0xff]
        %v1110 = vsel %vm677, %v1108, -inf
        %1111 = vmax.xlane.f32.xlu0 %v1110
        %v1112 = vpop.xlane.xlu0 %1111
        %v1113 = vsel %vm677, %v1109, -inf
        %1114 = vmax.xlane.f32.xlu0 %v1113
        %v1115 = vpop.xlane.xlu0 %1114
        %v1116 = vsub.f32 %v1108, %v1112
        %v1117 = vsub.f32 %v1109, %v1115
        %v1118 = vmul.f32 %v1116, 1.442695
        %v1119 = vpow.pop %v1118
        %v1120 = vmul.f32 %v1117, 1.442695
        %v1121 = vpow.pop %v1120
        %v1122 = vsel %vm677, %v1119, 0.0
        %1123 = vadd.xlane.f32.xlu0 %v1122
        %v1124 = vpop.xlane.xlu0 %1123
        %v1125 = vsel %vm677, %v1121, 0.0
        %1126 = vadd.xlane.f32.xlu0 %v1125
        %v1127 = vpop.xlane.xlu0 %1126
        %v1128 = vrcp.pop %v1124
        %v1129 = vrcp.pop %v1127
        %v1130 = vmul.f32 %v1119, %v1128
        %v1131 = vmul.f32 %v1121, %v1129
        %1132 = vst.msk [vmem:[#allocation2] sm:$0xff] %vm677, %v1130
        %1133 = vst.msk [vmem:[#allocation2 + $0x8] sm:$0xff] %vm677, %v1131
        %v1134 = vld [vmem:[#allocation2] sm:$0xff]
        %v1135 = vld [vmem:[#allocation2 + $0x8] sm:$0xff]
        %1136 = vrot.lane.b32.xlu0 %v658, 80
        %v1137 = vpop.permute.xlu0 %1136
        %1138 = vrot.lane.b32.xlu0 %v661, 80
        %v1139 = vpop.permute.xlu0 %1138
        %v1143 = vsel %vm677, %v1134, 0
        %v1146 = vsel %vm677, %v1135, 0
        %1148 = vmatpush.msra.mxu0 0.0
        %1149 = vmatpush.msra.mxu0 0.0
        %1150 = vmatpush.msra.mxu0 0.0
        %1151 = vmatpush.msra.mxu0 0.0
        %1152 = vmatpush.msra.mxu0 0.0
        %1153 = vmatpush.msra.mxu0 0.0
        %1154 = vmatpush.msra.mxu0 0.0
        %1155 = vmatpush.msra.mxu0 0.0
        %1156 = vmatpush.msra.mxu0 0.0
        %1157 = vmatpush.msra.mxu0 0.0
        %1158 = vmatpush.msra.mxu0 0.0
        %1159 = vmatpush.msra.mxu0 0.0
        %1160 = vmatpush.msra.mxu0 0.0
        %1161 = vmatpush.msra.mxu0 0.0
        %1162 = vmatpush.msra.mxu0 %v1139
        %1163 = vmatpush.msra.mxu0 %v1137
        %1164 = vmatmul.f32.gmra.mxu0 %v1143
        %v1165 = vpop.f32.mrf.mxu0
        %v1166 = vadd.f32 0.0, %v1165
        %1167 = vmatmul.f32.gmra.mxu0 %v1146
        %v1168 = vpop.f32.mrf.mxu0
        %v1169 = vadd.f32 0.0, %v1168
        %1170 = vdwg.mxu0
        %v1172 = vsel %vm677, %v1166, 0
        %v1175 = vsel %vm677, %v1169, 0
        %1177 = vmatpush.msra.mxu0 0.0
        %1178 = vmatpush.msra.mxu0 0.0
        %1179 = vmatpush.msra.mxu0 0.0
        %1180 = vmatpush.msra.mxu0 0.0
        %1181 = vmatpush.msra.mxu0 0.0
        %1182 = vmatpush.msra.mxu0 0.0
        %1183 = vmatpush.msra.mxu0 0.0
        %1184 = vmatpush.msra.mxu0 0.0
        %1185 = vmatpush.msra.mxu0 0.0
        %1186 = vmatpush.msra.mxu0 0.0
        %1187 = vmatpush.msra.mxu0 0.0
        %1188 = vmatpush.msra.mxu0 0.0
        %1189 = vmatpush.msra.mxu0 0.0
        %1190 = vmatpush.msra.mxu0 0.0
        %1191 = vmatpush.msra.mxu0 %v670
        %1192 = vmatpush.msra.mxu0 %v669
        %1193 = vmatmul.f32.gmra.mxu0 %v1172
        %v1194 = vpop.f32.mrf.mxu0
        %v1195 = vadd.f32 0.0, %v1194
        %1196 = vmatmul.f32.gmra.mxu0 %v1175
        %v1197 = vpop.f32.mrf.mxu0
        %v1198 = vadd.f32 0.0, %v1197
        %1199 = vdwg.mxu0
        %v1200 = vadd.f32 %v1065, %v1195
        %v1201 = vadd.f32 %v1066, %v1198
        %v1202 = vld [vmem:[%s6] sm:$0x1]
        %v1204 = vperm.slane %v1202, 0
        %v1206 = vadd.f32 %v1200, %v1204
        %v1207 = vadd.f32 %v1201, %v1204
        %v1208 = vadd.f32 %v586, %v1206
        %v1209 = vadd.f32 %v587, %v1207
        %v1210 = vld [vmem:[%s7] sm:$0x1]
        %v1211 = vld [vmem:[%s8] sm:$0x1]
        %v1212 = vsel %vm610, %v1208, 0.0
        %1213 = vadd.xlane.f32.xlu0 %v1212
        %v1214 = vpop.xlane.xlu0 %1213
        %v1215 = vsel %vm610, %v1209, 0.0
        %1216 = vadd.xlane.f32.xlu0 %v1215
        %v1217 = vpop.xlane.xlu0 %1216
        %v1218 = vrcp.pop 64.0
        %v1219 = vmul.f32 64.0, %v1218
        %v1220 = vsub.f32 1.0, %v1219
        %v1221 = vmul.f32 %v1218, %v1220
        %v1222 = vadd.f32 %v1218, %v1221
        %vm1223 = vweird.f32 %v1218
        %v1224 = vsel %vm1223, %v1218, %v1222
        %v1225 = vmul.f32 %v1214, %v1224
        %v1226 = vmul.f32 %v1217, %v1224
        %v1227 = vsub.f32 %v1208, %v1225
        %v1228 = vsub.f32 %v1209, %v1226
        %v1229 = vmul.f32 %v1227, %v1227
        %v1230 = vmul.f32 %v1228, %v1228
        %v1231 = vsel %vm610, %v1229, 0.0
        %1232 = vadd.xlane.f32.xlu0 %v1231
        %v1233 = vpop.xlane.xlu0 %1232
        %v1234 = vsel %vm610, %v1230, 0.0
        %1235 = vadd.xlane.f32.xlu0 %v1234
        %v1236 = vpop.xlane.xlu0 %1235
        %v1237 = vmul.f32 %v1233, %v1224
        %v1238 = vmul.f32 %v1236, %v1224
        %v1239 = vadd.f32 %v1237, 1e-05
        %v1240 = vadd.f32 %v1238, 1e-05
        %v1241 = vrsqrt.pop %v1239
        %v1242 = vmul.f32 %v1241, %v1239
        %v1243 = vmul.f32 %v1242, %v1241
        %v1244 = vmul.f32 0.5, %v1243
        %v1245 = vsub.f32 1.5, %v1244
        %v1246 = vmul.f32 %v1241, %v1245
        %vm1247 = vweird.f32 %v1239
        %vm1248 = vweird.f32 %v1241
        %vm1249 = vmor %vm1247, %vm1248
        %v1250 = vsel %vm1249, %v1241, %v1246
        %v1251 = vrsqrt.pop %v1240
        %v1252 = vmul.f32 %v1251, %v1240
        %v1253 = vmul.f32 %v1252, %v1251
        %v1254 = vmul.f32 0.5, %v1253
        %v1255 = vsub.f32 1.5, %v1254
        %v1256 = vmul.f32 %v1251, %v1255
        %vm1257 = vweird.f32 %v1240
        %vm1258 = vweird.f32 %v1251
        %vm1259 = vmor %vm1257, %vm1258
        %v1260 = vsel %vm1259, %v1251, %v1256
        %v1261 = vmul.f32 %v1227, %v1250
        %v1262 = vmul.f32 %v1228, %v1260
        %v1264 = vperm.slane %v1210, 0
        %v1266 = vmul.f32 %v1261, %v1264
        %v1267 = vmul.f32 %v1262, %v1264
        %v1269 = vperm.slane %v1211, 0
        %v1271 = vadd.f32 %v1266, %v1269
        %v1272 = vadd.f32 %v1267, %v1269
        %v1273 = vld [vmem:[#allocation4] sm:$0xff]
        %v1274 = vld [vmem:[#allocation4 + $0x8] sm:$0xff]
        %v1275 = vld [vmem:[#allocation4 + $0x10] sm:$0xff]
        %v1276 = vld [vmem:[#allocation4 + $0x18] sm:$0xff]
        %v1277 = vld [vmem:[#allocation4 + $0x20] sm:$0xff]
        %v1278 = vld [vmem:[#allocation4 + $0x28] sm:$0xff]
        %v1279 = vld [vmem:[#allocation4 + $0x30] sm:$0xff]
        %v1280 = vld [vmem:[#allocation4 + $0x38] sm:$0xff]
        %v1281 = vld [vmem:[%s12] sm:$0x1]
        %v1283 = vperm.slane %v1281, 0
        %v1286 = vsel %vm610, %v1271, 0
        %v1289 = vsel %vm610, %v1272, 0
        %1291 = vmatpush.msra.mxu0 0.0
        %1292 = vmatpush.msra.mxu0 0.0
        %1293 = vmatpush.msra.mxu0 0.0
        %1294 = vmatpush.msra.mxu0 0.0
        %1295 = vmatpush.msra.mxu0 0.0
        %1296 = vmatpush.msra.mxu0 0.0
        %1297 = vmatpush.msra.mxu0 0.0
        %1298 = vmatpush.msra.mxu0 0.0
        %1299 = vmatpush.msra.mxu0 %v1280
        %1300 = vmatpush.msra.mxu0 %v1279
        %1301 = vmatpush.msra.mxu0 %v1278
        %1302 = vmatpush.msra.mxu0 %v1277
        %1303 = vmatpush.msra.mxu0 %v1276
        %1304 = vmatpush.msra.mxu0 %v1275
        %1305 = vmatpush.msra.mxu0 %v1274
        %1306 = vmatpush.msra.mxu0 %v1273
        %1307 = vmatmul.f32.gmra.mxu0 %v1286
        %v1308 = vpop.f32.mrf.mxu0
        %v1309 = vadd.f32 %v1283, %v1308
        %1310 = vmatmul.f32.gmra.mxu0 %v1289
        %v1311 = vpop.f32.mrf.mxu0
        %v1312 = vadd.f32 %v1283, %v1311
        %1313 = vdwg.mxu0
        %v1314 = vmax.f32 %v1309, 0.0
        %v1315 = vmax.f32 %v1312, 0.0
        %v1316 = vld [vmem:[%s13] sm:$0xff]
        %v1317 = vld [vmem:[%s13 + $0x8] sm:$0xff]
        %v1318 = vld [vmem:[%s13 + $0x10] sm:$0xff]
        %v1319 = vld [vmem:[%s13 + $0x18] sm:$0xff]
        %v1320 = vld [vmem:[%s13 + $0x20] sm:$0xff]
        %v1321 = vld [vmem:[%s13 + $0x28] sm:$0xff]
        %v1322 = vld [vmem:[%s13 + $0x30] sm:$0xff]
        %v1323 = vld [vmem:[%s13 + $0x38] sm:$0xff]
        %v1324 = vld [vmem:[%s13 + $0x40] sm:$0xff]
        %v1325 = vld [vmem:[%s13 + $0x48] sm:$0xff]
        %v1326 = vld [vmem:[%s13 + $0x50] sm:$0xff]
        %v1327 = vld [vmem:[%s13 + $0x58] sm:$0xff]
        %v1328 = vld [vmem:[%s13 + $0x60] sm:$0xff]
        %v1329 = vld [vmem:[%s13 + $0x68] sm:$0xff]
        %v1330 = vld [vmem:[%s13 + $0x70] sm:$0xff]
        %v1331 = vld [vmem:[%s13 + $0x78] sm:$0xff]
        %v1332 = vld [vmem:[%s14] sm:$0x1]
        %v1334 = vperm.slane %v1332, 0
        %1336 = vmatpush.msra.mxu0 %v1331
        %1337 = vmatpush.msra.mxu0 %v1330
        %1338 = vmatpush.msra.mxu0 %v1329
        %1339 = vmatpush.msra.mxu0 %v1328
        %1340 = vmatpush.msra.mxu0 %v1327
        %1341 = vmatpush.msra.mxu0 %v1326
        %1342 = vmatpush.msra.mxu0 %v1325
        %1343 = vmatpush.msra.mxu0 %v1324
        %1344 = vmatpush.msra.mxu0 %v1323
        %1345 = vmatpush.msra.mxu0 %v1322
        %1346 = vmatpush.msra.mxu0 %v1321
        %1347 = vmatpush.msra.mxu0 %v1320
        %1348 = vmatpush.msra.mxu0 %v1319
        %1349 = vmatpush.msra.mxu0 %v1318
        %1350 = vmatpush.msra.mxu0 %v1317
        %1351 = vmatpush.msra.mxu0 %v1316
        %1352 = vmatmul.f32.gmra.mxu0 %v1314
        %v1353 = vpop.f32.mrf.mxu0
        %v1354 = vadd.f32 %v1334, %v1353
        %1355 = vmatmul.f32.gmra.mxu0 %v1315
        %v1356 = vpop.f32.mrf.mxu0
        %v1357 = vadd.f32 %v1334, %v1356
        %1358 = vdwg.mxu0
        %v1359 = vadd.f32 %v1271, %v1354
        %v1360 = vadd.f32 %v1272, %v1357
        %v1361 = vld [vmem:[%s9] sm:$0x1]
        %v1362 = vld [vmem:[%s10] sm:$0x1]
        %v1363 = vsel %vm610, %v1359, 0.0
        %1364 = vadd.xlane.f32.xlu0 %v1363
        %v1365 = vpop.xlane.xlu0 %1364
        %v1366 = vsel %vm610, %v1360, 0.0
        %1367 = vadd.xlane.f32.xlu0 %v1366
        %v1368 = vpop.xlane.xlu0 %1367
        %v1369 = vmul.f32 %v1365, %v1224
        %v1370 = vmul.f32 %v1368, %v1224
        %v1371 = vsub.f32 %v1359, %v1369
        %v1372 = vsub.f32 %v1360, %v1370
        %v1373 = vmul.f32 %v1371, %v1371
        %v1374 = vmul.f32 %v1372, %v1372
        %v1375 = vsel %vm610, %v1373, 0.0
        %1376 = vadd.xlane.f32.xlu0 %v1375
        %v1377 = vpop.xlane.xlu0 %1376
        %v1378 = vsel %vm610, %v1374, 0.0
        %1379 = vadd.xlane.f32.xlu0 %v1378
        %v1380 = vpop.xlane.xlu0 %1379
        %v1381 = vmul.f32 %v1377, %v1224
        %v1382 = vmul.f32 %v1380, %v1224
        %v1383 = vadd.f32 %v1381, 1e-05
        %v1384 = vadd.f32 %v1382, 1e-05
        %v1385 = vrsqrt.pop %v1383
        %v1386 = vmul.f32 %v1385, %v1383
        %v1387 = vmul.f32 %v1386, %v1385
        %v1388 = vmul.f32 0.5, %v1387
        %v1389 = vsub.f32 1.5, %v1388
        %v1390 = vmul.f32 %v1385, %v1389
        %vm1391 = vweird.f32 %v1383
        %vm1392 = vweird.f32 %v1385
        %vm1393 = vmor %vm1391, %vm1392
        %v1394 = vsel %vm1393, %v1385, %v1390
        %v1395 = vrsqrt.pop %v1384
        %v1396 = vmul.f32 %v1395, %v1384
        %v1397 = vmul.f32 %v1396, %v1395
        %v1398 = vmul.f32 0.5, %v1397
        %v1399 = vsub.f32 1.5, %v1398
        %v1400 = vmul.f32 %v1395, %v1399
        %vm1401 = vweird.f32 %v1384
        %vm1402 = vweird.f32 %v1395
        %vm1403 = vmor %vm1401, %vm1402
        %v1404 = vsel %vm1403, %v1395, %v1400
        %v1405 = vmul.f32 %v1371, %v1394
        %v1406 = vmul.f32 %v1372, %v1404
        %v1408 = vperm.slane %v1361, 0
        %v1410 = vmul.f32 %v1405, %v1408
        %v1411 = vmul.f32 %v1406, %v1408
        %v1413 = vperm.slane %v1362, 0
        %v1415 = vadd.f32 %v1410, %v1413
        %v1416 = vadd.f32 %v1411, %v1413
        %s1417 = scalar_lea.vmem %s3, 128
        %v1418 = vld [vmem:[%s1417] sm:$0xff]
        %v1419 = vld [vmem:[%s1417 + $0x8] sm:$0xff]
        %v1420 = vld [vmem:[%s1417 + $0x10] sm:$0xff]
        %v1421 = vld [vmem:[%s1417 + $0x18] sm:$0xff]
        %v1422 = vld [vmem:[%s1417 + $0x20] sm:$0xff]
        %v1423 = vld [vmem:[%s1417 + $0x28] sm:$0xff]
        %v1424 = vld [vmem:[%s1417 + $0x30] sm:$0xff]
        %v1425 = vld [vmem:[%s1417 + $0x38] sm:$0xff]
        %v1426 = vld [vmem:[%s1417 + $0x40] sm:$0xff]
        %v1427 = vld [vmem:[%s1417 + $0x48] sm:$0xff]
        %v1428 = vld [vmem:[%s1417 + $0x50] sm:$0xff]
        %v1429 = vld [vmem:[%s1417 + $0x58] sm:$0xff]
        %v1430 = vld [vmem:[%s1417 + $0x60] sm:$0xff]
        %v1431 = vld [vmem:[%s1417 + $0x68] sm:$0xff]
        %v1432 = vld [vmem:[%s1417 + $0x70] sm:$0xff]
        %v1433 = vld [vmem:[%s1417 + $0x78] sm:$0xff]
        %s1434 = scalar_lea.vmem %s4, 2
        %v1435 = vld [vmem:[%s1434] sm:$0x3]
        %v1437 = vperm.slane %v1435, 0
        %v1438 = vperm.slane %v1435, 1
        %v1442 = vsel %vm610, %v1415, 0
        %v1445 = vsel %vm610, %v1416, 0
        %1447 = vmatpush.msra.mxu0 0.0
        %1448 = vmatpush.msra.mxu0 0.0
        %1449 = vmatpush.msra.mxu0 0.0
        %1450 = vmatpush.msra.mxu0 0.0
        %1451 = vmatpush.msra.mxu0 0.0
        %1452 = vmatpush.msra.mxu0 0.0
        %1453 = vmatpush.msra.mxu0 0.0
        %1454 = vmatpush.msra.mxu0 0.0
        %1455 = vmatpush.msra.mxu0 %v1432
        %1456 = vmatpush.msra.mxu0 %v1430
        %1457 = vmatpush.msra.mxu0 %v1428
        %1458 = vmatpush.msra.mxu0 %v1426
        %1459 = vmatpush.msra.mxu0 %v1424
        %1460 = vmatpush.msra.mxu0 %v1422
        %1461 = vmatpush.msra.mxu0 %v1420
        %1462 = vmatpush.msra.mxu0 %v1418
        %1463 = vmatmul.f32.gmra.mxu0 %v1442
        %v1464 = vpop.f32.mrf.mxu0
        %v1465 = vadd.f32 %v1437, %v1464
        %1466 = vmatmul.f32.gmra.mxu0 %v1445
        %v1467 = vpop.f32.mrf.mxu0
        %v1468 = vadd.f32 %v1437, %v1467
        %1469 = vdwg.mxu0
        %1470 = vmatpush.msra.mxu0 0.0
        %1471 = vmatpush.msra.mxu0 0.0
        %1472 = vmatpush.msra.mxu0 0.0
        %1473 = vmatpush.msra.mxu0 0.0
        %1474 = vmatpush.msra.mxu0 0.0
        %1475 = vmatpush.msra.mxu0 0.0
        %1476 = vmatpush.msra.mxu0 0.0
        %1477 = vmatpush.msra.mxu0 0.0
        %1478 = vmatpush.msra.mxu0 %v1433
        %1479 = vmatpush.msra.mxu0 %v1431
        %1480 = vmatpush.msra.mxu0 %v1429
        %1481 = vmatpush.msra.mxu0 %v1427
        %1482 = vmatpush.msra.mxu0 %v1425
        %1483 = vmatpush.msra.mxu0 %v1423
        %1484 = vmatpush.msra.mxu0 %v1421
        %1485 = vmatpush.msra.mxu0 %v1419
        %1486 = vmatmul.f32.gmra.mxu0 %v1442
        %v1487 = vpop.f32.mrf.mxu0
        %v1488 = vadd.f32 %v1438, %v1487
        %1489 = vmatmul.f32.gmra.mxu0 %v1445
        %v1490 = vpop.f32.mrf.mxu0
        %v1491 = vadd.f32 %v1438, %v1490
        %1492 = vdwg.mxu0
        %s1493 = scalar_lea.vmem %s5, 64
        %v1494 = vld [vmem:[%s1493] sm:$0xff]
        %v1495 = vld [vmem:[%s1493 + $0x8] sm:$0xff]
        %v1496 = vld [vmem:[%s1493 + $0x10] sm:$0xff]
        %v1497 = vld [vmem:[%s1493 + $0x18] sm:$0xff]
        %v1498 = vld [vmem:[%s1493 + $0x20] sm:$0xff]
        %v1499 = vld [vmem:[%s1493 + $0x28] sm:$0xff]
        %v1500 = vld [vmem:[%s1493 + $0x30] sm:$0xff]
        %v1501 = vld [vmem:[%s1493 + $0x38] sm:$0xff]
        %1504 = vrot.lane.b32.xlu0 %v1465, 64
        %v1505 = vpop.permute.xlu0 %1504
        %1506 = vrot.lane.b32.xlu0 %v1468, 64
        %v1507 = vpop.permute.xlu0 %1506
        %v1508 = vsel %vm677, %v1465, 0
        %v1510 = vsel %vm677, %v1468, 0
        %v1512 = vsel %vm677, %v1505, 0
        %v1514 = vsel %vm677, %v1507, 0
        %1516 = vmatpush.xpose.msra.mxu0 0.0
        %1517 = vmatpush.xpose.msra.mxu0 0.0
        %1518 = vmatpush.xpose.msra.mxu0 0.0
        %1519 = vmatpush.xpose.msra.mxu0 0.0
        %1520 = vmatpush.xpose.msra.mxu0 0.0
        %1521 = vmatpush.xpose.msra.mxu0 0.0
        %1522 = vmatpush.xpose.msra.mxu0 0.0
        %1523 = vmatpush.xpose.msra.mxu0 0.0
        %1524 = vmatpush.xpose.msra.mxu0 0.0
        %1525 = vmatpush.xpose.msra.mxu0 0.0
        %1526 = vmatpush.xpose.msra.mxu0 0.0
        %1527 = vmatpush.xpose.msra.mxu0 0.0
        %1528 = vmatpush.xpose.msra.mxu0 0.0
        %1529 = vmatpush.xpose.msra.mxu0 0.0
        %1530 = vmatpush.xpose.msra.mxu0 %v1514
        %1531 = vmatpush.xpose.msra.mxu0 %v1512
        %1532 = vmatmul.f32.gmra.mxu0 %v1508
        %v1533 = vpop.f32.mrf.mxu0
        %v1534 = vadd.f32 0.0, %v1533
        %1535 = vmatmul.f32.gmra.mxu0 %v1510
        %v1536 = vpop.f32.mrf.mxu0
        %v1537 = vadd.f32 0.0, %v1536
        %1538 = vdwg.mxu0
        %1539 = vst.msk [vmem:[#allocation2] sm:$0xff] %vm677, %v1534
        %1540 = vst.msk [vmem:[#allocation2 + $0x8] sm:$0xff] %vm677, %v1537
        %v1541 = vld [vmem:[#allocation2] sm:$0xff]
        %v1542 = vld [vmem:[#allocation2 + $0x8] sm:$0xff]
        %v1543 = vsel %vm677, %v1541, -inf
        %1544 = vmax.xlane.f32.xlu0 %v1543
        %v1545 = vpop.xlane.xlu0 %1544
        %v1546 = vsel %vm677, %v1542, -inf
        %1547 = vmax.xlane.f32.xlu0 %v1546
        %v1548 = vpop.xlane.xlu0 %1547
        %v1549 = vsub.f32 %v1541, %v1545
        %v1550 = vsub.f32 %v1542, %v1548
        %v1551 = vmul.f32 %v1549, 1.442695
        %v1552 = vpow.pop %v1551
        %v1553 = vmul.f32 %v1550, 1.442695
        %v1554 = vpow.pop %v1553
        %v1555 = vsel %vm677, %v1552, 0.0
        %1556 = vadd.xlane.f32.xlu0 %v1555
        %v1557 = vpop.xlane.xlu0 %1556
        %v1558 = vsel %vm677, %v1554, 0.0
        %1559 = vadd.xlane.f32.xlu0 %v1558
        %v1560 = vpop.xlane.xlu0 %1559
        %v1561 = vrcp.pop %v1557
        %v1562 = vrcp.pop %v1560
        %v1563 = vmul.f32 %v1552, %v1561
        %v1564 = vmul.f32 %v1554, %v1562
        %1565 = vst.msk [vmem:[#allocation2] sm:$0xff] %vm677, %v1563
        %1566 = vst.msk [vmem:[#allocation2 + $0x8] sm:$0xff] %vm677, %v1564
        %v1567 = vld [vmem:[#allocation2] sm:$0xff]
        %v1568 = vld [vmem:[#allocation2 + $0x8] sm:$0xff]
        %v1570 = vsel %vm677, %v1567, 0
        %v1573 = vsel %vm677, %v1568, 0
        %1575 = vmatpush.msra.mxu0 0.0
        %1576 = vmatpush.msra.mxu0 0.0
        %1577 = vmatpush.msra.mxu0 0.0
        %1578 = vmatpush.msra.mxu0 0.0
        %1579 = vmatpush.msra.mxu0 0.0
        %1580 = vmatpush.msra.mxu0 0.0
        %1581 = vmatpush.msra.mxu0 0.0
        %1582 = vmatpush.msra.mxu0 0.0
        %1583 = vmatpush.msra.mxu0 0.0
        %1584 = vmatpush.msra.mxu0 0.0
        %1585 = vmatpush.msra.mxu0 0.0
        %1586 = vmatpush.msra.mxu0 0.0
        %1587 = vmatpush.msra.mxu0 0.0
        %1588 = vmatpush.msra.mxu0 0.0
        %1589 = vmatpush.msra.mxu0 %v1491
        %1590 = vmatpush.msra.mxu0 %v1488
        %1591 = vmatmul.f32.gmra.mxu0 %v1570
        %v1592 = vpop.f32.mrf.mxu0
        %v1593 = vadd.f32 0.0, %v1592
        %1594 = vmatmul.f32.gmra.mxu0 %v1573
        %v1595 = vpop.f32.mrf.mxu0
        %v1596 = vadd.f32 0.0, %v1595
        %1597 = vdwg.mxu0
        %1598 = vrot.lane.b32.xlu0 %v1465, 112
        %v1599 = vpop.permute.xlu0 %1598
        %1600 = vrot.lane.b32.xlu0 %v1468, 112
        %v1601 = vpop.permute.xlu0 %1600
        %1602 = vrot.lane.b32.xlu0 %v1465, 48
        %v1603 = vpop.permute.xlu0 %1602
        %1604 = vrot.lane.b32.xlu0 %v1468, 48
        %v1605 = vpop.permute.xlu0 %1604
        %v1606 = vsel %vm677, %v1599, 0
        %v1608 = vsel %vm677, %v1601, 0
        %v1610 = vsel %vm677, %v1603, 0
        %v1612 = vsel %vm677, %v1605, 0
        %1614 = vmatpush.xpose.msra.mxu0 0.0
        %1615 = vmatpush.xpose.msra.mxu0 0.0
        %1616 = vmatpush.xpose.msra.mxu0 0.0
        %1617 = vmatpush.xpose.msra.mxu0 0.0
        %1618 = vmatpush.xpose.msra.mxu0 0.0
        %1619 = vmatpush.xpose.msra.mxu0 0.0
        %1620 = vmatpush.xpose.msra.mxu0 0.0
        %1621 = vmatpush.xpose.msra.mxu0 0.0
        %1622 = vmatpush.xpose.msra.mxu0 0.0
        %1623 = vmatpush.xpose.msra.mxu0 0.0
        %1624 = vmatpush.xpose.msra.mxu0 0.0
        %1625 = vmatpush.xpose.msra.mxu0 0.0
        %1626 = vmatpush.xpose.msra.mxu0 0.0
        %1627 = vmatpush.xpose.msra.mxu0 0.0
        %1628 = vmatpush.xpose.msra.mxu0 %v1612
        %1629 = vmatpush.xpose.msra.mxu0 %v1610
        %1630 = vmatmul.f32.gmra.mxu0 %v1606
        %v1631 = vpop.f32.mrf.mxu0
        %v1632 = vadd.f32 0.0, %v1631
        %1633 = vmatmul.f32.gmra.mxu0 %v1608
        %v1634 = vpop.f32.mrf.mxu0
        %v1635 = vadd.f32 0.0, %v1634
        %1636 = vdwg.mxu0
        %1637 = vst.msk [vmem:[#allocation2] sm:$0xff] %vm677, %v1632
        %1638 = vst.msk [vmem:[#allocation2 + $0x8] sm:$0xff] %vm677, %v1635
        %v1639 = vld [vmem:[#allocation2] sm:$0xff]
        %v1640 = vld [vmem:[#allocation2 + $0x8] sm:$0xff]
        %v1641 = vsel %vm677, %v1639, -inf
        %1642 = vmax.xlane.f32.xlu0 %v1641
        %v1643 = vpop.xlane.xlu0 %1642
        %v1644 = vsel %vm677, %v1640, -inf
        %1645 = vmax.xlane.f32.xlu0 %v1644
        %v1646 = vpop.xlane.xlu0 %1645
        %v1647 = vsub.f32 %v1639, %v1643
        %v1648 = vsub.f32 %v1640, %v1646
        %v1649 = vmul.f32 %v1647, 1.442695
        %v1650 = vpow.pop %v1649
        %v1651 = vmul.f32 %v1648, 1.442695
        %v1652 = vpow.pop %v1651
        %v1653 = vsel %vm677, %v1650, 0.0
        %1654 = vadd.xlane.f32.xlu0 %v1653
        %v1655 = vpop.xlane.xlu0 %1654
        %v1656 = vsel %vm677, %v1652, 0.0
        %1657 = vadd.xlane.f32.xlu0 %v1656
        %v1658 = vpop.xlane.xlu0 %1657
        %v1659 = vrcp.pop %v1655
        %v1660 = vrcp.pop %v1658
        %v1661 = vmul.f32 %v1650, %v1659
        %v1662 = vmul.f32 %v1652, %v1660
        %1663 = vst.msk [vmem:[#allocation2] sm:$0xff] %vm677, %v1661
        %1664 = vst.msk [vmem:[#allocation2 + $0x8] sm:$0xff] %vm677, %v1662
        %v1665 = vld [vmem:[#allocation2] sm:$0xff]
        %v1666 = vld [vmem:[#allocation2 + $0x8] sm:$0xff]
        %1669 = vrot.lane.b32.xlu0 %v1488, 112
        %v1670 = vpop.permute.xlu0 %1669
        %1671 = vrot.lane.b32.xlu0 %v1491, 112
        %v1672 = vpop.permute.xlu0 %1671
        %v1676 = vsel %vm677, %v1665, 0
        %v1679 = vsel %vm677, %v1666, 0
        %1681 = vmatpush.msra.mxu0 0.0
        %1682 = vmatpush.msra.mxu0 0.0
        %1683 = vmatpush.msra.mxu0 0.0
        %1684 = vmatpush.msra.mxu0 0.0
        %1685 = vmatpush.msra.mxu0 0.0
        %1686 = vmatpush.msra.mxu0 0.0
        %1687 = vmatpush.msra.mxu0 0.0
        %1688 = vmatpush.msra.mxu0 0.0
        %1689 = vmatpush.msra.mxu0 0.0
        %1690 = vmatpush.msra.mxu0 0.0
        %1691 = vmatpush.msra.mxu0 0.0
        %1692 = vmatpush.msra.mxu0 0.0
        %1693 = vmatpush.msra.mxu0 0.0
        %1694 = vmatpush.msra.mxu0 0.0
        %1695 = vmatpush.msra.mxu0 %v1672
        %1696 = vmatpush.msra.mxu0 %v1670
        %1697 = vmatmul.f32.gmra.mxu0 %v1676
        %v1698 = vpop.f32.mrf.mxu0
        %v1699 = vadd.f32 0.0, %v1698
        %1700 = vmatmul.f32.gmra.mxu0 %v1679
        %v1701 = vpop.f32.mrf.mxu0
        %v1702 = vadd.f32 0.0, %v1701
        %1703 = vdwg.mxu0
        %v1705 = vsel %vm677, %v1699, 0
        %v1708 = vsel %vm677, %v1702, 0
        %1710 = vmatpush.msra.mxu0 0.0
        %1711 = vmatpush.msra.mxu0 0.0
        %1712 = vmatpush.msra.mxu0 0.0
        %1713 = vmatpush.msra.mxu0 0.0
        %1714 = vmatpush.msra.mxu0 0.0
        %1715 = vmatpush.msra.mxu0 0.0
        %1716 = vmatpush.msra.mxu0 0.0
        %1717 = vmatpush.msra.mxu0 0.0
        %1718 = vmatpush.msra.mxu0 0.0
        %1719 = vmatpush.msra.mxu0 0.0
        %1720 = vmatpush.msra.mxu0 0.0
        %1721 = vmatpush.msra.mxu0 0.0
        %1722 = vmatpush.msra.mxu0 0.0
        %1723 = vmatpush.msra.mxu0 0.0
        %1724 = vmatpush.msra.mxu0 %v1497
        %1725 = vmatpush.msra.mxu0 %v1496
        %1726 = vmatmul.f32.gmra.mxu0 %v1705
        %v1727 = vpop.f32.mrf.mxu0
        %v1728 = vadd.f32 0.0, %v1727
        %1729 = vmatmul.f32.gmra.mxu0 %v1708
        %v1730 = vpop.f32.mrf.mxu0
        %v1731 = vadd.f32 0.0, %v1730
        %1732 = vdwg.mxu0
        %v1734 = vsel %vm677, %v1593, 0
        %v1737 = vsel %vm677, %v1596, 0
        %1739 = vmatpush.msra.mxu0 0.0
        %1740 = vmatpush.msra.mxu0 0.0
        %1741 = vmatpush.msra.mxu0 0.0
        %1742 = vmatpush.msra.mxu0 0.0
        %1743 = vmatpush.msra.mxu0 0.0
        %1744 = vmatpush.msra.mxu0 0.0
        %1745 = vmatpush.msra.mxu0 0.0
        %1746 = vmatpush.msra.mxu0 0.0
        %1747 = vmatpush.msra.mxu0 0.0
        %1748 = vmatpush.msra.mxu0 0.0
        %1749 = vmatpush.msra.mxu0 0.0
        %1750 = vmatpush.msra.mxu0 0.0
        %1751 = vmatpush.msra.mxu0 0.0
        %1752 = vmatpush.msra.mxu0 0.0
        %1753 = vmatpush.msra.mxu0 %v1495
        %1754 = vmatpush.msra.mxu0 %v1494
        %1755 = vmatmul.f32.gmra.mxu0 %v1734
        %v1756 = vpop.f32.mrf.mxu0
        %v1757 = vadd.f32 %v1728, %v1756
        %1758 = vmatmul.f32.gmra.mxu0 %v1737
        %v1759 = vpop.f32.mrf.mxu0
        %v1760 = vadd.f32 %v1731, %v1759
        %1761 = vdwg.mxu0
        %1762 = vrot.lane.b32.xlu0 %v1465, 96
        %v1763 = vpop.permute.xlu0 %1762
        %1764 = vrot.lane.b32.xlu0 %v1468, 96
        %v1765 = vpop.permute.xlu0 %1764
        %1766 = vrot.lane.b32.xlu0 %v1465, 32
        %v1767 = vpop.permute.xlu0 %1766
        %1768 = vrot.lane.b32.xlu0 %v1468, 32
        %v1769 = vpop.permute.xlu0 %1768
        %v1770 = vsel %vm677, %v1763, 0
        %v1772 = vsel %vm677, %v1765, 0
        %v1774 = vsel %vm677, %v1767, 0
        %v1776 = vsel %vm677, %v1769, 0
        %1778 = vmatpush.xpose.msra.mxu0 0.0
        %1779 = vmatpush.xpose.msra.mxu0 0.0
        %1780 = vmatpush.xpose.msra.mxu0 0.0
        %1781 = vmatpush.xpose.msra.mxu0 0.0
        %1782 = vmatpush.xpose.msra.mxu0 0.0
        %1783 = vmatpush.xpose.msra.mxu0 0.0
        %1784 = vmatpush.xpose.msra.mxu0 0.0
        %1785 = vmatpush.xpose.msra.mxu0 0.0
        %1786 = vmatpush.xpose.msra.mxu0 0.0
        %1787 = vmatpush.xpose.msra.mxu0 0.0
        %1788 = vmatpush.xpose.msra.mxu0 0.0
        %1789 = vmatpush.xpose.msra.mxu0 0.0
        %1790 = vmatpush.xpose.msra.mxu0 0.0
        %1791 = vmatpush.xpose.msra.mxu0 0.0
        %1792 = vmatpush.xpose.msra.mxu0 %v1776
        %1793 = vmatpush.xpose.msra.mxu0 %v1774
        %1794 = vmatmul.f32.gmra.mxu0 %v1770
        %v1795 = vpop.f32.mrf.mxu0
        %v1796 = vadd.f32 0.0, %v1795
        %1797 = vmatmul.f32.gmra.mxu0 %v1772
        %v1798 = vpop.f32.mrf.mxu0
        %v1799 = vadd.f32 0.0, %v1798
        %1800 = vdwg.mxu0
        %1801 = vst.msk [vmem:[#allocation2] sm:$0xff] %vm677, %v1796
        %1802 = vst.msk [vmem:[#allocation2 + $0x8] sm:$0xff] %vm677, %v1799
        %v1803 = vld [vmem:[#allocation2] sm:$0xff]
        %v1804 = vld [vmem:[#allocation2 + $0x8] sm:$0xff]
        %v1805 = vsel %vm677, %v1803, -inf
        %1806 = vmax.xlane.f32.xlu0 %v1805
        %v1807 = vpop.xlane.xlu0 %1806
        %v1808 = vsel %vm677, %v1804, -inf
        %1809 = vmax.xlane.f32.xlu0 %v1808
        %v1810 = vpop.xlane.xlu0 %1809
        %v1811 = vsub.f32 %v1803, %v1807
        %v1812 = vsub.f32 %v1804, %v1810
        %v1813 = vmul.f32 %v1811, 1.442695
        %v1814 = vpow.pop %v1813
        %v1815 = vmul.f32 %v1812, 1.442695
        %v1816 = vpow.pop %v1815
        %v1817 = vsel %vm677, %v1814, 0.0
        %1818 = vadd.xlane.f32.xlu0 %v1817
        %v1819 = vpop.xlane.xlu0 %1818
        %v1820 = vsel %vm677, %v1816, 0.0
        %1821 = vadd.xlane.f32.xlu0 %v1820
        %v1822 = vpop.xlane.xlu0 %1821
        %v1823 = vrcp.pop %v1819
        %v1824 = vrcp.pop %v1822
        %v1825 = vmul.f32 %v1814, %v1823
        %v1826 = vmul.f32 %v1816, %v1824
        %1827 = vst.msk [vmem:[#allocation2] sm:$0xff] %vm677, %v1825
        %1828 = vst.msk [vmem:[#allocation2 + $0x8] sm:$0xff] %vm677, %v1826
        %v1829 = vld [vmem:[#allocation2] sm:$0xff]
        %v1830 = vld [vmem:[#allocation2 + $0x8] sm:$0xff]
        %1831 = vrot.lane.b32.xlu0 %v1488, 96
        %v1832 = vpop.permute.xlu0 %1831
        %1833 = vrot.lane.b32.xlu0 %v1491, 96
        %v1834 = vpop.permute.xlu0 %1833
        %v1838 = vsel %vm677, %v1829, 0
        %v1841 = vsel %vm677, %v1830, 0
        %1843 = vmatpush.msra.mxu0 0.0
        %1844 = vmatpush.msra.mxu0 0.0
        %1845 = vmatpush.msra.mxu0 0.0
        %1846 = vmatpush.msra.mxu0 0.0
        %1847 = vmatpush.msra.mxu0 0.0
        %1848 = vmatpush.msra.mxu0 0.0
        %1849 = vmatpush.msra.mxu0 0.0
        %1850 = vmatpush.msra.mxu0 0.0
        %1851 = vmatpush.msra.mxu0 0.0
        %1852 = vmatpush.msra.mxu0 0.0
        %1853 = vmatpush.msra.mxu0 0.0
        %1854 = vmatpush.msra.mxu0 0.0
        %1855 = vmatpush.msra.mxu0 0.0
        %1856 = vmatpush.msra.mxu0 0.0
        %1857 = vmatpush.msra.mxu0 %v1834
        %1858 = vmatpush.msra.mxu0 %v1832
        %1859 = vmatmul.f32.gmra.mxu0 %v1838
        %v1860 = vpop.f32.mrf.mxu0
        %v1861 = vadd.f32 0.0, %v1860
        %1862 = vmatmul.f32.gmra.mxu0 %v1841
        %v1863 = vpop.f32.mrf.mxu0
        %v1864 = vadd.f32 0.0, %v1863
        %1865 = vdwg.mxu0
        %v1867 = vsel %vm677, %v1861, 0
        %v1870 = vsel %vm677, %v1864, 0
        %1872 = vmatpush.msra.mxu0 0.0
        %1873 = vmatpush.msra.mxu0 0.0
        %1874 = vmatpush.msra.mxu0 0.0
        %1875 = vmatpush.msra.mxu0 0.0
        %1876 = vmatpush.msra.mxu0 0.0
        %1877 = vmatpush.msra.mxu0 0.0
        %1878 = vmatpush.msra.mxu0 0.0
        %1879 = vmatpush.msra.mxu0 0.0
        %1880 = vmatpush.msra.mxu0 0.0
        %1881 = vmatpush.msra.mxu0 0.0
        %1882 = vmatpush.msra.mxu0 0.0
        %1883 = vmatpush.msra.mxu0 0.0
        %1884 = vmatpush.msra.mxu0 0.0
        %1885 = vmatpush.msra.mxu0 0.0
        %1886 = vmatpush.msra.mxu0 %v1499
        %1887 = vmatpush.msra.mxu0 %v1498
        %1888 = vmatmul.f32.gmra.mxu0 %v1867
        %v1889 = vpop.f32.mrf.mxu0
        %v1890 = vadd.f32 0.0, %v1889
        %1891 = vmatmul.f32.gmra.mxu0 %v1870
        %v1892 = vpop.f32.mrf.mxu0
        %v1893 = vadd.f32 0.0, %v1892
        %1894 = vdwg.mxu0
        %v1895 = vadd.f32 %v1757, %v1890
        %v1896 = vadd.f32 %v1760, %v1893
        %1897 = vrot.lane.b32.xlu0 %v1465, 80
        %v1898 = vpop.permute.xlu0 %1897
        %1899 = vrot.lane.b32.xlu0 %v1468, 80
        %v1900 = vpop.permute.xlu0 %1899
        %1901 = vrot.lane.b32.xlu0 %v1465, 16
        %v1902 = vpop.permute.xlu0 %1901
        %1903 = vrot.lane.b32.xlu0 %v1468, 16
        %v1904 = vpop.permute.xlu0 %1903
        %v1905 = vsel %vm677, %v1898, 0
        %v1907 = vsel %vm677, %v1900, 0
        %v1909 = vsel %vm677, %v1902, 0
        %v1911 = vsel %vm677, %v1904, 0
        %1913 = vmatpush.xpose.msra.mxu0 0.0
        %1914 = vmatpush.xpose.msra.mxu0 0.0
        %1915 = vmatpush.xpose.msra.mxu0 0.0
        %1916 = vmatpush.xpose.msra.mxu0 0.0
        %1917 = vmatpush.xpose.msra.mxu0 0.0
        %1918 = vmatpush.xpose.msra.mxu0 0.0
        %1919 = vmatpush.xpose.msra.mxu0 0.0
        %1920 = vmatpush.xpose.msra.mxu0 0.0
        %1921 = vmatpush.xpose.msra.mxu0 0.0
        %1922 = vmatpush.xpose.msra.mxu0 0.0
        %1923 = vmatpush.xpose.msra.mxu0 0.0
        %1924 = vmatpush.xpose.msra.mxu0 0.0
        %1925 = vmatpush.xpose.msra.mxu0 0.0
        %1926 = vmatpush.xpose.msra.mxu0 0.0
        %1927 = vmatpush.xpose.msra.mxu0 %v1911
        %1928 = vmatpush.xpose.msra.mxu0 %v1909
        %1929 = vmatmul.f32.gmra.mxu0 %v1905
        %v1930 = vpop.f32.mrf.mxu0
        %v1931 = vadd.f32 0.0, %v1930
        %1932 = vmatmul.f32.gmra.mxu0 %v1907
        %v1933 = vpop.f32.mrf.mxu0
        %v1934 = vadd.f32 0.0, %v1933
        %1935 = vdwg.mxu0
        %1936 = vst.msk [vmem:[#allocation2] sm:$0xff] %vm677, %v1931
        %1937 = vst.msk [vmem:[#allocation2 + $0x8] sm:$0xff] %vm677, %v1934
        %v1938 = vld [vmem:[#allocation2] sm:$0xff]
        %v1939 = vld [vmem:[#allocation2 + $0x8] sm:$0xff]
        %v1940 = vsel %vm677, %v1938, -inf
        %1941 = vmax.xlane.f32.xlu0 %v1940
        %v1942 = vpop.xlane.xlu0 %1941
        %v1943 = vsel %vm677, %v1939, -inf
        %1944 = vmax.xlane.f32.xlu0 %v1943
        %v1945 = vpop.xlane.xlu0 %1944
        %v1946 = vsub.f32 %v1938, %v1942
        %v1947 = vsub.f32 %v1939, %v1945
        %v1948 = vmul.f32 %v1946, 1.442695
        %v1949 = vpow.pop %v1948
        %v1950 = vmul.f32 %v1947, 1.442695
        %v1951 = vpow.pop %v1950
        %v1952 = vsel %vm677, %v1949, 0.0
        %1953 = vadd.xlane.f32.xlu0 %v1952
        %v1954 = vpop.xlane.xlu0 %1953
        %v1955 = vsel %vm677, %v1951, 0.0
        %1956 = vadd.xlane.f32.xlu0 %v1955
        %v1957 = vpop.xlane.xlu0 %1956
        %v1958 = vrcp.pop %v1954
        %v1959 = vrcp.pop %v1957
        %v1960 = vmul.f32 %v1949, %v1958
        %v1961 = vmul.f32 %v1951, %v1959
        %1962 = vst.msk [vmem:[#allocation2] sm:$0xff] %vm677, %v1960
        %1963 = vst.msk [vmem:[#allocation2 + $0x8] sm:$0xff] %vm677, %v1961
        %v1964 = vld [vmem:[#allocation2] sm:$0xff]
        %v1965 = vld [vmem:[#allocation2 + $0x8] sm:$0xff]
        %1966 = vrot.lane.b32.xlu0 %v1488, 80
        %v1967 = vpop.permute.xlu0 %1966
        %1968 = vrot.lane.b32.xlu0 %v1491, 80
        %v1969 = vpop.permute.xlu0 %1968
        %v1973 = vsel %vm677, %v1964, 0
        %v1976 = vsel %vm677, %v1965, 0
        %1978 = vmatpush.msra.mxu0 0.0
        %1979 = vmatpush.msra.mxu0 0.0
        %1980 = vmatpush.msra.mxu0 0.0
        %1981 = vmatpush.msra.mxu0 0.0
        %1982 = vmatpush.msra.mxu0 0.0
        %1983 = vmatpush.msra.mxu0 0.0
        %1984 = vmatpush.msra.mxu0 0.0
        %1985 = vmatpush.msra.mxu0 0.0
        %1986 = vmatpush.msra.mxu0 0.0
        %1987 = vmatpush.msra.mxu0 0.0
        %1988 = vmatpush.msra.mxu0 0.0
        %1989 = vmatpush.msra.mxu0 0.0
        %1990 = vmatpush.msra.mxu0 0.0
        %1991 = vmatpush.msra.mxu0 0.0
        %1992 = vmatpush.msra.mxu0 %v1969
        %1993 = vmatpush.msra.mxu0 %v1967
        %1994 = vmatmul.f32.gmra.mxu0 %v1973
        %v1995 = vpop.f32.mrf.mxu0
        %v1996 = vadd.f32 0.0, %v1995
        %1997 = vmatmul.f32.gmra.mxu0 %v1976
        %v1998 = vpop.f32.mrf.mxu0
        %v1999 = vadd.f32 0.0, %v1998
        %2000 = vdwg.mxu0
        %v2002 = vsel %vm677, %v1996, 0
        %v2005 = vsel %vm677, %v1999, 0
        %2007 = vmatpush.msra.mxu0 0.0
        %2008 = vmatpush.msra.mxu0 0.0
        %2009 = vmatpush.msra.mxu0 0.0
        %2010 = vmatpush.msra.mxu0 0.0
        %2011 = vmatpush.msra.mxu0 0.0
        %2012 = vmatpush.msra.mxu0 0.0
        %2013 = vmatpush.msra.mxu0 0.0
        %2014 = vmatpush.msra.mxu0 0.0
        %2015 = vmatpush.msra.mxu0 0.0
        %2016 = vmatpush.msra.mxu0 0.0
        %2017 = vmatpush.msra.mxu0 0.0
        %2018 = vmatpush.msra.mxu0 0.0
        %2019 = vmatpush.msra.mxu0 0.0
        %2020 = vmatpush.msra.mxu0 0.0
        %2021 = vmatpush.msra.mxu0 %v1501
        %2022 = vmatpush.msra.mxu0 %v1500
        %2023 = vmatmul.f32.gmra.mxu0 %v2002
        %v2024 = vpop.f32.mrf.mxu0
        %v2025 = vadd.f32 0.0, %v2024
        %2026 = vmatmul.f32.gmra.mxu0 %v2005
        %v2027 = vpop.f32.mrf.mxu0
        %v2028 = vadd.f32 0.0, %v2027
        %2029 = vdwg.mxu0
        %v2030 = vadd.f32 %v1895, %v2025
        %v2031 = vadd.f32 %v1896, %v2028
        %s2032 = scalar_lea.vmem %s6, 1
        %v2033 = vld [vmem:[%s2032] sm:$0x1]
        %v2035 = vperm.slane %v2033, 0
        %v2037 = vadd.f32 %v2030, %v2035
        %v2038 = vadd.f32 %v2031, %v2035
        %v2039 = vadd.f32 %v1415, %v2037
        %v2040 = vadd.f32 %v1416, %v2038
        %s2041 = scalar_lea.vmem %s7, 1
        %v2042 = vld [vmem:[%s2041] sm:$0x1]
        %s2043 = scalar_lea.vmem %s8, 1
        %v2044 = vld [vmem:[%s2043] sm:$0x1]
        %v2045 = vsel %vm610, %v2039, 0.0
        %2046 = vadd.xlane.f32.xlu0 %v2045
        %v2047 = vpop.xlane.xlu0 %2046
        %v2048 = vsel %vm610, %v2040, 0.0
        %2049 = vadd.xlane.f32.xlu0 %v2048
        %v2050 = vpop.xlane.xlu0 %2049
        %v2051 = vmul.f32 %v2047, %v1224
        %v2052 = vmul.f32 %v2050, %v1224
        %v2053 = vsub.f32 %v2039, %v2051
        %v2054 = vsub.f32 %v2040, %v2052
        %v2055 = vmul.f32 %v2053, %v2053
        %v2056 = vmul.f32 %v2054, %v2054
        %v2057 = vsel %vm610, %v2055, 0.0
        %2058 = vadd.xlane.f32.xlu0 %v2057
        %v2059 = vpop.xlane.xlu0 %2058
        %v2060 = vsel %vm610, %v2056, 0.0
        %2061 = vadd.xlane.f32.xlu0 %v2060
        %v2062 = vpop.xlane.xlu0 %2061
        %v2063 = vmul.f32 %v2059, %v1224
        %v2064 = vmul.f32 %v2062, %v1224
        %v2065 = vadd.f32 %v2063, 1e-05
        %v2066 = vadd.f32 %v2064, 1e-05
        %v2067 = vrsqrt.pop %v2065
        %v2068 = vmul.f32 %v2067, %v2065
        %v2069 = vmul.f32 %v2068, %v2067
        %v2070 = vmul.f32 0.5, %v2069
        %v2071 = vsub.f32 1.5, %v2070
        %v2072 = vmul.f32 %v2067, %v2071
        %vm2073 = vweird.f32 %v2065
        %vm2074 = vweird.f32 %v2067
        %vm2075 = vmor %vm2073, %vm2074
        %v2076 = vsel %vm2075, %v2067, %v2072
        %v2077 = vrsqrt.pop %v2066
        %v2078 = vmul.f32 %v2077, %v2066
        %v2079 = vmul.f32 %v2078, %v2077
        %v2080 = vmul.f32 0.5, %v2079
        %v2081 = vsub.f32 1.5, %v2080
        %v2082 = vmul.f32 %v2077, %v2081
        %vm2083 = vweird.f32 %v2066
        %vm2084 = vweird.f32 %v2077
        %vm2085 = vmor %vm2083, %vm2084
        %v2086 = vsel %vm2085, %v2077, %v2082
        %v2087 = vmul.f32 %v2053, %v2076
        %v2088 = vmul.f32 %v2054, %v2086
        %v2090 = vperm.slane %v2042, 0
        %v2092 = vmul.f32 %v2087, %v2090
        %v2093 = vmul.f32 %v2088, %v2090
        %v2095 = vperm.slane %v2044, 0
        %v2097 = vadd.f32 %v2092, %v2095
        %v2098 = vadd.f32 %v2093, %v2095
        %s2099 = scalar_lea.vmem [#allocation4], 64
        %v2100 = vld [vmem:[%s2099] sm:$0xff]
        %v2101 = vld [vmem:[%s2099 + $0x8] sm:$0xff]
        %v2102 = vld [vmem:[%s2099 + $0x10] sm:$0xff]
        %v2103 = vld [vmem:[%s2099 + $0x18] sm:$0xff]
        %v2104 = vld [vmem:[%s2099 + $0x20] sm:$0xff]
        %v2105 = vld [vmem:[%s2099 + $0x28] sm:$0xff]
        %v2106 = vld [vmem:[%s2099 + $0x30] sm:$0xff]
        %v2107 = vld [vmem:[%s2099 + $0x38] sm:$0xff]
        %s2108 = scalar_lea.vmem %s12, 1
        %v2109 = vld [vmem:[%s2108] sm:$0x1]
        %v2111 = vperm.slane %v2109, 0
        %v2114 = vsel %vm610, %v2097, 0
        %v2117 = vsel %vm610, %v2098, 0
        %2119 = vmatpush.msra.mxu0 0.0
        %2120 = vmatpush.msra.mxu0 0.0
        %2121 = vmatpush.msra.mxu0 0.0
        %2122 = vmatpush.msra.mxu0 0.0
        %2123 = vmatpush.msra.mxu0 0.0
        %2124 = vmatpush.msra.mxu0 0.0
        %2125 = vmatpush.msra.mxu0 0.0
        %2126 = vmatpush.msra.mxu0 0.0
        %2127 = vmatpush.msra.mxu0 %v2107
        %2128 = vmatpush.msra.mxu0 %v2106
        %2129 = vmatpush.msra.mxu0 %v2105
        %2130 = vmatpush.msra.mxu0 %v2104
        %2131 = vmatpush.msra.mxu0 %v2103
        %2132 = vmatpush.msra.mxu0 %v2102
        %2133 = vmatpush.msra.mxu0 %v2101
        %2134 = vmatpush.msra.mxu0 %v2100
        %2135 = vmatmul.f32.gmra.mxu0 %v2114
        %v2136 = vpop.f32.mrf.mxu0
        %v2137 = vadd.f32 %v2111, %v2136
        %2138 = vmatmul.f32.gmra.mxu0 %v2117
        %v2139 = vpop.f32.mrf.mxu0
        %v2140 = vadd.f32 %v2111, %v2139
        %2141 = vdwg.mxu0
        %v2142 = vmax.f32 %v2137, 0.0
        %v2143 = vmax.f32 %v2140, 0.0
        %s2144 = scalar_lea.vmem %s13, 128
        %v2145 = vld [vmem:[%s2144] sm:$0xff]
        %v2146 = vld [vmem:[%s2144 + $0x8] sm:$0xff]
        %v2147 = vld [vmem:[%s2144 + $0x10] sm:$0xff]
        %v2148 = vld [vmem:[%s2144 + $0x18] sm:$0xff]
        %v2149 = vld [vmem:[%s2144 + $0x20] sm:$0xff]
        %v2150 = vld [vmem:[%s2144 + $0x28] sm:$0xff]
        %v2151 = vld [vmem:[%s2144 + $0x30] sm:$0xff]
        %v2152 = vld [vmem:[%s2144 + $0x38] sm:$0xff]
        %v2153 = vld [vmem:[%s2144 + $0x40] sm:$0xff]
        %v2154 = vld [vmem:[%s2144 + $0x48] sm:$0xff]
        %v2155 = vld [vmem:[%s2144 + $0x50] sm:$0xff]
        %v2156 = vld [vmem:[%s2144 + $0x58] sm:$0xff]
        %v2157 = vld [vmem:[%s2144 + $0x60] sm:$0xff]
        %v2158 = vld [vmem:[%s2144 + $0x68] sm:$0xff]
        %v2159 = vld [vmem:[%s2144 + $0x70] sm:$0xff]
        %v2160 = vld [vmem:[%s2144 + $0x78] sm:$0xff]
        %s2161 = scalar_lea.vmem %s14, 1
        %v2162 = vld [vmem:[%s2161] sm:$0x1]
        %v2164 = vperm.slane %v2162, 0
        %2166 = vmatpush.msra.mxu0 %v2160
        %2167 = vmatpush.msra.mxu0 %v2159
        %2168 = vmatpush.msra.mxu0 %v2158
        %2169 = vmatpush.msra.mxu0 %v2157
        %2170 = vmatpush.msra.mxu0 %v2156
        %2171 = vmatpush.msra.mxu0 %v2155
        %2172 = vmatpush.msra.mxu0 %v2154
        %2173 = vmatpush.msra.mxu0 %v2153
        %2174 = vmatpush.msra.mxu0 %v2152
        %2175 = vmatpush.msra.mxu0 %v2151
        %2176 = vmatpush.msra.mxu0 %v2150
        %2177 = vmatpush.msra.mxu0 %v2149
        %2178 = vmatpush.msra.mxu0 %v2148
        %2179 = vmatpush.msra.mxu0 %v2147
        %2180 = vmatpush.msra.mxu0 %v2146
        %2181 = vmatpush.msra.mxu0 %v2145
        %2182 = vmatmul.f32.gmra.mxu0 %v2142
        %v2183 = vpop.f32.mrf.mxu0
        %v2184 = vadd.f32 %v2164, %v2183
        %2185 = vmatmul.f32.gmra.mxu0 %v2143
        %v2186 = vpop.f32.mrf.mxu0
        %2187 = vdwg.mxu0
        %v2188 = vadd.f32 %v2097, %v2184
        %s2189 = scalar_lea.vmem %s9, 1
        %v2190 = vld [vmem:[%s2189] sm:$0x1]
        %s2191 = scalar_lea.vmem %s10, 1
        %v2192 = vld [vmem:[%s2191] sm:$0x1]
        %v2193 = vsel %vm610, %v2188, 0.0
        %2194 = vadd.xlane.f32.xlu0 %v2193
        %v2195 = vpop.xlane.xlu0 %2194
        %v2196 = vmul.f32 %v2195, %v1224
        %v2197 = vsub.f32 %v2188, %v2196
        %v2198 = vmul.f32 %v2197, %v2197
        %v2199 = vsel %vm610, %v2198, 0.0
        %2200 = vadd.xlane.f32.xlu0 %v2199
        %v2201 = vpop.xlane.xlu0 %2200
        %v2202 = vmul.f32 %v2201, %v1224
        %v2203 = vadd.f32 %v2202, 1e-05
        %v2204 = vrsqrt.pop %v2203
        %v2205 = vmul.f32 %v2204, %v2203
        %v2206 = vmul.f32 %v2205, %v2204
        %v2207 = vmul.f32 0.5, %v2206
        %v2208 = vsub.f32 1.5, %v2207
        %v2209 = vmul.f32 %v2204, %v2208
        %vm2210 = vweird.f32 %v2203
        %vm2211 = vweird.f32 %v2204
        %vm2212 = vmor %vm2210, %vm2211
        %v2213 = vsel %vm2212, %v2204, %v2209
        %v2214 = vmul.f32 %v2197, %v2213
        %v2216 = vperm.slane %v2190, 0
        %v2218 = vmul.f32 %v2214, %v2216
        %v2220 = vperm.slane %v2192, 0
        %v2222 = vadd.f32 %v2218, %v2220
        %v2223 = vld [vmem:[%s15] sm:$0x1]
        %v2224 = vmul.f32 %v2222, %v2223
        %vm2225 = vcmask 516096
        %v2226 = vsel %vm2225, %v2224, 0.0
        %2227 = vadd.xlane.f32.xlu0 %v2226
        %v2228 = vpop.xlane.xlu0 %2227
        %v2229 = vld [vmem:[#allocation3] sm:$0x1]
        %v2230 = vadd.f32 %v2228, %v2229
        %vm2231 = vcmask 0
        %2232 = vst.msk [vmem:[%s563] sm:$0x1] %vm2231, %v2230
        %p2233 = scmp.lt.s32.totalorder %s31, 1
        %s2234 = scalar_select %p2233, %s31, 1
        %s2235 = scalar_lea.vmem %s17, %s2234
        // Predicated region
        $region93: #{tpu_custom_call.1} parent=87 // pred_check
          %p2236 = pneg %p411
        $region94: #{tpu_custom_call.1} parent=87 // pred_check_branch
          %2238 = sbr.rel (%p2236) target = $region96
        $region95: #{tpu_custom_call.1} parent=87 // pred_region
          _
        $region96: #{tpu_custom_call.1} parent=87 // pred_fallthru
          _
      $region88: #{tpu_custom_call.1} parent=5 // pred_fallthru
        _
      %p2239 = scmp.le.s32.totalorder 2, %s26
      // Predicated region
      $region97: #{tpu_custom_call.1} parent=5 // pred_check
        %p2240 = pneg %p2239
      $region98: #{tpu_custom_call.1} parent=5 // pred_check_branch
        %2242 = sbr.rel (%p2240) target = $region100
      $region99: #{tpu_custom_call.1} parent=5 // pred_region
        %s2243 = ssub.s32 %s26, 2
        // Predicated region
        $region101: #{tpu_custom_call.1} parent=99 // pred_check
          %p2244 = pneg %p417
        $region102: #{tpu_custom_call.1} parent=99 // pred_check_branch
          %2246 = sbr.rel (%p2244) target = $region104
        $region103: #{tpu_custom_call.1} parent=99 // pred_region
          %p2247 = scmp.lt.s32.totalorder %s32, 1
          %s2248 = scalar_select %p2247, %s32, 1
          %s2249 = scalar_lea.vmem %s17, %s2248
        $region104: #{tpu_custom_call.1} parent=99 // pred_fallthru
          _
      $region100: #{tpu_custom_call.1} parent=5 // pred_fallthru
        _
    $region6: #{tpu_custom_call.1} parent=1 // loop_footer
      %s30 = sadd.s32 1, %s26
    $region7: #{tpu_custom_call.1} parent=1 // loop_footer_branch
      %25 = sbr.rel target = $region3
    $region8: #{tpu_custom_call.1} parent=1 // loop_exit
      _
    %2250 = vsyncpa [#allocation5], 1
    %s2251 = scalar_lea.sflag [#allocation5], 1
    %2252 = vsyncpa %s2251, 1

</llo_original>
